<compile_context>
chip_gen: v7x
topology: tpu7x:2x2x1
jax: 0.10.0
libtpu: 0.0.40
codegen_flags: <defaults>
</compile_context>

<pallas_src>
import functools

import jax
import jax.numpy as jnp
import numpy as np
from jax import lax
from jax.experimental import pallas as pl
from jax.experimental.pallas import tpu as pltpu  # noqa: F401  (kept for TPU-specific tuning hooks)

LEAKY_SLOPE = 0.01   # F.leaky_relu default
BN_EPS = 1e-5        # nn.BatchNorm2d default
LANE = 128           # conv outputs / head padded to a full lane width
KSIZE = 5
STRIDE = 2


def _round_up(x, m):
    return (x + m - 1) // m * m


def _full_spec(a):
    nd = a.ndim
    return pl.BlockSpec(a.shape, lambda i: (0,) * nd)


# ----------------------------------------------------------------------------
# Pallas kernel 1: fused conv-as-matmul   o = relu(patches @ w + shift)
#   (conv bias and BatchNorm scale/shift pre-folded into w / shift on host)
# ----------------------------------------------------------------------------
def _conv_kernel(p_ref, w_ref, shift_ref, o_ref):
    y = jnp.dot(p_ref[...], w_ref[...], preferred_element_type=jnp.float32)
    o_ref[...] = jnp.maximum(y + shift_ref[...], 0.0).astype(o_ref.dtype)


def conv_matmul_relu(patches, w, shift):
    """patches:(M,K)  w:(K,128)  shift:(1,128)  ->  (M,128)."""
    m, k = patches.shape
    n = w.shape[1]
    return pl.pallas_call(
        _conv_kernel,
        out_shape=jax.ShapeDtypeStruct((m, n), jnp.float32),
        grid=(1,),
        in_specs=[
            pl.BlockSpec((m, k), lambda i: (0, 0)),
            pl.BlockSpec((k, n), lambda i: (0, 0)),
            pl.BlockSpec((1, n), lambda i: (0, 0)),
        ],
        out_specs=pl.BlockSpec((m, n), lambda i: (0, 0)),
    )(patches, w, shift)


# ----------------------------------------------------------------------------
# Pallas kernel 2: conv3 + NCHW-flatten + full MLP tail in one launch
# ----------------------------------------------------------------------------
def _make_tail_kernel(n_batch, n_spatial, n_extra_shared, action_size):
    def kernel(*refs):
        p3_ref, w3_ref, s3_ref, w1_ref, b1_ref = refs[:5]
        rest = refs[5:-1]
        out_ref = refs[-1]

        # conv3: matmul + folded-BN shift + relu; padded lanes stay exactly 0.
        c3 = jnp.dot(p3_ref[...], w3_ref[...], preferred_element_type=jnp.float32)
        c3 = jnp.maximum(c3 + s3_ref[...], 0.0)          # (n_batch*n_spatial, 128)

        # First shared layer with the PyTorch NCHW flatten folded in:
        #   h1[n] = b1 + sum_r conv3_rows[n*R + r, :] @ W1_stack[r]
        # Row selection uses tiny 0/1 matmuls (no in-kernel reshapes /
        # strided slices needed).
        m = n_batch * n_spatial
        d1 = w1_ref.shape[-1]
        row_i = lax.broadcasted_iota(jnp.int32, (n_batch, m), 0)
        col_i = lax.broadcasted_iota(jnp.int32, (n_batch, m), 1)
        acc = jnp.zeros((n_batch, d1), jnp.float32)
        for r in range(n_spatial):
            sel = (col_i == n_spatial * row_i + r).astype(jnp.float32)
            rows_r = jnp.dot(sel, c3, preferred_element_type=jnp.float32)
            acc = acc + jnp.dot(rows_r, w1_ref[r],
                                preferred_element_type=jnp.float32)
        z = acc + b1_ref[...]
        h = jnp.where(z >= 0.0, z, LEAKY_SLOPE * z)

        # Remaining shared leaky_relu layers.
        for l in range(n_extra_shared):
            w, b = rest[2 * l], rest[2 * l + 1]
            z = jnp.dot(h, w[...], preferred_element_type=jnp.float32) + b[...]
            h = jnp.where(z >= 0.0, z, LEAKY_SLOPE * z)

        # Fused actor|critic head (lane padded); tanh only on actor columns.
        wh_ref, bh_ref = rest[-2], rest[-1]
        y = jnp.dot(h, wh_ref[...], preferred_element_type=jnp.float32) + bh_ref[...]
        col = lax.broadcasted_iota(jnp.int32, y.shape, 1)
        out_ref[...] = jnp.where(col < action_size, jnp.tanh(y), y).astype(out_ref.dtype)

    return kernel


def conv3_mlp_tail(p3, pp, n_batch, n_spatial, action_size):
    args = [p3, pp["w3"], pp["s3"], pp["w1_stack"], pp["b1"]]
    for w, b in pp["shared_rest"]:
        args += [w, b]
    args += [pp["head_w"], pp["head_b"]]
    return pl.pallas_call(
        _make_tail_kernel(n_batch, n_spatial, len(pp["shared_rest"]), action_size),
        out_shape=jax.ShapeDtypeStruct((n_batch, LANE), jnp.float32),
        grid=(1,),
        in_specs=[_full_spec(a) for a in args],
        out_specs=pl.BlockSpec((n_batch, LANE), lambda i: (0, 0)),
    )(*args)


# ----------------------------------------------------------------------------
# One-time host-side parameter preparation (kept OUT of the per-step jit)
# ----------------------------------------------------------------------------
def prepare_params(p):
    def fold_conv(w_oihw, b, bn):
        cout = w_oihw.shape[0]
        k = int(np.prod(w_oihw.shape[1:]))
        scale = bn["gamma"] / jnp.sqrt(bn["var"] + BN_EPS)
        shift = bn["beta"] + (b - bn["mean"]) * scale          # conv bias folded in
        # (Cout, Cin, KH, KW) -> (Cin*KH*KW, Cout), rows ordered (Cin, KH, KW)
        # matching conv_general_dilated_patches; BN scale folded into columns.
        w_mat = w_oihw.reshape(cout, k).T * scale[None, :]
        kpad = _round_up(k, LANE)
        w_pad = jnp.pad(w_mat, ((0, kpad - k), (0, LANE - cout))).astype(jnp.float32)
        s_pad = jnp.pad(shift, (0, LANE - cout)).reshape(1, LANE).astype(jnp.float32)
        return w_pad, s_pad

    pp = {}
    pp["w1"], pp["s1"] = fold_conv(p["conv1_w"], p["conv1_b"], p["bn1"])
    pp["w2"], pp["s2"] = fold_conv(p["conv2_w"], p["conv2_b"], p["bn2"])
    pp["w3"], pp["s3"] = fold_conv(p["conv3_w"], p["conv3_b"], p["bn3"])

    c3 = p["conv3_w"].shape[0]
    w1_t, b1 = p["shared"][0]                      # torch Linear: (d1, C3*R), (d1,)
    d1 = w1_t.shape[0]
    r = w1_t.shape[1] // c3                        # R = OH3*OW3 spatial positions
    # Fold the PyTorch NCHW flatten (feature = c*R + r) into a per-spatial-
    # position weight stack: w1_stack[r, c, :] = W1[:, c*R + r]; pad c -> 128.
    w1_stack = jnp.transpose(w1_t.reshape(d1, c3, r), (2, 1, 0))
    w1_stack = jnp.pad(w1_stack, ((0, 0), (0, LANE - c3), (0, 0))).astype(jnp.float32)
    pp["w1_stack"] = w1_stack
    pp["b1"] = b1.reshape(1, d1).astype(jnp.float32)

    pp["shared_rest"] = [(w.T.astype(jnp.float32), b.reshape(1, -1).astype(jnp.float32))
                         for (w, b) in p["shared"][1:]]

    action_size = p["actor_w"].shape[0]
    wh = jnp.concatenate([p["actor_w"], p["critic_w"]], axis=0).T     # (dlast, A+1)
    bh = jnp.concatenate([p["actor_b"], p["critic_b"]], axis=0)
    pad = LANE - wh.shape[1]
    pp["head_w"] = jnp.pad(wh, ((0, 0), (0, pad))).astype(jnp.float32)
    pp["head_b"] = jnp.pad(bh, (0, pad)).reshape(1, LANE).astype(jnp.float32)

    meta = dict(c1=p["conv1_w"].shape[0], c2=p["conv2_w"].shape[0],
                action_size=action_size)
    return pp, meta


# ----------------------------------------------------------------------------
# Per-step forward (jitted) and pure-JAX reference
# ----------------------------------------------------------------------------
def _extract_patches(img_nhwc):
    """5x5 / stride-2 VALID patches -> (M, K) with K zero-padded to 128-mult."""
    p = lax.conv_general_dilated_patches(
        img_nhwc, (KSIZE, KSIZE), (STRIDE, STRIDE), "VALID",
        dimension_numbers=("NHWC", "HWIO", "NHWC"))        # (N, OH, OW, C*k*k)
    n, oh, ow, k = p.shape
    p = p.reshape(n * oh * ow, k)
    kpad = _round_up(k, LANE)
    if kpad != k:
        p = jnp.pad(p, ((0, 0), (0, kpad - k)))
    return p, oh, ow


def actor_critic_forward(state_nchw, pp, *, meta):
    a_sz = meta["action_size"]
    x = jnp.transpose(state_nchw, (0, 2, 3, 1)).astype(jnp.float32)   # NCHW -> NHWC
    n = x.shape[0]

    p1, oh1, ow1 = _extract_patches(x)
    y1 = conv_matmul_relu(p1, pp["w1"], pp["s1"])                     # (N*OH1*OW1, 128)
    img1 = y1[:, :meta["c1"]].reshape(n, oh1, ow1, meta["c1"])

    p2, oh2, ow2 = _extract_patches(img1)
    y2 = conv_matmul_relu(p2, pp["w2"], pp["s2"])                     # (N*OH2*OW2, 128)
    img2 = y2[:, :meta["c2"]].reshape(n, oh2, ow2, meta["c2"])

    p3, oh3, ow3 = _extract_patches(img2)
    out = conv3_mlp_tail(p3, pp, n, oh3 * ow3, a_sz)                  # (N, 128)
    return out[:, :a_sz], out[:, a_sz]


def reference_forward(state_nchw, p):
    def conv_bn_relu(x, w, b, bn):
        y = lax.conv_general_dilated(
            x, w, window_strides=(2, 2), padding="VALID",
            dimension_numbers=("NCHW", "OIHW", "NCHW"))
        y = y + b[None, :, None, None]
        scale = bn["gamma"] / jnp.sqrt(bn["var"] + BN_EPS)
        shift = bn["beta"] - bn["mean"] * scale
        y = y * scale[None, :, None, None] + shift[None, :, None, None]
        return jnp.maximum(y, 0.0)

    x = state_nchw.astype(jnp.float32)
    x = conv_bn_relu(x, p["conv1_w"], p["conv1_b"], p["bn1"])
    x = conv_bn_relu(x, p["conv2_w"], p["conv2_b"], p["bn2"])
    x = conv_bn_relu(x, p["conv3_w"], p["conv3_b"], p["bn3"])
    h = x.reshape(x.shape[0], -1)                     # PyTorch NCHW flatten
    for w, b in p["shared"]:
        z = h @ w.T + b
        h = jnp.where(z >= 0, z, LEAKY_SLOPE * z)
    a = jnp.tanh(h @ p["actor_w"].T + p["actor_b"])
    v = (h @ p["critic_w"].T + p["critic_b"])[:, 0]
    return a, v


# ----------------------------------------------------------------------------
# Deterministic parameter init (same shapes as the PyTorch module __init__)
# ----------------------------------------------------------------------------
def conv2d_size_out(size, kernel_size=5, stride=2):
    return (size - (kernel_size - 1) - 1) // stride + 1


def make_bn(key, c):
    k1, k2, k3, k4 = jax.random.split(key, 4)
    return dict(
        gamma=1.0 + 0.1 * jax.random.normal(k1, (c,), dtype=jnp.float32),
        beta=0.1 * jax.random.normal(k2, (c,), dtype=jnp.float32),
        mean=0.1 * jax.random.normal(k3, (c,), dtype=jnp.float32),
        var=1.0 + 0.1 * jnp.abs(jax.random.normal(k4, (c,), dtype=jnp.float32)),
    )


def init_params(key, state_size, action_size, shared_layers):
    def normal(k, shape, scale=0.1):
        return scale * jax.random.normal(k, shape, dtype=jnp.float32)

    ks = jax.random.split(key, 16)
    p = {}
    p["sigma"] = jnp.zeros((action_size,), jnp.float32)   # unused in forward
    p["conv1_w"], p["conv1_b"] = normal(ks[0], (16, 3, 5, 5)), normal(ks[1], (16,))
    p["conv2_w"], p["conv2_b"] = normal(ks[2], (32, 16, 5, 5)), normal(ks[3], (32,))
    p["conv3_w"], p["conv3_b"] = normal(ks[4], (32, 32, 5, 5)), normal(ks[5], (32,))
    p["bn1"] = make_bn(ks[6], 16)
    p["bn2"] = make_bn(ks[7], 32)
    p["bn3"] = make_bn(ks[8], 32)

    convw = conv2d_size_out(conv2d_size_out(conv2d_size_out(state_size[0])))
    convh = conv2d_size_out(conv2d_size_out(conv2d_size_out(state_size[1])))
    linear_input_size = convh * convw * 32

    dims = [linear_input_size] + list(shared_layers)
    p["shared"] = []
    for i, (din, dout) in enumerate(zip(dims[:-1], dims[1:])):
        kw, kb = jax.random.split(jax.random.fold_in(key, 100 + i))
        p["shared"].append((normal(kw, (dout, din)), normal(kb, (dout,))))

    # critic_hidden_layers=[] / actor_hidden_layers=[]  (heads on shared output)
    p["actor_w"] = normal(ks[9], (action_size, shared_layers[-1]))
    p["actor_b"] = normal(ks[10], (action_size,))
    p["critic_w"] = normal(ks[11], (1, shared_layers[-1]))
    p["critic_b"] = normal(ks[12], (1,))
    return p


# ----------------------------------------------------------------------------
if __name__ == "__main__":
    key = jax.random.PRNGKey(0)
    batch = 2
    state_size = (40, 40)          # conv stack reduces 40 -> 18 -> 7 -> 2
    action_size = 4
    shared_layers = [64, 32]

    params = init_params(key, state_size, action_size, shared_layers)
    x = jax.random.uniform(
        jax.random.fold_in(key, 123),
        (batch, 3, state_size[0], state_size[1]), dtype=jnp.float32)

    prepared, meta = prepare_params(params)     # one-time weight prep (outside jit)
    fwd = jax.jit(functools.partial(actor_critic_forward, meta=meta))
    a, v = fwd(x, prepared)
    jax.block_until_ready((a, v))

    a_ref, v_ref = reference_forward(x, params)
    np.testing.assert_allclose(np.asarray(a), np.asarray(a_ref), rtol=2e-3, atol=2e-3)
    np.testing.assert_allclose(np.asarray(v), np.asarray(v_ref), rtol=2e-3, atol=2e-3)
    assert a.shape == (batch, action_size)
    assert v.shape == (batch,)

    print("KERNEL_OK")
</pallas_src>

<mosaic_0001>
module attributes {stable_mosaic.version = 11 : i64} {
  func.func @_conv_kernel(%arg0: i32, %arg1: memref<648x128xf32, #tpu.memory_space<vmem>>, %arg2: memref<128x128xf32, #tpu.memory_space<vmem>>, %arg3: memref<1x128xf32, #tpu.memory_space<vmem>>, %arg4: memref<648x128xf32, #tpu.memory_space<vmem>>) attributes {dimension_semantics = [#tpu.dimension_semantics<arbitrary>], iteration_bounds = array<i64: 1>, scalar_prefetch = 0 : i64, scratch_operands = 0 : i64, tpu.core_type = #tpu.core_type<tc>, window_params = [{pipeline_mode = #tpu.pipeline_mode<synchronous>, transform_indices = @transform_0, window_bounds = array<i64: 648, 128>}, {pipeline_mode = #tpu.pipeline_mode<synchronous>, transform_indices = @transform_1, window_bounds = array<i64: 128, 128>}, {pipeline_mode = #tpu.pipeline_mode<synchronous>, transform_indices = @transform_2, window_bounds = array<i64: 1, 128>}, {pipeline_mode = #tpu.pipeline_mode<synchronous>, transform_indices = @transform_3, window_bounds = array<i64: 648, 128>}]} {
    %c0 = arith.constant 0 : index
    %c0_0 = arith.constant 0 : index
    %0 = vector.load %arg1[%c0, %c0_0] : memref<648x128xf32, #tpu.memory_space<vmem>>, vector<648x128xf32>
    %c0_1 = arith.constant 0 : index
    %c0_2 = arith.constant 0 : index
    %1 = vector.load %arg2[%c0_1, %c0_2] : memref<128x128xf32, #tpu.memory_space<vmem>>, vector<128x128xf32>
    %cst = arith.constant dense<0.000000e+00> : vector<648x128xf32>
    %2 = tpu.matmul %0, %1, %cst {dimension_numbers = #tpu.dot_dimension_numbers<[1], [0], [0], [1], [0, 0, 1, 1], [], []>} : vector<648x128xf32>, vector<128x128xf32>, vector<648x128xf32> -> vector<648x128xf32>
    %c0_3 = arith.constant 0 : index
    %c0_4 = arith.constant 0 : index
    %3 = vector.load %arg3[%c0_3, %c0_4] : memref<1x128xf32, #tpu.memory_space<vmem>>, vector<1x128xf32>
    %4 = vector.broadcast %3 : vector<1x128xf32> to vector<648x128xf32>
    %5 = arith.addf %2, %4 : vector<648x128xf32>
    %cst_5 = arith.constant 0.000000e+00 : f32
    %6 = vector.broadcast %cst_5 : f32 to vector<648x128xf32>
    %7 = arith.maximumf %5, %6 : vector<648x128xf32>
    %c0_6 = arith.constant 0 : index
    %c0_7 = arith.constant 0 : index
    %8 = vector.load %arg4[%c0_6, %c0_7] : memref<648x128xf32, #tpu.memory_space<vmem>>, vector<648x128xf32>
    tpu.vector_store %arg4[%c0_6, %c0_7], %7 {strides = array<i32>} : memref<648x128xf32, #tpu.memory_space<vmem>>, vector<648x128xf32>,
    return
  }
  func.func @transform_0(%arg0: i32) -> (i32, i32) {
    %c0_i32 = arith.constant 0 : i32
    %c0_i32_0 = arith.constant 0 : i32
    %c0_i32_1 = arith.constant 0 : i32
    return %c0_i32, %c0_i32_0 : i32, i32
  }
  func.func @transform_1(%arg0: i32) -> (i32, i32) {
    %c0_i32 = arith.constant 0 : i32
    %c0_i32_0 = arith.constant 0 : i32
    %c0_i32_1 = arith.constant 0 : i32
    return %c0_i32, %c0_i32_0 : i32, i32
  }
  func.func @transform_2(%arg0: i32) -> (i32, i32) {
    %c0_i32 = arith.constant 0 : i32
    %c0_i32_0 = arith.constant 0 : i32
    %c0_i32_1 = arith.constant 0 : i32
    return %c0_i32, %c0_i32_0 : i32, i32
  }
  func.func @transform_3(%arg0: i32) -> (i32, i32) {
    %c0_i32 = arith.constant 0 : i32
    %c0_i32_0 = arith.constant 0 : i32
    %c0_i32_1 = arith.constant 0 : i32
    return %c0_i32, %c0_i32_0 : i32, i32
  }
}

module attributes {stable_mosaic.version = 11 : i64} {
  func.func @_conv_kernel(%arg0: i32, %arg1: memref<98x512xf32, #tpu.memory_space<vmem>>, %arg2: memref<512x128xf32, #tpu.memory_space<vmem>>, %arg3: memref<1x128xf32, #tpu.memory_space<vmem>>, %arg4: memref<98x128xf32, #tpu.memory_space<vmem>>) attributes {dimension_semantics = [#tpu.dimension_semantics<arbitrary>], iteration_bounds = array<i64: 1>, scalar_prefetch = 0 : i64, scratch_operands = 0 : i64, tpu.core_type = #tpu.core_type<tc>, window_params = [{pipeline_mode = #tpu.pipeline_mode<synchronous>, transform_indices = @transform_0, window_bounds = array<i64: 98, 512>}, {pipeline_mode = #tpu.pipeline_mode<synchronous>, transform_indices = @transform_1, window_bounds = array<i64: 512, 128>}, {pipeline_mode = #tpu.pipeline_mode<synchronous>, transform_indices = @transform_2, window_bounds = array<i64: 1, 128>}, {pipeline_mode = #tpu.pipeline_mode<synchronous>, transform_indices = @transform_3, window_bounds = array<i64: 98, 128>}]} {
    %c0 = arith.constant 0 : index
    %c0_0 = arith.constant 0 : index
    %0 = vector.load %arg1[%c0, %c0_0] : memref<98x512xf32, #tpu.memory_space<vmem>>, vector<98x512xf32>
    %c0_1 = arith.constant 0 : index
    %c0_2 = arith.constant 0 : index
    %1 = vector.load %arg2[%c0_1, %c0_2] : memref<512x128xf32, #tpu.memory_space<vmem>>, vector<512x128xf32>
    %cst = arith.constant dense<0.000000e+00> : vector<98x128xf32>
    %2 = tpu.matmul %0, %1, %cst {dimension_numbers = #tpu.dot_dimension_numbers<[1], [0], [0], [1], [0, 0, 1, 1], [], []>} : vector<98x512xf32>, vector<512x128xf32>, vector<98x128xf32> -> vector<98x128xf32>
    %c0_3 = arith.constant 0 : index
    %c0_4 = arith.constant 0 : index
    %3 = vector.load %arg3[%c0_3, %c0_4] : memref<1x128xf32, #tpu.memory_space<vmem>>, vector<1x128xf32>
    %4 = vector.broadcast %3 : vector<1x128xf32> to vector<98x128xf32>
    %5 = arith.addf %2, %4 : vector<98x128xf32>
    %cst_5 = arith.constant 0.000000e+00 : f32
    %6 = vector.broadcast %cst_5 : f32 to vector<98x128xf32>
    %7 = arith.maximumf %5, %6 : vector<98x128xf32>
    %c0_6 = arith.constant 0 : index
    %c0_7 = arith.constant 0 : index
    %8 = vector.load %arg4[%c0_6, %c0_7] : memref<98x128xf32, #tpu.memory_space<vmem>>, vector<98x128xf32>
    tpu.vector_store %arg4[%c0_6, %c0_7], %7 {strides = array<i32>} : memref<98x128xf32, #tpu.memory_space<vmem>>, vector<98x128xf32>,
    return
  }
  func.func @transform_0(%arg0: i32) -> (i32, i32) {
    %c0_i32 = arith.constant 0 : i32
    %c0_i32_0 = arith.constant 0 : i32
    %c0_i32_1 = arith.constant 0 : i32
    return %c0_i32, %c0_i32_0 : i32, i32
  }
  func.func @transform_1(%arg0: i32) -> (i32, i32) {
    %c0_i32 = arith.constant 0 : i32
    %c0_i32_0 = arith.constant 0 : i32
    %c0_i32_1 = arith.constant 0 : i32
    return %c0_i32, %c0_i32_0 : i32, i32
  }
  func.func @transform_2(%arg0: i32) -> (i32, i32) {
    %c0_i32 = arith.constant 0 : i32
    %c0_i32_0 = arith.constant 0 : i32
    %c0_i32_1 = arith.constant 0 : i32
    return %c0_i32, %c0_i32_0 : i32, i32
  }
  func.func @transform_3(%arg0: i32) -> (i32, i32) {
    %c0_i32 = arith.constant 0 : i32
    %c0_i32_0 = arith.constant 0 : i32
    %c0_i32_1 = arith.constant 0 : i32
    return %c0_i32, %c0_i32_0 : i32, i32
  }
}

module attributes {stable_mosaic.version = 11 : i64} {
  func.func @kernel(%arg0: i32, %arg1: memref<8x896xf32, #tpu.memory_space<vmem>>, %arg2: memref<896x128xf32, #tpu.memory_space<vmem>>, %arg3: memref<1x128xf32, #tpu.memory_space<vmem>>, %arg4: memref<4x128x64xf32, #tpu.memory_space<vmem>>, %arg5: memref<1x64xf32, #tpu.memory_space<vmem>>, %arg6: memref<64x32xf32, #tpu.memory_space<vmem>>, %arg7: memref<1x32xf32, #tpu.memory_space<vmem>>, %arg8: memref<32x128xf32, #tpu.memory_space<vmem>>, %arg9: memref<1x128xf32, #tpu.memory_space<vmem>>, %arg10: memref<2x128xf32, #tpu.memory_space<vmem>>) attributes {dimension_semantics = [#tpu.dimension_semantics<arbitrary>], iteration_bounds = array<i64: 1>, scalar_prefetch = 0 : i64, scratch_operands = 0 : i64, tpu.core_type = #tpu.core_type<tc>, window_params = [{pipeline_mode = #tpu.pipeline_mode<synchronous>, transform_indices = @transform_0, window_bounds = array<i64: 8, 896>}, {pipeline_mode = #tpu.pipeline_mode<synchronous>, transform_indices = @transform_1, window_bounds = array<i64: 896, 128>}, {pipeline_mode = #tpu.pipeline_mode<synchronous>, transform_indices = @transform_2, window_bounds = array<i64: 1, 128>}, {pipeline_mode = #tpu.pipeline_mode<synchronous>, transform_indices = @transform_3, window_bounds = array<i64: 4, 128, 64>}, {pipeline_mode = #tpu.pipeline_mode<synchronous>, transform_indices = @transform_4, window_bounds = array<i64: 1, 64>}, {pipeline_mode = #tpu.pipeline_mode<synchronous>, transform_indices = @transform_5, window_bounds = array<i64: 64, 32>}, {pipeline_mode = #tpu.pipeline_mode<synchronous>, transform_indices = @transform_6, window_bounds = array<i64: 1, 32>}, {pipeline_mode = #tpu.pipeline_mode<synchronous>, transform_indices = @transform_7, window_bounds = array<i64: 32, 128>}, {pipeline_mode = #tpu.pipeline_mode<synchronous>, transform_indices = @transform_8, window_bounds = array<i64: 1, 128>}, {pipeline_mode = #tpu.pipeline_mode<synchronous>, transform_indices = @transform_9, window_bounds = array<i64: 2, 128>}]} {
    %c0 = arith.constant 0 : index
    %c0_0 = arith.constant 0 : index
    %0 = vector.load %arg1[%c0, %c0_0] : memref<8x896xf32, #tpu.memory_space<vmem>>, vector<8x896xf32>
    %c0_1 = arith.constant 0 : index
    %c0_2 = arith.constant 0 : index
    %1 = vector.load %arg2[%c0_1, %c0_2] : memref<896x128xf32, #tpu.memory_space<vmem>>, vector<896x128xf32>
    %cst = arith.constant dense<0.000000e+00> : vector<8x128xf32>
    %2 = tpu.matmul %0, %1, %cst {dimension_numbers = #tpu.dot_dimension_numbers<[1], [0], [0], [1], [0, 0, 1, 1], [], []>} : vector<8x896xf32>, vector<896x128xf32>, vector<8x128xf32> -> vector<8x128xf32>
    %c0_3 = arith.constant 0 : index
    %c0_4 = arith.constant 0 : index
    %3 = vector.load %arg3[%c0_3, %c0_4] : memref<1x128xf32, #tpu.memory_space<vmem>>, vector<1x128xf32>
    %4 = vector.broadcast %3 : vector<1x128xf32> to vector<8x128xf32>
    %5 = arith.addf %2, %4 : vector<8x128xf32>
    %cst_5 = arith.constant 0.000000e+00 : f32
    %6 = vector.broadcast %cst_5 : f32 to vector<8x128xf32>
    %7 = arith.maximumf %5, %6 : vector<8x128xf32>
    %8 = tpu.iota {dimensions = array<i32: 0>} : vector<2x8xi32>
    %9 = tpu.iota {dimensions = array<i32: 1>} : vector<2x8xi32>
    %cst_6 = arith.constant 0.000000e+00 : f32
    %10 = vector.broadcast %cst_6 : f32 to vector<2x64xf32>
    %c4_i32 = arith.constant 4 : i32
    %11 = vector.broadcast %c4_i32 : i32 to vector<2x8xi32>
    %12 = arith.muli %11, %8 : vector<2x8xi32>
    %c0_i32 = arith.constant 0 : i32
    %13 = vector.broadcast %c0_i32 : i32 to vector<2x8xi32>
    %14 = arith.addi %12, %13 : vector<2x8xi32>
    %15 = arith.cmpi eq, %9, %14 : vector<2x8xi32>
    %16 = arith.extui %15 : vector<2x8xi1> to vector<2x8xi32>
    %17 = arith.sitofp %16 : vector<2x8xi32> to vector<2x8xf32>
    %cst_7 = arith.constant dense<0.000000e+00> : vector<2x128xf32>
    %18 = tpu.matmul %17, %7, %cst_7 {dimension_numbers = #tpu.dot_dimension_numbers<[1], [0], [0], [1], [0, 0, 1, 1], [], []>} : vector<2x8xf32>, vector<8x128xf32>, vector<2x128xf32> -> vector<2x128xf32>
    %c0_8 = arith.constant 0 : index
    %c0_9 = arith.constant 0 : index
    %c0_10 = arith.constant 0 : index
    %19 = vector.load %arg4[%c0_8, %c0_9, %c0_10] : memref<4x128x64xf32, #tpu.memory_space<vmem>>, vector<1x128x64xf32>
    %20 = vector.shape_cast %19 : vector<1x128x64xf32> to vector<128x64xf32>
    %cst_11 = arith.constant dense<0.000000e+00> : vector<2x64xf32>
    %21 = tpu.matmul %18, %20, %cst_11 {dimension_numbers = #tpu.dot_dimension_numbers<[1], [0], [0], [1], [0, 0, 1, 1], [], []>} : vector<2x128xf32>, vector<128x64xf32>, vector<2x64xf32> -> vector<2x64xf32>
    %22 = arith.addf %10, %21 : vector<2x64xf32>
    %c4_i32_12 = arith.constant 4 : i32
    %23 = vector.broadcast %c4_i32_12 : i32 to vector<2x8xi32>
    %24 = arith.muli %23, %8 : vector<2x8xi32>
    %c1_i32 = arith.constant 1 : i32
    %25 = vector.broadcast %c1_i32 : i32 to vector<2x8xi32>
    %26 = arith.addi %24, %25 : vector<2x8xi32>
    %27 = arith.cmpi eq, %9, %26 : vector<2x8xi32>
    %28 = arith.extui %27 : vector<2x8xi1> to vector<2x8xi32>
    %29 = arith.sitofp %28 : vector<2x8xi32> to vector<2x8xf32>
    %cst_13 = arith.constant dense<0.000000e+00> : vector<2x128xf32>
    %30 = tpu.matmul %29, %7, %cst_13 {dimension_numbers = #tpu.dot_dimension_numbers<[1], [0], [0], [1], [0, 0, 1, 1], [], []>} : vector<2x8xf32>, vector<8x128xf32>, vector<2x128xf32> -> vector<2x128xf32>
    %c1 = arith.constant 1 : index
    %c0_14 = arith.constant 0 : index
    %c0_15 = arith.constant 0 : index
    %31 = vector.load %arg4[%c1, %c0_14, %c0_15] : memref<4x128x64xf32, #tpu.memory_space<vmem>>, vector<1x128x64xf32>
    %32 = vector.shape_cast %31 : vector<1x128x64xf32> to vector<128x64xf32>
    %cst_16 = arith.constant dense<0.000000e+00> : vector<2x64xf32>
    %33 = tpu.matmul %30, %32, %cst_16 {dimension_numbers = #tpu.dot_dimension_numbers<[1], [0], [0], [1], [0, 0, 1, 1], [], []>} : vector<2x128xf32>, vector<128x64xf32>, vector<2x64xf32> -> vector<2x64xf32>
    %34 = arith.addf %22, %33 : vector<2x64xf32>
    %c4_i32_17 = arith.constant 4 : i32
    %35 = vector.broadcast %c4_i32_17 : i32 to vector<2x8xi32>
    %36 = arith.muli %35, %8 : vector<2x8xi32>
    %c2_i32 = arith.constant 2 : i32
    %37 = vector.broadcast %c2_i32 : i32 to vector<2x8xi32>
    %38 = arith.addi %36, %37 : vector<2x8xi32>
    %39 = arith.cmpi eq, %9, %38 : vector<2x8xi32>
    %40 = arith.extui %39 : vector<2x8xi1> to vector<2x8xi32>
    %41 = arith.sitofp %40 : vector<2x8xi32> to vector<2x8xf32>
    %cst_18 = arith.constant dense<0.000000e+00> : vector<2x128xf32>
    %42 = tpu.matmul %41, %7, %cst_18 {dimension_numbers = #tpu.dot_dimension_numbers<[1], [0], [0], [1], [0, 0, 1, 1], [], []>} : vector<2x8xf32>, vector<8x128xf32>, vector<2x128xf32> -> vector<2x128xf32>
    %c2 = arith.constant 2 : index
    %c0_19 = arith.constant 0 : index
    %c0_20 = arith.constant 0 : index
    %43 = vector.load %arg4[%c2, %c0_19, %c0_20] : memref<4x128x64xf32, #tpu.memory_space<vmem>>, vector<1x128x64xf32>
    %44 = vector.shape_cast %43 : vector<1x128x64xf32> to vector<128x64xf32>
    %cst_21 = arith.constant dense<0.000000e+00> : vector<2x64xf32>
    %45 = tpu.matmul %42, %44, %cst_21 {dimension_numbers = #tpu.dot_dimension_numbers<[1], [0], [0], [1], [0, 0, 1, 1], [], []>} : vector<2x128xf32>, vector<128x64xf32>, vector<2x64xf32> -> vector<2x64xf32>
    %46 = arith.addf %34, %45 : vector<2x64xf32>
    %c4_i32_22 = arith.constant 4 : i32
    %47 = vector.broadcast %c4_i32_22 : i32 to vector<2x8xi32>
    %48 = arith.muli %47, %8 : vector<2x8xi32>
    %c3_i32 = arith.constant 3 : i32
    %49 = vector.broadcast %c3_i32 : i32 to vector<2x8xi32>
    %50 = arith.addi %48, %49 : vector<2x8xi32>
    %51 = arith.cmpi eq, %9, %50 : vector<2x8xi32>
    %52 = arith.extui %51 : vector<2x8xi1> to vector<2x8xi32>
    %53 = arith.sitofp %52 : vector<2x8xi32> to vector<2x8xf32>
    %cst_23 = arith.constant dense<0.000000e+00> : vector<2x128xf32>
    %54 = tpu.matmul %53, %7, %cst_23 {dimension_numbers = #tpu.dot_dimension_numbers<[1], [0], [0], [1], [0, 0, 1, 1], [], []>} : vector<2x8xf32>, vector<8x128xf32>, vector<2x128xf32> -> vector<2x128xf32>
    %c3 = arith.constant 3 : index
    %c0_24 = arith.constant 0 : index
    %c0_25 = arith.constant 0 : index
    %55 = vector.load %arg4[%c3, %c0_24, %c0_25] : memref<4x128x64xf32, #tpu.memory_space<vmem>>, vector<1x128x64xf32>
    %56 = vector.shape_cast %55 : vector<1x128x64xf32> to vector<128x64xf32>
    %cst_26 = arith.constant dense<0.000000e+00> : vector<2x64xf32>
    %57 = tpu.matmul %54, %56, %cst_26 {dimension_numbers = #tpu.dot_dimension_numbers<[1], [0], [0], [1], [0, 0, 1, 1], [], []>} : vector<2x128xf32>, vector<128x64xf32>, vector<2x64xf32> -> vector<2x64xf32>
    %58 = arith.addf %46, %57 : vector<2x64xf32>
    %c0_27 = arith.constant 0 : index
    %c0_28 = arith.constant 0 : index
    %59 = vector.load %arg5[%c0_27, %c0_28] : memref<1x64xf32, #tpu.memory_space<vmem>>, vector<1x64xf32>
    %60 = vector.broadcast %59 : vector<1x64xf32> to vector<2x64xf32>
    %61 = arith.addf %58, %60 : vector<2x64xf32>
    %cst_29 = arith.constant 0.000000e+00 : f32
    %62 = vector.broadcast %cst_29 : f32 to vector<2x64xf32>
    %63 = arith.cmpf oge, %61, %62 : vector<2x64xf32>
    %cst_30 = arith.constant 0.00999999977 : f32
    %64 = vector.broadcast %cst_30 : f32 to vector<2x64xf32>
    %65 = arith.mulf %64, %61 : vector<2x64xf32>
    %66 = arith.select %63, %61, %65 : vector<2x64xi1>, vector<2x64xf32>
    %c0_31 = arith.constant 0 : index
    %c0_32 = arith.constant 0 : index
    %67 = vector.load %arg6[%c0_31, %c0_32] : memref<64x32xf32, #tpu.memory_space<vmem>>, vector<64x32xf32>
    %cst_33 = arith.constant dense<0.000000e+00> : vector<2x32xf32>
    %68 = tpu.matmul %66, %67, %cst_33 {dimension_numbers = #tpu.dot_dimension_numbers<[1], [0], [0], [1], [0, 0, 1, 1], [], []>} : vector<2x64xf32>, vector<64x32xf32>, vector<2x32xf32> -> vector<2x32xf32>
    %c0_34 = arith.constant 0 : index
    %c0_35 = arith.constant 0 : index
    %69 = vector.load %arg7[%c0_34, %c0_35] : memref<1x32xf32, #tpu.memory_space<vmem>>, vector<1x32xf32>
    %70 = vector.broadcast %69 : vector<1x32xf32> to vector<2x32xf32>
    %71 = arith.addf %68, %70 : vector<2x32xf32>
    %cst_36 = arith.constant 0.000000e+00 : f32
    %72 = vector.broadcast %cst_36 : f32 to vector<2x32xf32>
    %73 = arith.cmpf oge, %71, %72 : vector<2x32xf32>
    %cst_37 = arith.constant 0.00999999977 : f32
    %74 = vector.broadcast %cst_37 : f32 to vector<2x32xf32>
    %75 = arith.mulf %74, %71 : vector<2x32xf32>
    %76 = arith.select %73, %71, %75 : vector<2x32xi1>, vector<2x32xf32>
    %c0_38 = arith.constant 0 : index
    %c0_39 = arith.constant 0 : index
    %77 = vector.load %arg8[%c0_38, %c0_39] : memref<32x128xf32, #tpu.memory_space<vmem>>, vector<32x128xf32>
    %cst_40 = arith.constant dense<0.000000e+00> : vector<2x128xf32>
    %78 = tpu.matmul %76, %77, %cst_40 {dimension_numbers = #tpu.dot_dimension_numbers<[1], [0], [0], [1], [0, 0, 1, 1], [], []>} : vector<2x32xf32>, vector<32x128xf32>, vector<2x128xf32> -> vector<2x128xf32>
    %c0_41 = arith.constant 0 : index
    %c0_42 = arith.constant 0 : index
    %79 = vector.load %arg9[%c0_41, %c0_42] : memref<1x128xf32, #tpu.memory_space<vmem>>, vector<1x128xf32>
    %80 = vector.broadcast %79 : vector<1x128xf32> to vector<2x128xf32>
    %81 = arith.addf %78, %80 : vector<2x128xf32>
    %82 = tpu.iota {dimensions = array<i32: 1>} : vector<2x128xi32>
    %c4_i32_43 = arith.constant 4 : i32
    %83 = vector.broadcast %c4_i32_43 : i32 to vector<2x128xi32>
    %84 = arith.cmpi slt, %82, %83 : vector<2x128xi32>
    %85 = math.tanh %81 : vector<2x128xf32>
    %86 = arith.select %84, %85, %81 : vector<2x128xi1>, vector<2x128xf32>
    %c0_44 = arith.constant 0 : index
    %c0_45 = arith.constant 0 : index
    %87 = vector.load %arg10[%c0_44, %c0_45] : memref<2x128xf32, #tpu.memory_space<vmem>>, vector<2x128xf32>
    tpu.vector_store %arg10[%c0_44, %c0_45], %86 {strides = array<i32>} : memref<2x128xf32, #tpu.memory_space<vmem>>, vector<2x128xf32>,
    return
  }
  func.func @transform_0(%arg0: i32) -> (i32, i32) {
    %c0_i32 = arith.constant 0 : i32
    %c0_i32_0 = arith.constant 0 : i32
    %c0_i32_1 = arith.constant 0 : i32
    return %c0_i32, %c0_i32_0 : i32, i32
  }
  func.func @transform_1(%arg0: i32) -> (i32, i32) {
    %c0_i32 = arith.constant 0 : i32
    %c0_i32_0 = arith.constant 0 : i32
    %c0_i32_1 = arith.constant 0 : i32
    return %c0_i32, %c0_i32_0 : i32, i32
  }
  func.func @transform_2(%arg0: i32) -> (i32, i32) {
    %c0_i32 = arith.constant 0 : i32
    %c0_i32_0 = arith.constant 0 : i32
    %c0_i32_1 = arith.constant 0 : i32
    return %c0_i32, %c0_i32_0 : i32, i32
  }
  func.func @transform_3(%arg0: i32) -> (i32, i32, i32) {
    %c0_i32 = arith.constant 0 : i32
    %c0_i32_0 = arith.constant 0 : i32
    %c0_i32_1 = arith.constant 0 : i32
    %c0_i32_2 = arith.constant 0 : i32
    return %c0_i32, %c0_i32_0, %c0_i32_1 : i32, i32, i32
  }
  func.func @transform_4(%arg0: i32) -> (i32, i32) {
    %c0_i32 = arith.constant 0 : i32
    %c0_i32_0 = arith.constant 0 : i32
    %c0_i32_1 = arith.constant 0 : i32
    return %c0_i32, %c0_i32_0 : i32, i32
  }
  func.func @transform_5(%arg0: i32) -> (i32, i32) {
    %c0_i32 = arith.constant 0 : i32
    %c0_i32_0 = arith.constant 0 : i32
    %c0_i32_1 = arith.constant 0 : i32
    return %c0_i32, %c0_i32_0 : i32, i32
  }
  func.func @transform_6(%arg0: i32) -> (i32, i32) {
    %c0_i32 = arith.constant 0 : i32
    %c0_i32_0 = arith.constant 0 : i32
    %c0_i32_1 = arith.constant 0 : i32
    return %c0_i32, %c0_i32_0 : i32, i32
  }
  func.func @transform_7(%arg0: i32) -> (i32, i32) {
    %c0_i32 = arith.constant 0 : i32
    %c0_i32_0 = arith.constant 0 : i32
    %c0_i32_1 = arith.constant 0 : i32
    return %c0_i32, %c0_i32_0 : i32, i32
  }
  func.func @transform_8(%arg0: i32) -> (i32, i32) {
    %c0_i32 = arith.constant 0 : i32
    %c0_i32_0 = arith.constant 0 : i32
    %c0_i32_1 = arith.constant 0 : i32
    return %c0_i32, %c0_i32_0 : i32, i32
  }
  func.func @transform_9(%arg0: i32) -> (i32, i32) {
    %c0_i32 = arith.constant 0 : i32
    %c0_i32_0 = arith.constant 0 : i32
    %c0_i32_1 = arith.constant 0 : i32
    return %c0_i32, %c0_i32_0 : i32, i32
  }
}

</mosaic_0001>

<llo_original>
// kernel: actor_critic_forward.3
$region0: #{actor_critic_forward.3}
  #allocation0 [shape = 'u32[]', space=smem, size = 0x4, offset = 0x4, fixed_abs, tag = 'smem constant byte address 0x4 - core index']
  #allocation1 [shape = 'u32[144,128]{1,0:T(1,128)}', space=vmem, size = 0x12000, scoped, tag = 'internal scratch']
  %s0 = inlined_call_operand.vmem [shape: f32[648,128], index: 0, kind: input, shape index: {}]
  %s1 = inlined_call_operand.vmem [shape: f32[128,128], index: 1, kind: input, shape index: {}]
  %s2 = inlined_call_operand.vmem [shape: f32[1,128], index: 2, kind: input, shape index: {}]
  %s3 = inlined_call_operand.vmem [shape: f32[648,128], index: 3, kind: output, shape index: {}]
  %s4 = sld [smem:[#allocation0]]
  $region22: #{actor_critic_forward.3} parent=0
    _
  %s6 = ssub.s32 1, %s4
  %s7 = scalar_select 0, %s6, %s4
  // Predicated region
  $region2: #{actor_critic_forward.3} parent=0 // pred_check
    _
  $region3: #{actor_critic_forward.3} parent=0 // pred_check_branch
    %9 = sbr.rel (0) target = $region5
  $region4: #{actor_critic_forward.3} parent=0 // pred_region
    _
  $region5: #{actor_critic_forward.3} parent=0 // pred_fallthru
    _
  // Predicated region
  $region6: #{actor_critic_forward.3} parent=0 // pred_check
    _
  $region7: #{actor_critic_forward.3} parent=0 // pred_check_branch
    %11 = sbr.rel (0) target = $region9
  $region8: #{actor_critic_forward.3} parent=0 // pred_region
    _
  $region9: #{actor_critic_forward.3} parent=0 // pred_fallthru
    _
  // Predicated region
  $region10: #{actor_critic_forward.3} parent=0 // pred_check
    _
  $region11: #{actor_critic_forward.3} parent=0 // pred_check_branch
    %13 = sbr.rel (0) target = $region13
  $region12: #{actor_critic_forward.3} parent=0 // pred_region
    _
  $region13: #{actor_critic_forward.3} parent=0 // pred_fallthru
    _
  %v14 = vld [vmem:[%s0] sm:$0xff]
  %v15 = vld [vmem:[%s0 + $0x8] sm:$0xff]
  %v16 = vld [vmem:[%s0 + $0x10] sm:$0xff]
  %v17 = vld [vmem:[%s0 + $0x18] sm:$0xff]
  %v18 = vld [vmem:[%s0 + $0x20] sm:$0xff]
  %v19 = vld [vmem:[%s0 + $0x28] sm:$0xff]
  %v20 = vld [vmem:[%s0 + $0x30] sm:$0xff]
  %v21 = vld [vmem:[%s0 + $0x38] sm:$0xff]
  %v22 = vld [vmem:[%s0 + $0x40] sm:$0xff]
  %v23 = vld [vmem:[%s0 + $0x48] sm:$0xff]
  %v24 = vld [vmem:[%s0 + $0x50] sm:$0xff]
  %v25 = vld [vmem:[%s0 + $0x58] sm:$0xff]
  %v26 = vld [vmem:[%s0 + $0x60] sm:$0xff]
  %v27 = vld [vmem:[%s0 + $0x68] sm:$0xff]
  %v28 = vld [vmem:[%s0 + $0x70] sm:$0xff]
  %v29 = vld [vmem:[%s0 + $0x78] sm:$0xff]
  %v30 = vld [vmem:[%s0 + $0x80] sm:$0xff]
  %v31 = vld [vmem:[%s0 + $0x88] sm:$0xff]
  %v32 = vld [vmem:[%s0 + $0x90] sm:$0xff]
  %v33 = vld [vmem:[%s0 + $0x98] sm:$0xff]
  %v34 = vld [vmem:[%s0 + $0xa0] sm:$0xff]
  %v35 = vld [vmem:[%s0 + $0xa8] sm:$0xff]
  %v36 = vld [vmem:[%s0 + $0xb0] sm:$0xff]
  %v37 = vld [vmem:[%s0 + $0xb8] sm:$0xff]
  %v38 = vld [vmem:[%s0 + $0xc0] sm:$0xff]
  %v39 = vld [vmem:[%s0 + $0xc8] sm:$0xff]
  %v40 = vld [vmem:[%s0 + $0xd0] sm:$0xff]
  %v41 = vld [vmem:[%s0 + $0xd8] sm:$0xff]
  %v42 = vld [vmem:[%s0 + $0xe0] sm:$0xff]
  %v43 = vld [vmem:[%s0 + $0xe8] sm:$0xff]
  %v44 = vld [vmem:[%s0 + $0xf0] sm:$0xff]
  %v45 = vld [vmem:[%s0 + $0xf8] sm:$0xff]
  %v46 = vld [vmem:[%s0 + $0x100] sm:$0xff]
  %v47 = vld [vmem:[%s0 + $0x108] sm:$0xff]
  %v48 = vld [vmem:[%s0 + $0x110] sm:$0xff]
  %v49 = vld [vmem:[%s0 + $0x118] sm:$0xff]
  %v50 = vld [vmem:[%s0 + $0x120] sm:$0xff]
  %v51 = vld [vmem:[%s0 + $0x128] sm:$0xff]
  %v52 = vld [vmem:[%s0 + $0x130] sm:$0xff]
  %v53 = vld [vmem:[%s0 + $0x138] sm:$0xff]
  %v54 = vld [vmem:[%s0 + $0x140] sm:$0xff]
  %v55 = vld [vmem:[%s0 + $0x148] sm:$0xff]
  %v56 = vld [vmem:[%s0 + $0x150] sm:$0xff]
  %v57 = vld [vmem:[%s0 + $0x158] sm:$0xff]
  %v58 = vld [vmem:[%s0 + $0x160] sm:$0xff]
  %v59 = vld [vmem:[%s0 + $0x168] sm:$0xff]
  %v60 = vld [vmem:[%s0 + $0x170] sm:$0xff]
  %v61 = vld [vmem:[%s0 + $0x178] sm:$0xff]
  %v62 = vld [vmem:[%s0 + $0x180] sm:$0xff]
  %v63 = vld [vmem:[%s0 + $0x188] sm:$0xff]
  %v64 = vld [vmem:[%s0 + $0x190] sm:$0xff]
  %v65 = vld [vmem:[%s0 + $0x198] sm:$0xff]
  %v66 = vld [vmem:[%s0 + $0x1a0] sm:$0xff]
  %v67 = vld [vmem:[%s0 + $0x1a8] sm:$0xff]
  %v68 = vld [vmem:[%s0 + $0x1b0] sm:$0xff]
  %v69 = vld [vmem:[%s0 + $0x1b8] sm:$0xff]
  %v70 = vld [vmem:[%s0 + $0x1c0] sm:$0xff]
  %v71 = vld [vmem:[%s0 + $0x1c8] sm:$0xff]
  %v72 = vld [vmem:[%s0 + $0x1d0] sm:$0xff]
  %v73 = vld [vmem:[%s0 + $0x1d8] sm:$0xff]
  %v74 = vld [vmem:[%s0 + $0x1e0] sm:$0xff]
  %v75 = vld [vmem:[%s0 + $0x1e8] sm:$0xff]
  %v76 = vld [vmem:[%s0 + $0x1f0] sm:$0xff]
  %v77 = vld [vmem:[%s0 + $0x1f8] sm:$0xff]
  %v78 = vld [vmem:[%s0 + $0x200] sm:$0xff]
  %v79 = vld [vmem:[%s0 + $0x208] sm:$0xff]
  %v80 = vld [vmem:[%s0 + $0x210] sm:$0xff]
  %v81 = vld [vmem:[%s0 + $0x218] sm:$0xff]
  %v82 = vld [vmem:[%s0 + $0x220] sm:$0xff]
  %v83 = vld [vmem:[%s0 + $0x228] sm:$0xff]
  %v84 = vld [vmem:[%s0 + $0x230] sm:$0xff]
  %v85 = vld [vmem:[%s0 + $0x238] sm:$0xff]
  %v86 = vld [vmem:[%s0 + $0x240] sm:$0xff]
  %v87 = vld [vmem:[%s0 + $0x248] sm:$0xff]
  %v88 = vld [vmem:[%s0 + $0x250] sm:$0xff]
  %v89 = vld [vmem:[%s0 + $0x258] sm:$0xff]
  %v90 = vld [vmem:[%s0 + $0x260] sm:$0xff]
  %v91 = vld [vmem:[%s0 + $0x268] sm:$0xff]
  %v92 = vld [vmem:[%s0 + $0x270] sm:$0xff]
  %v93 = vld [vmem:[%s0 + $0x278] sm:$0xff]
  %v94 = vld [vmem:[%s0 + $0x280] sm:$0xff]
  %v95 = vld [vmem:[%s1] sm:$0xff]
  %v96 = vld [vmem:[%s1 + $0x8] sm:$0xff]
  %v97 = vld [vmem:[%s1 + $0x10] sm:$0xff]
  %v98 = vld [vmem:[%s1 + $0x18] sm:$0xff]
  %v99 = vld [vmem:[%s1 + $0x20] sm:$0xff]
  %v100 = vld [vmem:[%s1 + $0x28] sm:$0xff]
  %v101 = vld [vmem:[%s1 + $0x30] sm:$0xff]
  %v102 = vld [vmem:[%s1 + $0x38] sm:$0xff]
  %v103 = vld [vmem:[%s1 + $0x40] sm:$0xff]
  %v104 = vld [vmem:[%s1 + $0x48] sm:$0xff]
  %v105 = vld [vmem:[%s1 + $0x50] sm:$0xff]
  %v106 = vld [vmem:[%s1 + $0x58] sm:$0xff]
  %v107 = vld [vmem:[%s1 + $0x60] sm:$0xff]
  %v108 = vld [vmem:[%s1 + $0x68] sm:$0xff]
  %v109 = vld [vmem:[%s1 + $0x70] sm:$0xff]
  %v110 = vld [vmem:[%s1 + $0x78] sm:$0xff]
  %v111 = vld [vmem:[%s2] sm:$0x1]
  %v113 = vlaneseq
  %v114 = vshrl.u32 %v113, 7
  %v115 = vsub.s32 0, %v114
  %v116 = vrot.slane %v111, %v115
  %118 = vmatprep.subr.mxu0 0.0
  %119 = vmatpush1.msra.mxu0 %v95
  %120 = vmatprep.subr.mxu0 0.0
  %121 = vmatpush1.msra.mxu0 %v96
  %122 = vmatprep.subr.mxu0 0.0
  %123 = vmatpush1.msra.mxu0 %v97
  %124 = vmatprep.subr.mxu0 0.0
  %125 = vmatpush1.msra.mxu0 %v98
  %126 = vmatprep.subr.mxu0 0.0
  %127 = vmatpush1.msra.mxu0 %v99
  %128 = vmatprep.subr.mxu0 0.0
  %129 = vmatpush1.msra.mxu0 %v100
  %130 = vmatprep.subr.mxu0 0.0
  %131 = vmatpush1.msra.mxu0 %v101
  %132 = vmatprep.subr.mxu0 0.0
  %133 = vmatpush1.msra.mxu0 %v102
  %134 = vmatprep.subr.mxu0 0.0
  %135 = vmatpush1.msra.mxu0 %v103
  %136 = vmatprep.subr.mxu0 0.0
  %137 = vmatpush1.msra.mxu0 %v104
  %138 = vmatprep.subr.mxu0 0.0
  %139 = vmatpush1.msra.mxu0 %v105
  %140 = vmatprep.subr.mxu0 0.0
  %141 = vmatpush1.msra.mxu0 %v106
  %142 = vmatprep.subr.mxu0 0.0
  %143 = vmatpush1.msra.mxu0 %v107
  %144 = vmatprep.subr.mxu0 0.0
  %145 = vmatpush1.msra.mxu0 %v108
  %146 = vmatprep.subr.mxu0 0.0
  %147 = vmatpush1.msra.mxu0 %v109
  %148 = vmatprep.subr.mxu0 0.0
  %149 = vmatpush1.msra.mxu0 %v110
  %150 = vmatprep.subr.mxu0 0.0
  %151 = vmatpush1.msra.mxu0 0.0
  %152 = vmatprep.subr.mxu0 0.0
  %153 = vmatpush1.msra.mxu0 0.0
  %154 = vmatprep.subr.mxu0 0.0
  %155 = vmatpush1.msra.mxu0 0.0
  %156 = vmatprep.subr.mxu0 0.0
  %157 = vmatpush1.msra.mxu0 0.0
  %158 = vmatprep.subr.mxu0 0.0
  %159 = vmatpush1.msra.mxu0 0.0
  %160 = vmatprep.subr.mxu0 0.0
  %161 = vmatpush1.msra.mxu0 0.0
  %162 = vmatprep.subr.mxu0 0.0
  %163 = vmatpush1.msra.mxu0 0.0
  %164 = vmatprep.subr.mxu0 0.0
  %165 = vmatpush1.msra.mxu0 0.0
  %166 = vmatprep.subr.mxu0 0.0
  %167 = vmatpush1.msra.mxu0 0.0
  %168 = vmatprep.subr.mxu0 0.0
  %169 = vmatpush1.msra.mxu0 0.0
  %170 = vmatprep.subr.mxu0 0.0
  %171 = vmatpush1.msra.mxu0 0.0
  %172 = vmatprep.subr.mxu0 0.0
  %173 = vmatpush1.msra.mxu0 0.0
  %174 = vmatprep.subr.mxu0 0.0
  %175 = vmatpush1.msra.mxu0 0.0
  %176 = vmatprep.subr.mxu0 0.0
  %177 = vmatpush1.msra.mxu0 0.0
  %178 = vmatprep.subr.mxu0 0.0
  %179 = vmatpush1.msra.mxu0 0.0
  %180 = vmatprep.subr.mxu0 0.0
  %181 = vmatpush1.msra.mxu0 0.0
  %182 = vmatprep.mubr.f32.mxu0 0.0
  %183 = vmatmul.mubr.f32.gmra.mrb[0].mxu0 %v14
  %v184 = vpop.f32.mrb[0].mxu0
  %v185 = vadd.f32 %v116, %v184
  %v186 = vpop.f32.mrb[0].mxu0
  %187 = vmatprep.mubr.f32.mxu0 0.0
  %188 = vmatmul.mubr.f32.gmra.mrb[0].mxu0 %v15
  %v189 = vpop.f32.mrb[0].mxu0
  %v190 = vadd.f32 %v116, %v189
  %v191 = vpop.f32.mrb[0].mxu0
  %192 = vmatprep.mubr.f32.mxu0 0.0
  %193 = vmatmul.mubr.f32.gmra.mrb[0].mxu0 %v16
  %v194 = vpop.f32.mrb[0].mxu0
  %v195 = vadd.f32 %v116, %v194
  %v196 = vpop.f32.mrb[0].mxu0
  %197 = vmatprep.mubr.f32.mxu0 0.0
  %198 = vmatmul.mubr.f32.gmra.mrb[0].mxu0 %v17
  %v199 = vpop.f32.mrb[0].mxu0
  %v200 = vadd.f32 %v116, %v199
  %v201 = vpop.f32.mrb[0].mxu0
  %202 = vmatprep.mubr.f32.mxu0 0.0
  %203 = vmatmul.mubr.f32.gmra.mrb[0].mxu0 %v18
  %v204 = vpop.f32.mrb[0].mxu0
  %v205 = vadd.f32 %v116, %v204
  %v206 = vpop.f32.mrb[0].mxu0
  %207 = vmatprep.mubr.f32.mxu0 0.0
  %208 = vmatmul.mubr.f32.gmra.mrb[0].mxu0 %v19
  %v209 = vpop.f32.mrb[0].mxu0
  %v210 = vadd.f32 %v116, %v209
  %v211 = vpop.f32.mrb[0].mxu0
  %212 = vmatprep.mubr.f32.mxu0 0.0
  %213 = vmatmul.mubr.f32.gmra.mrb[0].mxu0 %v20
  %v214 = vpop.f32.mrb[0].mxu0
  %v215 = vadd.f32 %v116, %v214
  %v216 = vpop.f32.mrb[0].mxu0
  %217 = vmatprep.mubr.f32.mxu0 0.0
  %218 = vmatmul.mubr.f32.gmra.mrb[0].mxu0 %v21
  %v219 = vpop.f32.mrb[0].mxu0
  %v220 = vadd.f32 %v116, %v219
  %v221 = vpop.f32.mrb[0].mxu0
  %222 = vmatprep.mubr.f32.mxu0 0.0
  %223 = vmatmul.mubr.f32.gmra.mrb[0].mxu0 %v22
  %v224 = vpop.f32.mrb[0].mxu0
  %v225 = vadd.f32 %v116, %v224
  %v226 = vpop.f32.mrb[0].mxu0
  %227 = vmatprep.mubr.f32.mxu0 0.0
  %228 = vmatmul.mubr.f32.gmra.mrb[0].mxu0 %v23
  %v229 = vpop.f32.mrb[0].mxu0
  %v230 = vadd.f32 %v116, %v229
  %v231 = vpop.f32.mrb[0].mxu0
  %232 = vmatprep.mubr.f32.mxu0 0.0
  %233 = vmatmul.mubr.f32.gmra.mrb[0].mxu0 %v24
  %v234 = vpop.f32.mrb[0].mxu0
  %v235 = vadd.f32 %v116, %v234
  %v236 = vpop.f32.mrb[0].mxu0
  %237 = vmatprep.mubr.f32.mxu0 0.0
  %238 = vmatmul.mubr.f32.gmra.mrb[0].mxu0 %v25
  %v239 = vpop.f32.mrb[0].mxu0
  %v240 = vadd.f32 %v116, %v239
  %v241 = vpop.f32.mrb[0].mxu0
  %242 = vmatprep.mubr.f32.mxu0 0.0
  %243 = vmatmul.mubr.f32.gmra.mrb[0].mxu0 %v26
  %v244 = vpop.f32.mrb[0].mxu0
  %v245 = vadd.f32 %v116, %v244
  %v246 = vpop.f32.mrb[0].mxu0
  %247 = vmatprep.mubr.f32.mxu0 0.0
  %248 = vmatmul.mubr.f32.gmra.mrb[0].mxu0 %v27
  %v249 = vpop.f32.mrb[0].mxu0
  %v250 = vadd.f32 %v116, %v249
  %v251 = vpop.f32.mrb[0].mxu0
  %252 = vmatprep.mubr.f32.mxu0 0.0
  %253 = vmatmul.mubr.f32.gmra.mrb[0].mxu0 %v28
  %v254 = vpop.f32.mrb[0].mxu0
  %v255 = vadd.f32 %v116, %v254
  %v256 = vpop.f32.mrb[0].mxu0
  %257 = vmatprep.mubr.f32.mxu0 0.0
  %258 = vmatmul.mubr.f32.gmra.mrb[0].mxu0 %v29
  %v259 = vpop.f32.mrb[0].mxu0
  %v260 = vadd.f32 %v116, %v259
  %v261 = vpop.f32.mrb[0].mxu0
  %262 = vmatprep.mubr.f32.mxu0 0.0
  %263 = vmatmul.mubr.f32.gmra.mrb[0].mxu0 %v30
  %v264 = vpop.f32.mrb[0].mxu0
  %v265 = vadd.f32 %v116, %v264
  %v266 = vpop.f32.mrb[0].mxu0
  %267 = vmatprep.mubr.f32.mxu0 0.0
  %268 = vmatmul.mubr.f32.gmra.mrb[0].mxu0 %v31
  %v269 = vpop.f32.mrb[0].mxu0
  %v270 = vadd.f32 %v116, %v269
  %v271 = vpop.f32.mrb[0].mxu0
  %272 = vmatprep.mubr.f32.mxu0 0.0
  %273 = vmatmul.mubr.f32.gmra.mrb[0].mxu0 %v32
  %v274 = vpop.f32.mrb[0].mxu0
  %v275 = vadd.f32 %v116, %v274
  %v276 = vpop.f32.mrb[0].mxu0
  %277 = vmatprep.mubr.f32.mxu0 0.0
  %278 = vmatmul.mubr.f32.gmra.mrb[0].mxu0 %v33
  %v279 = vpop.f32.mrb[0].mxu0
  %v280 = vadd.f32 %v116, %v279
  %v281 = vpop.f32.mrb[0].mxu0
  %282 = vmatprep.mubr.f32.mxu0 0.0
  %283 = vmatmul.mubr.f32.gmra.mrb[0].mxu0 %v34
  %v284 = vpop.f32.mrb[0].mxu0
  %v285 = vadd.f32 %v116, %v284
  %v286 = vpop.f32.mrb[0].mxu0
  %287 = vmatprep.mubr.f32.mxu0 0.0
  %288 = vmatmul.mubr.f32.gmra.mrb[0].mxu0 %v35
  %v289 = vpop.f32.mrb[0].mxu0
  %v290 = vadd.f32 %v116, %v289
  %v291 = vpop.f32.mrb[0].mxu0
  %292 = vmatprep.mubr.f32.mxu0 0.0
  %293 = vmatmul.mubr.f32.gmra.mrb[0].mxu0 %v36
  %v294 = vpop.f32.mrb[0].mxu0
  %v295 = vadd.f32 %v116, %v294
  %v296 = vpop.f32.mrb[0].mxu0
  %297 = vmatprep.mubr.f32.mxu0 0.0
  %298 = vmatmul.mubr.f32.gmra.mrb[0].mxu0 %v37
  %v299 = vpop.f32.mrb[0].mxu0
  %v300 = vadd.f32 %v116, %v299
  %v301 = vpop.f32.mrb[0].mxu0
  %302 = vmatprep.mubr.f32.mxu0 0.0
  %303 = vmatmul.mubr.f32.gmra.mrb[0].mxu0 %v38
  %v304 = vpop.f32.mrb[0].mxu0
  %v305 = vadd.f32 %v116, %v304
  %v306 = vpop.f32.mrb[0].mxu0
  %307 = vmatprep.mubr.f32.mxu0 0.0
  %308 = vmatmul.mubr.f32.gmra.mrb[0].mxu0 %v39
  %v309 = vpop.f32.mrb[0].mxu0
  %v310 = vadd.f32 %v116, %v309
  %v311 = vpop.f32.mrb[0].mxu0
  %312 = vmatprep.mubr.f32.mxu0 0.0
  %313 = vmatmul.mubr.f32.gmra.mrb[0].mxu0 %v40
  %v314 = vpop.f32.mrb[0].mxu0
  %v315 = vadd.f32 %v116, %v314
  %v316 = vpop.f32.mrb[0].mxu0
  %317 = vmatprep.mubr.f32.mxu0 0.0
  %318 = vmatmul.mubr.f32.gmra.mrb[0].mxu0 %v41
  %v319 = vpop.f32.mrb[0].mxu0
  %v320 = vadd.f32 %v116, %v319
  %v321 = vpop.f32.mrb[0].mxu0
  %322 = vmatprep.mubr.f32.mxu0 0.0
  %323 = vmatmul.mubr.f32.gmra.mrb[0].mxu0 %v42
  %v324 = vpop.f32.mrb[0].mxu0
  %v325 = vadd.f32 %v116, %v324
  %v326 = vpop.f32.mrb[0].mxu0
  %327 = vmatprep.mubr.f32.mxu0 0.0
  %328 = vmatmul.mubr.f32.gmra.mrb[0].mxu0 %v43
  %v329 = vpop.f32.mrb[0].mxu0
  %v330 = vadd.f32 %v116, %v329
  %v331 = vpop.f32.mrb[0].mxu0
  %332 = vmatprep.mubr.f32.mxu0 0.0
  %333 = vmatmul.mubr.f32.gmra.mrb[0].mxu0 %v44
  %v334 = vpop.f32.mrb[0].mxu0
  %v335 = vadd.f32 %v116, %v334
  %v336 = vpop.f32.mrb[0].mxu0
  %337 = vmatprep.mubr.f32.mxu0 0.0
  %338 = vmatmul.mubr.f32.gmra.mrb[0].mxu0 %v45
  %v339 = vpop.f32.mrb[0].mxu0
  %v340 = vadd.f32 %v116, %v339
  %v341 = vpop.f32.mrb[0].mxu0
  %342 = vmatprep.mubr.f32.mxu0 0.0
  %343 = vmatmul.mubr.f32.gmra.mrb[0].mxu0 %v46
  %v344 = vpop.f32.mrb[0].mxu0
  %v345 = vadd.f32 %v116, %v344
  %v346 = vpop.f32.mrb[0].mxu0
  %347 = vmatprep.mubr.f32.mxu0 0.0
  %348 = vmatmul.mubr.f32.gmra.mrb[0].mxu0 %v47
  %v349 = vpop.f32.mrb[0].mxu0
  %v350 = vadd.f32 %v116, %v349
  %v351 = vpop.f32.mrb[0].mxu0
  %352 = vmatprep.mubr.f32.mxu0 0.0
  %353 = vmatmul.mubr.f32.gmra.mrb[0].mxu0 %v48
  %v354 = vpop.f32.mrb[0].mxu0
  %v355 = vadd.f32 %v116, %v354
  %v356 = vpop.f32.mrb[0].mxu0
  %357 = vmatprep.mubr.f32.mxu0 0.0
  %358 = vmatmul.mubr.f32.gmra.mrb[0].mxu0 %v49
  %v359 = vpop.f32.mrb[0].mxu0
  %v360 = vadd.f32 %v116, %v359
  %v361 = vpop.f32.mrb[0].mxu0
  %362 = vmatprep.mubr.f32.mxu0 0.0
  %363 = vmatmul.mubr.f32.gmra.mrb[0].mxu0 %v50
  %v364 = vpop.f32.mrb[0].mxu0
  %v365 = vadd.f32 %v116, %v364
  %v366 = vpop.f32.mrb[0].mxu0
  %367 = vmatprep.mubr.f32.mxu0 0.0
  %368 = vmatmul.mubr.f32.gmra.mrb[0].mxu0 %v51
  %v369 = vpop.f32.mrb[0].mxu0
  %v370 = vadd.f32 %v116, %v369
  %v371 = vpop.f32.mrb[0].mxu0
  %372 = vmatprep.mubr.f32.mxu0 0.0
  %373 = vmatmul.mubr.f32.gmra.mrb[0].mxu0 %v52
  %v374 = vpop.f32.mrb[0].mxu0
  %v375 = vadd.f32 %v116, %v374
  %v376 = vpop.f32.mrb[0].mxu0
  %377 = vmatprep.mubr.f32.mxu0 0.0
  %378 = vmatmul.mubr.f32.gmra.mrb[0].mxu0 %v53
  %v379 = vpop.f32.mrb[0].mxu0
  %v380 = vadd.f32 %v116, %v379
  %v381 = vpop.f32.mrb[0].mxu0
  %382 = vmatprep.mubr.f32.mxu0 0.0
  %383 = vmatmul.mubr.f32.gmra.mrb[0].mxu0 %v54
  %v384 = vpop.f32.mrb[0].mxu0
  %v385 = vadd.f32 %v116, %v384
  %v386 = vpop.f32.mrb[0].mxu0
  %387 = vmatprep.mubr.f32.mxu0 0.0
  %388 = vmatmul.mubr.f32.gmra.mrb[0].mxu0 %v55
  %v389 = vpop.f32.mrb[0].mxu0
  %v390 = vadd.f32 %v116, %v389
  %v391 = vpop.f32.mrb[0].mxu0
  %392 = vmatprep.mubr.f32.mxu0 0.0
  %393 = vmatmul.mubr.f32.gmra.mrb[0].mxu0 %v56
  %v394 = vpop.f32.mrb[0].mxu0
  %v395 = vadd.f32 %v116, %v394
  %v396 = vpop.f32.mrb[0].mxu0
  %397 = vmatprep.mubr.f32.mxu0 0.0
  %398 = vmatmul.mubr.f32.gmra.mrb[0].mxu0 %v57
  %v399 = vpop.f32.mrb[0].mxu0
  %v400 = vadd.f32 %v116, %v399
  %v401 = vpop.f32.mrb[0].mxu0
  %402 = vmatprep.mubr.f32.mxu0 0.0
  %403 = vmatmul.mubr.f32.gmra.mrb[0].mxu0 %v58
  %v404 = vpop.f32.mrb[0].mxu0
  %v405 = vadd.f32 %v116, %v404
  %v406 = vpop.f32.mrb[0].mxu0
  %407 = vmatprep.mubr.f32.mxu0 0.0
  %408 = vmatmul.mubr.f32.gmra.mrb[0].mxu0 %v59
  %v409 = vpop.f32.mrb[0].mxu0
  %v410 = vadd.f32 %v116, %v409
  %v411 = vpop.f32.mrb[0].mxu0
  %412 = vmatprep.mubr.f32.mxu0 0.0
  %413 = vmatmul.mubr.f32.gmra.mrb[0].mxu0 %v60
  %v414 = vpop.f32.mrb[0].mxu0
  %v415 = vadd.f32 %v116, %v414
  %v416 = vpop.f32.mrb[0].mxu0
  %417 = vmatprep.mubr.f32.mxu0 0.0
  %418 = vmatmul.mubr.f32.gmra.mrb[0].mxu0 %v61
  %v419 = vpop.f32.mrb[0].mxu0
  %v420 = vadd.f32 %v116, %v419
  %v421 = vpop.f32.mrb[0].mxu0
  %422 = vmatprep.mubr.f32.mxu0 0.0
  %423 = vmatmul.mubr.f32.gmra.mrb[0].mxu0 %v62
  %v424 = vpop.f32.mrb[0].mxu0
  %v425 = vadd.f32 %v116, %v424
  %v426 = vpop.f32.mrb[0].mxu0
  %427 = vmatprep.mubr.f32.mxu0 0.0
  %428 = vmatmul.mubr.f32.gmra.mrb[0].mxu0 %v63
  %v429 = vpop.f32.mrb[0].mxu0
  %v430 = vadd.f32 %v116, %v429
  %v431 = vpop.f32.mrb[0].mxu0
  %432 = vmatprep.mubr.f32.mxu0 0.0
  %433 = vmatmul.mubr.f32.gmra.mrb[0].mxu0 %v64
  %v434 = vpop.f32.mrb[0].mxu0
  %v435 = vadd.f32 %v116, %v434
  %v436 = vpop.f32.mrb[0].mxu0
  %437 = vmatprep.mubr.f32.mxu0 0.0
  %438 = vmatmul.mubr.f32.gmra.mrb[0].mxu0 %v65
  %v439 = vpop.f32.mrb[0].mxu0
  %v440 = vadd.f32 %v116, %v439
  %v441 = vpop.f32.mrb[0].mxu0
  %442 = vmatprep.mubr.f32.mxu0 0.0
  %443 = vmatmul.mubr.f32.gmra.mrb[0].mxu0 %v66
  %v444 = vpop.f32.mrb[0].mxu0
  %v445 = vadd.f32 %v116, %v444
  %v446 = vpop.f32.mrb[0].mxu0
  %447 = vmatprep.mubr.f32.mxu0 0.0
  %448 = vmatmul.mubr.f32.gmra.mrb[0].mxu0 %v67
  %v449 = vpop.f32.mrb[0].mxu0
  %v450 = vadd.f32 %v116, %v449
  %v451 = vpop.f32.mrb[0].mxu0
  %452 = vmatprep.mubr.f32.mxu0 0.0
  %453 = vmatmul.mubr.f32.gmra.mrb[0].mxu0 %v68
  %v454 = vpop.f32.mrb[0].mxu0
  %v455 = vadd.f32 %v116, %v454
  %v456 = vpop.f32.mrb[0].mxu0
  %457 = vmatprep.mubr.f32.mxu0 0.0
  %458 = vmatmul.mubr.f32.gmra.mrb[0].mxu0 %v69
  %v459 = vpop.f32.mrb[0].mxu0
  %v460 = vadd.f32 %v116, %v459
  %v461 = vpop.f32.mrb[0].mxu0
  %462 = vmatprep.mubr.f32.mxu0 0.0
  %463 = vmatmul.mubr.f32.gmra.mrb[0].mxu0 %v70
  %v464 = vpop.f32.mrb[0].mxu0
  %v465 = vadd.f32 %v116, %v464
  %v466 = vpop.f32.mrb[0].mxu0
  %467 = vmatprep.mubr.f32.mxu0 0.0
  %468 = vmatmul.mubr.f32.gmra.mrb[0].mxu0 %v71
  %v469 = vpop.f32.mrb[0].mxu0
  %v470 = vadd.f32 %v116, %v469
  %v471 = vpop.f32.mrb[0].mxu0
  %472 = vmatprep.mubr.f32.mxu0 0.0
  %473 = vmatmul.mubr.f32.gmra.mrb[0].mxu0 %v72
  %v474 = vpop.f32.mrb[0].mxu0
  %v475 = vadd.f32 %v116, %v474
  %v476 = vpop.f32.mrb[0].mxu0
  %477 = vmatprep.mubr.f32.mxu0 0.0
  %478 = vmatmul.mubr.f32.gmra.mrb[0].mxu0 %v73
  %v479 = vpop.f32.mrb[0].mxu0
  %v480 = vadd.f32 %v116, %v479
  %v481 = vpop.f32.mrb[0].mxu0
  %482 = vmatprep.mubr.f32.mxu0 0.0
  %483 = vmatmul.mubr.f32.gmra.mrb[0].mxu0 %v74
  %v484 = vpop.f32.mrb[0].mxu0
  %v485 = vadd.f32 %v116, %v484
  %v486 = vpop.f32.mrb[0].mxu0
  %487 = vmatprep.mubr.f32.mxu0 0.0
  %488 = vmatmul.mubr.f32.gmra.mrb[0].mxu0 %v75
  %v489 = vpop.f32.mrb[0].mxu0
  %v490 = vadd.f32 %v116, %v489
  %v491 = vpop.f32.mrb[0].mxu0
  %492 = vmatprep.mubr.f32.mxu0 0.0
  %493 = vmatmul.mubr.f32.gmra.mrb[0].mxu0 %v76
  %v494 = vpop.f32.mrb[0].mxu0
  %v495 = vadd.f32 %v116, %v494
  %v496 = vpop.f32.mrb[0].mxu0
  %497 = vmatprep.mubr.f32.mxu0 0.0
  %498 = vmatmul.mubr.f32.gmra.mrb[0].mxu0 %v77
  %v499 = vpop.f32.mrb[0].mxu0
  %v500 = vadd.f32 %v116, %v499
  %v501 = vpop.f32.mrb[0].mxu0
  %502 = vmatprep.mubr.f32.mxu0 0.0
  %503 = vmatmul.mubr.f32.gmra.mrb[0].mxu0 %v78
  %v504 = vpop.f32.mrb[0].mxu0
  %v505 = vadd.f32 %v116, %v504
  %v506 = vpop.f32.mrb[0].mxu0
  %507 = vmatprep.mubr.f32.mxu0 0.0
  %508 = vmatmul.mubr.f32.gmra.mrb[0].mxu0 %v79
  %v509 = vpop.f32.mrb[0].mxu0
  %v510 = vadd.f32 %v116, %v509
  %v511 = vpop.f32.mrb[0].mxu0
  %512 = vmatprep.mubr.f32.mxu0 0.0
  %513 = vmatmul.mubr.f32.gmra.mrb[0].mxu0 %v80
  %v514 = vpop.f32.mrb[0].mxu0
  %v515 = vadd.f32 %v116, %v514
  %v516 = vpop.f32.mrb[0].mxu0
  %517 = vmatprep.mubr.f32.mxu0 0.0
  %518 = vmatmul.mubr.f32.gmra.mrb[0].mxu0 %v81
  %v519 = vpop.f32.mrb[0].mxu0
  %v520 = vadd.f32 %v116, %v519
  %v521 = vpop.f32.mrb[0].mxu0
  %522 = vmatprep.mubr.f32.mxu0 0.0
  %523 = vmatmul.mubr.f32.gmra.mrb[0].mxu0 %v82
  %v524 = vpop.f32.mrb[0].mxu0
  %v525 = vadd.f32 %v116, %v524
  %v526 = vpop.f32.mrb[0].mxu0
  %527 = vmatprep.mubr.f32.mxu0 0.0
  %528 = vmatmul.mubr.f32.gmra.mrb[0].mxu0 %v83
  %v529 = vpop.f32.mrb[0].mxu0
  %v530 = vadd.f32 %v116, %v529
  %v531 = vpop.f32.mrb[0].mxu0
  %532 = vmatprep.mubr.f32.mxu0 0.0
  %533 = vmatmul.mubr.f32.gmra.mrb[0].mxu0 %v84
  %v534 = vpop.f32.mrb[0].mxu0
  %v535 = vadd.f32 %v116, %v534
  %v536 = vpop.f32.mrb[0].mxu0
  %537 = vmatprep.mubr.f32.mxu0 0.0
  %538 = vmatmul.mubr.f32.gmra.mrb[0].mxu0 %v85
  %v539 = vpop.f32.mrb[0].mxu0
  %v540 = vadd.f32 %v116, %v539
  %v541 = vpop.f32.mrb[0].mxu0
  %542 = vmatprep.mubr.f32.mxu0 0.0
  %543 = vmatmul.mubr.f32.gmra.mrb[0].mxu0 %v86
  %v544 = vpop.f32.mrb[0].mxu0
  %v545 = vadd.f32 %v116, %v544
  %v546 = vpop.f32.mrb[0].mxu0
  %547 = vmatprep.mubr.f32.mxu0 0.0
  %548 = vmatmul.mubr.f32.gmra.mrb[0].mxu0 %v87
  %v549 = vpop.f32.mrb[0].mxu0
  %v550 = vadd.f32 %v116, %v549
  %v551 = vpop.f32.mrb[0].mxu0
  %552 = vmatprep.mubr.f32.mxu0 0.0
  %553 = vmatmul.mubr.f32.gmra.mrb[0].mxu0 %v88
  %v554 = vpop.f32.mrb[0].mxu0
  %v555 = vadd.f32 %v116, %v554
  %v556 = vpop.f32.mrb[0].mxu0
  %557 = vmatprep.mubr.f32.mxu0 0.0
  %558 = vmatmul.mubr.f32.gmra.mrb[0].mxu0 %v89
  %v559 = vpop.f32.mrb[0].mxu0
  %v560 = vadd.f32 %v116, %v559
  %v561 = vpop.f32.mrb[0].mxu0
  %562 = vmatprep.mubr.f32.mxu0 0.0
  %563 = vmatmul.mubr.f32.gmra.mrb[0].mxu0 %v90
  %v564 = vpop.f32.mrb[0].mxu0
  %v565 = vadd.f32 %v116, %v564
  %v566 = vpop.f32.mrb[0].mxu0
  %567 = vmatprep.mubr.f32.mxu0 0.0
  %568 = vmatmul.mubr.f32.gmra.mrb[0].mxu0 %v91
  %v569 = vpop.f32.mrb[0].mxu0
  %v570 = vadd.f32 %v116, %v569
  %v571 = vpop.f32.mrb[0].mxu0
  %572 = vmatprep.mubr.f32.mxu0 0.0
  %573 = vmatmul.mubr.f32.gmra.mrb[0].mxu0 %v92
  %v574 = vpop.f32.mrb[0].mxu0
  %v575 = vadd.f32 %v116, %v574
  %v576 = vpop.f32.mrb[0].mxu0
  %577 = vmatprep.mubr.f32.mxu0 0.0
  %578 = vmatmul.mubr.f32.gmra.mrb[0].mxu0 %v93
  %v579 = vpop.f32.mrb[0].mxu0
  %v580 = vadd.f32 %v116, %v579
  %v581 = vpop.f32.mrb[0].mxu0
  %582 = vmatprep.mubr.f32.mxu0 0.0
  %583 = vmatmul.mubr.f32.gmra.mrb[0].mxu0 %v94
  %v584 = vpop.f32.mrb[0].mxu0
  %v585 = vadd.f32 %v116, %v584
  %v586 = vpop.f32.mrb[0].mxu0
  %587 = vdwg.mxu0
  %v588 = vmax.f32 %v185, 0.0
  %v589 = vmax.f32 %v190, 0.0
  %v590 = vmax.f32 %v195, 0.0
  %v591 = vmax.f32 %v200, 0.0
  %v592 = vmax.f32 %v205, 0.0
  %v593 = vmax.f32 %v210, 0.0
  %v594 = vmax.f32 %v215, 0.0
  %v595 = vmax.f32 %v220, 0.0
  %v596 = vmax.f32 %v225, 0.0
  %v597 = vmax.f32 %v230, 0.0
  %v598 = vmax.f32 %v235, 0.0
  %v599 = vmax.f32 %v240, 0.0
  %v600 = vmax.f32 %v245, 0.0
  %v601 = vmax.f32 %v250, 0.0
  %v602 = vmax.f32 %v255, 0.0
  %v603 = vmax.f32 %v260, 0.0
  %v604 = vmax.f32 %v265, 0.0
  %v605 = vmax.f32 %v270, 0.0
  %v606 = vmax.f32 %v275, 0.0
  %v607 = vmax.f32 %v280, 0.0
  %v608 = vmax.f32 %v285, 0.0
  %v609 = vmax.f32 %v290, 0.0
  %v610 = vmax.f32 %v295, 0.0
  %v611 = vmax.f32 %v300, 0.0
  %v612 = vmax.f32 %v305, 0.0
  %v613 = vmax.f32 %v310, 0.0
  %v614 = vmax.f32 %v315, 0.0
  %v615 = vmax.f32 %v320, 0.0
  %v616 = vmax.f32 %v325, 0.0
  %v617 = vmax.f32 %v330, 0.0
  %v618 = vmax.f32 %v335, 0.0
  %v619 = vmax.f32 %v340, 0.0
  %v620 = vmax.f32 %v345, 0.0
  %v621 = vmax.f32 %v350, 0.0
  %v622 = vmax.f32 %v355, 0.0
  %v623 = vmax.f32 %v360, 0.0
  %v624 = vmax.f32 %v365, 0.0
  %v625 = vmax.f32 %v370, 0.0
  %v626 = vmax.f32 %v375, 0.0
  %v627 = vmax.f32 %v380, 0.0
  %v628 = vmax.f32 %v385, 0.0
  %v629 = vmax.f32 %v390, 0.0
  %v630 = vmax.f32 %v395, 0.0
  %v631 = vmax.f32 %v400, 0.0
  %v632 = vmax.f32 %v405, 0.0
  %v633 = vmax.f32 %v410, 0.0
  %v634 = vmax.f32 %v415, 0.0
  %v635 = vmax.f32 %v420, 0.0
  %v636 = vmax.f32 %v425, 0.0
  %v637 = vmax.f32 %v430, 0.0
  %v638 = vmax.f32 %v435, 0.0
  %v639 = vmax.f32 %v440, 0.0
  %v640 = vmax.f32 %v445, 0.0
  %v641 = vmax.f32 %v450, 0.0
  %v642 = vmax.f32 %v455, 0.0
  %v643 = vmax.f32 %v460, 0.0
  %v644 = vmax.f32 %v465, 0.0
  %v645 = vmax.f32 %v470, 0.0
  %v646 = vmax.f32 %v475, 0.0
  %v647 = vmax.f32 %v480, 0.0
  %v648 = vmax.f32 %v485, 0.0
  %v649 = vmax.f32 %v490, 0.0
  %v650 = vmax.f32 %v495, 0.0
  %v651 = vmax.f32 %v500, 0.0
  %v652 = vmax.f32 %v505, 0.0
  %v653 = vmax.f32 %v510, 0.0
  %v654 = vmax.f32 %v515, 0.0
  %v655 = vmax.f32 %v520, 0.0
  %v656 = vmax.f32 %v525, 0.0
  %v657 = vmax.f32 %v530, 0.0
  %v658 = vmax.f32 %v535, 0.0
  %v659 = vmax.f32 %v540, 0.0
  %v660 = vmax.f32 %v545, 0.0
  %v661 = vmax.f32 %v550, 0.0
  %v662 = vmax.f32 %v555, 0.0
  %v663 = vmax.f32 %v560, 0.0
  %v664 = vmax.f32 %v565, 0.0
  %v665 = vmax.f32 %v570, 0.0
  %v666 = vmax.f32 %v575, 0.0
  %v667 = vmax.f32 %v580, 0.0
  %v668 = vmax.f32 %v585, 0.0
  %669 = vst [vmem:[%s3] sm:$0xff] %v588
  %670 = vst [vmem:[%s3 + $0x8] sm:$0xff] %v589
  %671 = vst [vmem:[%s3 + $0x10] sm:$0xff] %v590
  %672 = vst [vmem:[%s3 + $0x18] sm:$0xff] %v591
  %673 = vst [vmem:[%s3 + $0x20] sm:$0xff] %v592
  %674 = vst [vmem:[%s3 + $0x28] sm:$0xff] %v593
  %675 = vst [vmem:[%s3 + $0x30] sm:$0xff] %v594
  %676 = vst [vmem:[%s3 + $0x38] sm:$0xff] %v595
  %677 = vst [vmem:[%s3 + $0x40] sm:$0xff] %v596
  %678 = vst [vmem:[%s3 + $0x48] sm:$0xff] %v597
  %679 = vst [vmem:[%s3 + $0x50] sm:$0xff] %v598
  %680 = vst [vmem:[%s3 + $0x58] sm:$0xff] %v599
  %681 = vst [vmem:[%s3 + $0x60] sm:$0xff] %v600
  %682 = vst [vmem:[%s3 + $0x68] sm:$0xff] %v601
  %683 = vst [vmem:[%s3 + $0x70] sm:$0xff] %v602
  %684 = vst [vmem:[%s3 + $0x78] sm:$0xff] %v603
  %685 = vst [vmem:[%s3 + $0x80] sm:$0xff] %v604
  %686 = vst [vmem:[%s3 + $0x88] sm:$0xff] %v605
  %687 = vst [vmem:[%s3 + $0x90] sm:$0xff] %v606
  %688 = vst [vmem:[%s3 + $0x98] sm:$0xff] %v607
  %689 = vst [vmem:[%s3 + $0xa0] sm:$0xff] %v608
  %690 = vst [vmem:[%s3 + $0xa8] sm:$0xff] %v609
  %691 = vst [vmem:[%s3 + $0xb0] sm:$0xff] %v610
  %692 = vst [vmem:[%s3 + $0xb8] sm:$0xff] %v611
  %693 = vst [vmem:[%s3 + $0xc0] sm:$0xff] %v612
  %694 = vst [vmem:[%s3 + $0xc8] sm:$0xff] %v613
  %695 = vst [vmem:[%s3 + $0xd0] sm:$0xff] %v614
  %696 = vst [vmem:[%s3 + $0xd8] sm:$0xff] %v615
  %697 = vst [vmem:[%s3 + $0xe0] sm:$0xff] %v616
  %698 = vst [vmem:[%s3 + $0xe8] sm:$0xff] %v617
  %699 = vst [vmem:[%s3 + $0xf0] sm:$0xff] %v618
  %700 = vst [vmem:[%s3 + $0xf8] sm:$0xff] %v619
  %701 = vst [vmem:[%s3 + $0x100] sm:$0xff] %v620
  %702 = vst [vmem:[%s3 + $0x108] sm:$0xff] %v621
  %703 = vst [vmem:[%s3 + $0x110] sm:$0xff] %v622
  %704 = vst [vmem:[%s3 + $0x118] sm:$0xff] %v623
  %705 = vst [vmem:[%s3 + $0x120] sm:$0xff] %v624
  %706 = vst [vmem:[%s3 + $0x128] sm:$0xff] %v625
  %707 = vst [vmem:[%s3 + $0x130] sm:$0xff] %v626
  %708 = vst [vmem:[%s3 + $0x138] sm:$0xff] %v627
  %709 = vst [vmem:[%s3 + $0x140] sm:$0xff] %v628
  %710 = vst [vmem:[%s3 + $0x148] sm:$0xff] %v629
  %711 = vst [vmem:[%s3 + $0x150] sm:$0xff] %v630
  %712 = vst [vmem:[%s3 + $0x158] sm:$0xff] %v631
  %713 = vst [vmem:[%s3 + $0x160] sm:$0xff] %v632
  %714 = vst [vmem:[%s3 + $0x168] sm:$0xff] %v633
  %715 = vst [vmem:[%s3 + $0x170] sm:$0xff] %v634
  %716 = vst [vmem:[%s3 + $0x178] sm:$0xff] %v635
  %717 = vst [vmem:[%s3 + $0x180] sm:$0xff] %v636
  %718 = vst [vmem:[%s3 + $0x188] sm:$0xff] %v637
  %719 = vst [vmem:[%s3 + $0x190] sm:$0xff] %v638
  %720 = vst [vmem:[%s3 + $0x198] sm:$0xff] %v639
  %721 = vst [vmem:[%s3 + $0x1a0] sm:$0xff] %v640
  %722 = vst [vmem:[%s3 + $0x1a8] sm:$0xff] %v641
  %723 = vst [vmem:[%s3 + $0x1b0] sm:$0xff] %v642
  %724 = vst [vmem:[%s3 + $0x1b8] sm:$0xff] %v643
  %725 = vst [vmem:[%s3 + $0x1c0] sm:$0xff] %v644
  %726 = vst [vmem:[%s3 + $0x1c8] sm:$0xff] %v645
  %727 = vst [vmem:[%s3 + $0x1d0] sm:$0xff] %v646
  %728 = vst [vmem:[%s3 + $0x1d8] sm:$0xff] %v647
  %729 = vst [vmem:[%s3 + $0x1e0] sm:$0xff] %v648
  %730 = vst [vmem:[%s3 + $0x1e8] sm:$0xff] %v649
  %731 = vst [vmem:[%s3 + $0x1f0] sm:$0xff] %v650
  %732 = vst [vmem:[%s3 + $0x1f8] sm:$0xff] %v651
  %733 = vst [vmem:[%s3 + $0x200] sm:$0xff] %v652
  %734 = vst [vmem:[%s3 + $0x208] sm:$0xff] %v653
  %735 = vst [vmem:[%s3 + $0x210] sm:$0xff] %v654
  %736 = vst [vmem:[%s3 + $0x218] sm:$0xff] %v655
  %737 = vst [vmem:[%s3 + $0x220] sm:$0xff] %v656
  %738 = vst [vmem:[%s3 + $0x228] sm:$0xff] %v657
  %739 = vst [vmem:[%s3 + $0x230] sm:$0xff] %v658
  %740 = vst [vmem:[%s3 + $0x238] sm:$0xff] %v659
  %741 = vst [vmem:[%s3 + $0x240] sm:$0xff] %v660
  %742 = vst [vmem:[%s3 + $0x248] sm:$0xff] %v661
  %743 = vst [vmem:[%s3 + $0x250] sm:$0xff] %v662
  %744 = vst [vmem:[%s3 + $0x258] sm:$0xff] %v663
  %745 = vst [vmem:[%s3 + $0x260] sm:$0xff] %v664
  %746 = vst [vmem:[%s3 + $0x268] sm:$0xff] %v665
  %747 = vst [vmem:[%s3 + $0x270] sm:$0xff] %v666
  %748 = vst [vmem:[%s3 + $0x278] sm:$0xff] %v667
  %749 = vst [vmem:[%s3 + $0x280] sm:$0xff] %v668
  // Predicated region
  $region14: #{actor_critic_forward.3} parent=0 // pred_check
    _
  $region15: #{actor_critic_forward.3} parent=0 // pred_check_branch
    %751 = sbr.rel (0) target = $region17
  $region16: #{actor_critic_forward.3} parent=0 // pred_region
    _
  $region17: #{actor_critic_forward.3} parent=0 // pred_fallthru
    _
  // Predicated region
  $region18: #{actor_critic_forward.3} parent=0 // pred_check
    _
  $region19: #{actor_critic_forward.3} parent=0 // pred_check_branch
    %753 = sbr.rel (0) target = $region21
  $region20: #{actor_critic_forward.3} parent=0 // pred_region
    _
  $region21: #{actor_critic_forward.3} parent=0 // pred_fallthru
    _

// kernel: actor_critic_forward.4
$region0: #{actor_critic_forward.4}
  #allocation0 [shape = 'u32[]', space=smem, size = 0x4, offset = 0x4, fixed_abs, tag = 'smem constant byte address 0x4 - core index']
  #allocation1 [shape = 'u32[144,128]{1,0:T(1,128)}', space=vmem, size = 0x12000, scoped, tag = 'internal scratch']
  %s0 = inlined_call_operand.vmem [shape: f32[98,512], index: 0, kind: input, shape index: {}]
  %s1 = inlined_call_operand.vmem [shape: f32[512,128], index: 1, kind: input, shape index: {}]
  %s2 = inlined_call_operand.vmem [shape: f32[1,128], index: 2, kind: input, shape index: {}]
  %s3 = inlined_call_operand.vmem [shape: f32[98,128], index: 3, kind: output, shape index: {}]
  %s4 = sld [smem:[#allocation0]]
  $region22: #{actor_critic_forward.4} parent=0
    _
  %s6 = ssub.s32 1, %s4
  %s7 = scalar_select 0, %s6, %s4
  // Predicated region
  $region2: #{actor_critic_forward.4} parent=0 // pred_check
    _
  $region3: #{actor_critic_forward.4} parent=0 // pred_check_branch
    %9 = sbr.rel (0) target = $region5
  $region4: #{actor_critic_forward.4} parent=0 // pred_region
    _
  $region5: #{actor_critic_forward.4} parent=0 // pred_fallthru
    _
  // Predicated region
  $region6: #{actor_critic_forward.4} parent=0 // pred_check
    _
  $region7: #{actor_critic_forward.4} parent=0 // pred_check_branch
    %11 = sbr.rel (0) target = $region9
  $region8: #{actor_critic_forward.4} parent=0 // pred_region
    _
  $region9: #{actor_critic_forward.4} parent=0 // pred_fallthru
    _
  // Predicated region
  $region10: #{actor_critic_forward.4} parent=0 // pred_check
    _
  $region11: #{actor_critic_forward.4} parent=0 // pred_check_branch
    %13 = sbr.rel (0) target = $region13
  $region12: #{actor_critic_forward.4} parent=0 // pred_region
    _
  $region13: #{actor_critic_forward.4} parent=0 // pred_fallthru
    _
  %v14 = vld [vmem:[%s0] sm:$0xff]
  %v15 = vld [vmem:[%s0 + $0x8] sm:$0xff]
  %v16 = vld [vmem:[%s0 + $0x10] sm:$0xff]
  %v17 = vld [vmem:[%s0 + $0x18] sm:$0xff]
  %v18 = vld [vmem:[%s0 + $0x20] sm:$0xff]
  %v19 = vld [vmem:[%s0 + $0x28] sm:$0xff]
  %v20 = vld [vmem:[%s0 + $0x30] sm:$0xff]
  %v21 = vld [vmem:[%s0 + $0x38] sm:$0xff]
  %v22 = vld [vmem:[%s0 + $0x40] sm:$0xff]
  %v23 = vld [vmem:[%s0 + $0x48] sm:$0xff]
  %v24 = vld [vmem:[%s0 + $0x50] sm:$0xff]
  %v25 = vld [vmem:[%s0 + $0x58] sm:$0xff]
  %v26 = vld [vmem:[%s0 + $0x60] sm:$0xff]
  %v27 = vld [vmem:[%s0 + $0x68] sm:$0xff]
  %v28 = vld [vmem:[%s0 + $0x70] sm:$0xff]
  %v29 = vld [vmem:[%s0 + $0x78] sm:$0xff]
  %v30 = vld [vmem:[%s0 + $0x80] sm:$0xff]
  %v31 = vld [vmem:[%s0 + $0x88] sm:$0xff]
  %v32 = vld [vmem:[%s0 + $0x90] sm:$0xff]
  %v33 = vld [vmem:[%s0 + $0x98] sm:$0xff]
  %v34 = vld [vmem:[%s0 + $0xa0] sm:$0xff]
  %v35 = vld [vmem:[%s0 + $0xa8] sm:$0xff]
  %v36 = vld [vmem:[%s0 + $0xb0] sm:$0xff]
  %v37 = vld [vmem:[%s0 + $0xb8] sm:$0xff]
  %v38 = vld [vmem:[%s0 + $0xc0] sm:$0xff]
  %v39 = vld [vmem:[%s0 + $0xc8] sm:$0xff]
  %v40 = vld [vmem:[%s0 + $0xd0] sm:$0xff]
  %v41 = vld [vmem:[%s0 + $0xd8] sm:$0xff]
  %v42 = vld [vmem:[%s0 + $0xe0] sm:$0xff]
  %v43 = vld [vmem:[%s0 + $0xe8] sm:$0xff]
  %v44 = vld [vmem:[%s0 + $0xf0] sm:$0xff]
  %v45 = vld [vmem:[%s0 + $0xf8] sm:$0xff]
  %v46 = vld [vmem:[%s0 + $0x100] sm:$0xff]
  %v47 = vld [vmem:[%s0 + $0x108] sm:$0xff]
  %v48 = vld [vmem:[%s0 + $0x110] sm:$0xff]
  %v49 = vld [vmem:[%s0 + $0x118] sm:$0xff]
  %v50 = vld [vmem:[%s0 + $0x120] sm:$0xff]
  %v51 = vld [vmem:[%s0 + $0x128] sm:$0xff]
  %v52 = vld [vmem:[%s0 + $0x130] sm:$0xff]
  %v53 = vld [vmem:[%s0 + $0x138] sm:$0xff]
  %v54 = vld [vmem:[%s0 + $0x140] sm:$0xff]
  %v55 = vld [vmem:[%s0 + $0x148] sm:$0xff]
  %v56 = vld [vmem:[%s0 + $0x150] sm:$0xff]
  %v57 = vld [vmem:[%s0 + $0x158] sm:$0xff]
  %v58 = vld [vmem:[%s0 + $0x160] sm:$0xff]
  %v59 = vld [vmem:[%s0 + $0x168] sm:$0xff]
  %v60 = vld [vmem:[%s0 + $0x170] sm:$0xff]
  %v61 = vld [vmem:[%s0 + $0x178] sm:$0xff]
  %v62 = vld [vmem:[%s0 + $0x180] sm:$0x3]
  %v63 = vld [vmem:[%s0 + $0x188] sm:$0x3]
  %v64 = vld [vmem:[%s0 + $0x190] sm:$0x3]
  %v65 = vld [vmem:[%s0 + $0x198] sm:$0x3]
  %v66 = vld [vmem:[%s1] sm:$0xff]
  %v67 = vld [vmem:[%s1 + $0x8] sm:$0xff]
  %v68 = vld [vmem:[%s1 + $0x10] sm:$0xff]
  %v69 = vld [vmem:[%s1 + $0x18] sm:$0xff]
  %v70 = vld [vmem:[%s1 + $0x20] sm:$0xff]
  %v71 = vld [vmem:[%s1 + $0x28] sm:$0xff]
  %v72 = vld [vmem:[%s1 + $0x30] sm:$0xff]
  %v73 = vld [vmem:[%s1 + $0x38] sm:$0xff]
  %v74 = vld [vmem:[%s1 + $0x40] sm:$0xff]
  %v75 = vld [vmem:[%s1 + $0x48] sm:$0xff]
  %v76 = vld [vmem:[%s1 + $0x50] sm:$0xff]
  %v77 = vld [vmem:[%s1 + $0x58] sm:$0xff]
  %v78 = vld [vmem:[%s1 + $0x60] sm:$0xff]
  %v79 = vld [vmem:[%s1 + $0x68] sm:$0xff]
  %v80 = vld [vmem:[%s1 + $0x70] sm:$0xff]
  %v81 = vld [vmem:[%s1 + $0x78] sm:$0xff]
  %v82 = vld [vmem:[%s1 + $0x80] sm:$0xff]
  %v83 = vld [vmem:[%s1 + $0x88] sm:$0xff]
  %v84 = vld [vmem:[%s1 + $0x90] sm:$0xff]
  %v85 = vld [vmem:[%s1 + $0x98] sm:$0xff]
  %v86 = vld [vmem:[%s1 + $0xa0] sm:$0xff]
  %v87 = vld [vmem:[%s1 + $0xa8] sm:$0xff]
  %v88 = vld [vmem:[%s1 + $0xb0] sm:$0xff]
  %v89 = vld [vmem:[%s1 + $0xb8] sm:$0xff]
  %v90 = vld [vmem:[%s1 + $0xc0] sm:$0xff]
  %v91 = vld [vmem:[%s1 + $0xc8] sm:$0xff]
  %v92 = vld [vmem:[%s1 + $0xd0] sm:$0xff]
  %v93 = vld [vmem:[%s1 + $0xd8] sm:$0xff]
  %v94 = vld [vmem:[%s1 + $0xe0] sm:$0xff]
  %v95 = vld [vmem:[%s1 + $0xe8] sm:$0xff]
  %v96 = vld [vmem:[%s1 + $0xf0] sm:$0xff]
  %v97 = vld [vmem:[%s1 + $0xf8] sm:$0xff]
  %v98 = vld [vmem:[%s1 + $0x100] sm:$0xff]
  %v99 = vld [vmem:[%s1 + $0x108] sm:$0xff]
  %v100 = vld [vmem:[%s1 + $0x110] sm:$0xff]
  %v101 = vld [vmem:[%s1 + $0x118] sm:$0xff]
  %v102 = vld [vmem:[%s1 + $0x120] sm:$0xff]
  %v103 = vld [vmem:[%s1 + $0x128] sm:$0xff]
  %v104 = vld [vmem:[%s1 + $0x130] sm:$0xff]
  %v105 = vld [vmem:[%s1 + $0x138] sm:$0xff]
  %v106 = vld [vmem:[%s1 + $0x140] sm:$0xff]
  %v107 = vld [vmem:[%s1 + $0x148] sm:$0xff]
  %v108 = vld [vmem:[%s1 + $0x150] sm:$0xff]
  %v109 = vld [vmem:[%s1 + $0x158] sm:$0xff]
  %v110 = vld [vmem:[%s1 + $0x160] sm:$0xff]
  %v111 = vld [vmem:[%s1 + $0x168] sm:$0xff]
  %v112 = vld [vmem:[%s1 + $0x170] sm:$0xff]
  %v113 = vld [vmem:[%s1 + $0x178] sm:$0xff]
  %v114 = vld [vmem:[%s1 + $0x180] sm:$0xff]
  %v115 = vld [vmem:[%s1 + $0x188] sm:$0xff]
  %v116 = vld [vmem:[%s1 + $0x190] sm:$0xff]
  %v117 = vld [vmem:[%s1 + $0x198] sm:$0xff]
  %v118 = vld [vmem:[%s1 + $0x1a0] sm:$0xff]
  %v119 = vld [vmem:[%s1 + $0x1a8] sm:$0xff]
  %v120 = vld [vmem:[%s1 + $0x1b0] sm:$0xff]
  %v121 = vld [vmem:[%s1 + $0x1b8] sm:$0xff]
  %v122 = vld [vmem:[%s1 + $0x1c0] sm:$0xff]
  %v123 = vld [vmem:[%s1 + $0x1c8] sm:$0xff]
  %v124 = vld [vmem:[%s1 + $0x1d0] sm:$0xff]
  %v125 = vld [vmem:[%s1 + $0x1d8] sm:$0xff]
  %v126 = vld [vmem:[%s1 + $0x1e0] sm:$0xff]
  %v127 = vld [vmem:[%s1 + $0x1e8] sm:$0xff]
  %v128 = vld [vmem:[%s1 + $0x1f0] sm:$0xff]
  %v129 = vld [vmem:[%s1 + $0x1f8] sm:$0xff]
  %v130 = vld [vmem:[%s2] sm:$0x1]
  %v132 = vlaneseq
  %v133 = vshrl.u32 %v132, 7
  %v134 = vsub.s32 0, %v133
  %v135 = vrot.slane %v130, %v134
  %137 = vmatprep.subr.mxu0 0.0
  %138 = vmatpush1.msra.mxu0 %v66
  %139 = vmatprep.subr.mxu0 0.0
  %140 = vmatpush1.msra.mxu0 %v67
  %141 = vmatprep.subr.mxu0 0.0
  %142 = vmatpush1.msra.mxu0 %v68
  %143 = vmatprep.subr.mxu0 0.0
  %144 = vmatpush1.msra.mxu0 %v69
  %145 = vmatprep.subr.mxu0 0.0
  %146 = vmatpush1.msra.mxu0 %v70
  %147 = vmatprep.subr.mxu0 0.0
  %148 = vmatpush1.msra.mxu0 %v71
  %149 = vmatprep.subr.mxu0 0.0
  %150 = vmatpush1.msra.mxu0 %v72
  %151 = vmatprep.subr.mxu0 0.0
  %152 = vmatpush1.msra.mxu0 %v73
  %153 = vmatprep.subr.mxu0 0.0
  %154 = vmatpush1.msra.mxu0 %v74
  %155 = vmatprep.subr.mxu0 0.0
  %156 = vmatpush1.msra.mxu0 %v75
  %157 = vmatprep.subr.mxu0 0.0
  %158 = vmatpush1.msra.mxu0 %v76
  %159 = vmatprep.subr.mxu0 0.0
  %160 = vmatpush1.msra.mxu0 %v77
  %161 = vmatprep.subr.mxu0 0.0
  %162 = vmatpush1.msra.mxu0 %v78
  %163 = vmatprep.subr.mxu0 0.0
  %164 = vmatpush1.msra.mxu0 %v79
  %165 = vmatprep.subr.mxu0 0.0
  %166 = vmatpush1.msra.mxu0 %v80
  %167 = vmatprep.subr.mxu0 0.0
  %168 = vmatpush1.msra.mxu0 %v81
  %169 = vmatprep.subr.mxu0 0.0
  %170 = vmatpush1.msra.mxu0 %v82
  %171 = vmatprep.subr.mxu0 0.0
  %172 = vmatpush1.msra.mxu0 %v83
  %173 = vmatprep.subr.mxu0 0.0
  %174 = vmatpush1.msra.mxu0 %v84
  %175 = vmatprep.subr.mxu0 0.0
  %176 = vmatpush1.msra.mxu0 %v85
  %177 = vmatprep.subr.mxu0 0.0
  %178 = vmatpush1.msra.mxu0 %v86
  %179 = vmatprep.subr.mxu0 0.0
  %180 = vmatpush1.msra.mxu0 %v87
  %181 = vmatprep.subr.mxu0 0.0
  %182 = vmatpush1.msra.mxu0 %v88
  %183 = vmatprep.subr.mxu0 0.0
  %184 = vmatpush1.msra.mxu0 %v89
  %185 = vmatprep.subr.mxu0 0.0
  %186 = vmatpush1.msra.mxu0 %v90
  %187 = vmatprep.subr.mxu0 0.0
  %188 = vmatpush1.msra.mxu0 %v91
  %189 = vmatprep.subr.mxu0 0.0
  %190 = vmatpush1.msra.mxu0 %v92
  %191 = vmatprep.subr.mxu0 0.0
  %192 = vmatpush1.msra.mxu0 %v93
  %193 = vmatprep.subr.mxu0 0.0
  %194 = vmatpush1.msra.mxu0 %v94
  %195 = vmatprep.subr.mxu0 0.0
  %196 = vmatpush1.msra.mxu0 %v95
  %197 = vmatprep.subr.mxu0 0.0
  %198 = vmatpush1.msra.mxu0 %v96
  %199 = vmatprep.subr.mxu0 0.0
  %200 = vmatpush1.msra.mxu0 %v97
  %201 = vmatprep.mubr.f32.mxu0 %v15
  %202 = vmatmul.mubr.f32.gmra.mrb[0].mxu0 %v14
  %v203 = vpop.f32.mrb[0].mxu0
  %v204 = vadd.f32 %v135, %v203
  %v205 = vpop.f32.mrb[0].mxu0
  %206 = vmatprep.mubr.f32.mxu0 %v19
  %207 = vmatmul.mubr.f32.gmra.mrb[0].mxu0 %v18
  %v208 = vpop.f32.mrb[0].mxu0
  %v209 = vadd.f32 %v135, %v208
  %v210 = vpop.f32.mrb[0].mxu0
  %211 = vmatprep.mubr.f32.mxu0 %v23
  %212 = vmatmul.mubr.f32.gmra.mrb[0].mxu0 %v22
  %v213 = vpop.f32.mrb[0].mxu0
  %v214 = vadd.f32 %v135, %v213
  %v215 = vpop.f32.mrb[0].mxu0
  %216 = vmatprep.mubr.f32.mxu0 %v27
  %217 = vmatmul.mubr.f32.gmra.mrb[0].mxu0 %v26
  %v218 = vpop.f32.mrb[0].mxu0
  %v219 = vadd.f32 %v135, %v218
  %v220 = vpop.f32.mrb[0].mxu0
  %221 = vmatprep.mubr.f32.mxu0 %v31
  %222 = vmatmul.mubr.f32.gmra.mrb[0].mxu0 %v30
  %v223 = vpop.f32.mrb[0].mxu0
  %v224 = vadd.f32 %v135, %v223
  %v225 = vpop.f32.mrb[0].mxu0
  %226 = vmatprep.mubr.f32.mxu0 %v35
  %227 = vmatmul.mubr.f32.gmra.mrb[0].mxu0 %v34
  %v228 = vpop.f32.mrb[0].mxu0
  %v229 = vadd.f32 %v135, %v228
  %v230 = vpop.f32.mrb[0].mxu0
  %231 = vmatprep.mubr.f32.mxu0 %v39
  %232 = vmatmul.mubr.f32.gmra.mrb[0].mxu0 %v38
  %v233 = vpop.f32.mrb[0].mxu0
  %v234 = vadd.f32 %v135, %v233
  %v235 = vpop.f32.mrb[0].mxu0
  %236 = vmatprep.mubr.f32.mxu0 %v43
  %237 = vmatmul.mubr.f32.gmra.mrb[0].mxu0 %v42
  %v238 = vpop.f32.mrb[0].mxu0
  %v239 = vadd.f32 %v135, %v238
  %v240 = vpop.f32.mrb[0].mxu0
  %241 = vmatprep.mubr.f32.mxu0 %v47
  %242 = vmatmul.mubr.f32.gmra.mrb[0].mxu0 %v46
  %v243 = vpop.f32.mrb[0].mxu0
  %v244 = vadd.f32 %v135, %v243
  %v245 = vpop.f32.mrb[0].mxu0
  %246 = vmatprep.mubr.f32.mxu0 %v51
  %247 = vmatmul.mubr.f32.gmra.mrb[0].mxu0 %v50
  %v248 = vpop.f32.mrb[0].mxu0
  %v249 = vadd.f32 %v135, %v248
  %v250 = vpop.f32.mrb[0].mxu0
  %251 = vmatprep.mubr.f32.mxu0 %v55
  %252 = vmatmul.mubr.f32.gmra.mrb[0].mxu0 %v54
  %v253 = vpop.f32.mrb[0].mxu0
  %v254 = vadd.f32 %v135, %v253
  %v255 = vpop.f32.mrb[0].mxu0
  %256 = vmatprep.mubr.f32.mxu0 %v59
  %257 = vmatmul.mubr.f32.gmra.mrb[0].mxu0 %v58
  %v258 = vpop.f32.mrb[0].mxu0
  %v259 = vadd.f32 %v135, %v258
  %v260 = vpop.f32.mrb[0].mxu0
  %261 = vmatprep.mubr.f32.mxu0 %v63
  %262 = vmatmul.mubr.f32.gmra.mrb[0].mxu0 %v62
  %v263 = vpop.f32.mrb[0].mxu0
  %v264 = vadd.f32 %v135, %v263
  %v265 = vpop.f32.mrb[0].mxu0
  %266 = vdwg.mxu0
  %267 = vmatprep.subr.mxu0 0.0
  %268 = vmatpush1.msra.mxu0 %v98
  %269 = vmatprep.subr.mxu0 0.0
  %270 = vmatpush1.msra.mxu0 %v99
  %271 = vmatprep.subr.mxu0 0.0
  %272 = vmatpush1.msra.mxu0 %v100
  %273 = vmatprep.subr.mxu0 0.0
  %274 = vmatpush1.msra.mxu0 %v101
  %275 = vmatprep.subr.mxu0 0.0
  %276 = vmatpush1.msra.mxu0 %v102
  %277 = vmatprep.subr.mxu0 0.0
  %278 = vmatpush1.msra.mxu0 %v103
  %279 = vmatprep.subr.mxu0 0.0
  %280 = vmatpush1.msra.mxu0 %v104
  %281 = vmatprep.subr.mxu0 0.0
  %282 = vmatpush1.msra.mxu0 %v105
  %283 = vmatprep.subr.mxu0 0.0
  %284 = vmatpush1.msra.mxu0 %v106
  %285 = vmatprep.subr.mxu0 0.0
  %286 = vmatpush1.msra.mxu0 %v107
  %287 = vmatprep.subr.mxu0 0.0
  %288 = vmatpush1.msra.mxu0 %v108
  %289 = vmatprep.subr.mxu0 0.0
  %290 = vmatpush1.msra.mxu0 %v109
  %291 = vmatprep.subr.mxu0 0.0
  %292 = vmatpush1.msra.mxu0 %v110
  %293 = vmatprep.subr.mxu0 0.0
  %294 = vmatpush1.msra.mxu0 %v111
  %295 = vmatprep.subr.mxu0 0.0
  %296 = vmatpush1.msra.mxu0 %v112
  %297 = vmatprep.subr.mxu0 0.0
  %298 = vmatpush1.msra.mxu0 %v113
  %299 = vmatprep.subr.mxu0 0.0
  %300 = vmatpush1.msra.mxu0 %v114
  %301 = vmatprep.subr.mxu0 0.0
  %302 = vmatpush1.msra.mxu0 %v115
  %303 = vmatprep.subr.mxu0 0.0
  %304 = vmatpush1.msra.mxu0 %v116
  %305 = vmatprep.subr.mxu0 0.0
  %306 = vmatpush1.msra.mxu0 %v117
  %307 = vmatprep.subr.mxu0 0.0
  %308 = vmatpush1.msra.mxu0 %v118
  %309 = vmatprep.subr.mxu0 0.0
  %310 = vmatpush1.msra.mxu0 %v119
  %311 = vmatprep.subr.mxu0 0.0
  %312 = vmatpush1.msra.mxu0 %v120
  %313 = vmatprep.subr.mxu0 0.0
  %314 = vmatpush1.msra.mxu0 %v121
  %315 = vmatprep.subr.mxu0 0.0
  %316 = vmatpush1.msra.mxu0 %v122
  %317 = vmatprep.subr.mxu0 0.0
  %318 = vmatpush1.msra.mxu0 %v123
  %319 = vmatprep.subr.mxu0 0.0
  %320 = vmatpush1.msra.mxu0 %v124
  %321 = vmatprep.subr.mxu0 0.0
  %322 = vmatpush1.msra.mxu0 %v125
  %323 = vmatprep.subr.mxu0 0.0
  %324 = vmatpush1.msra.mxu0 %v126
  %325 = vmatprep.subr.mxu0 0.0
  %326 = vmatpush1.msra.mxu0 %v127
  %327 = vmatprep.subr.mxu0 0.0
  %328 = vmatpush1.msra.mxu0 %v128
  %329 = vmatprep.subr.mxu0 0.0
  %330 = vmatpush1.msra.mxu0 %v129
  %331 = vmatprep.mubr.f32.mxu0 %v17
  %332 = vmatmul.mubr.f32.gmra.mrb[0].mxu0 %v16
  %v333 = vpop.f32.mrb[0].mxu0
  %v334 = vadd.f32 %v204, %v333
  %v335 = vpop.f32.mrb[0].mxu0
  %336 = vmatprep.mubr.f32.mxu0 %v21
  %337 = vmatmul.mubr.f32.gmra.mrb[0].mxu0 %v20
  %v338 = vpop.f32.mrb[0].mxu0
  %v339 = vadd.f32 %v209, %v338
  %v340 = vpop.f32.mrb[0].mxu0
  %341 = vmatprep.mubr.f32.mxu0 %v25
  %342 = vmatmul.mubr.f32.gmra.mrb[0].mxu0 %v24
  %v343 = vpop.f32.mrb[0].mxu0
  %v344 = vadd.f32 %v214, %v343
  %v345 = vpop.f32.mrb[0].mxu0
  %346 = vmatprep.mubr.f32.mxu0 %v29
  %347 = vmatmul.mubr.f32.gmra.mrb[0].mxu0 %v28
  %v348 = vpop.f32.mrb[0].mxu0
  %v349 = vadd.f32 %v219, %v348
  %v350 = vpop.f32.mrb[0].mxu0
  %351 = vmatprep.mubr.f32.mxu0 %v33
  %352 = vmatmul.mubr.f32.gmra.mrb[0].mxu0 %v32
  %v353 = vpop.f32.mrb[0].mxu0
  %v354 = vadd.f32 %v224, %v353
  %v355 = vpop.f32.mrb[0].mxu0
  %356 = vmatprep.mubr.f32.mxu0 %v37
  %357 = vmatmul.mubr.f32.gmra.mrb[0].mxu0 %v36
  %v358 = vpop.f32.mrb[0].mxu0
  %v359 = vadd.f32 %v229, %v358
  %v360 = vpop.f32.mrb[0].mxu0
  %361 = vmatprep.mubr.f32.mxu0 %v41
  %362 = vmatmul.mubr.f32.gmra.mrb[0].mxu0 %v40
  %v363 = vpop.f32.mrb[0].mxu0
  %v364 = vadd.f32 %v234, %v363
  %v365 = vpop.f32.mrb[0].mxu0
  %366 = vmatprep.mubr.f32.mxu0 %v45
  %367 = vmatmul.mubr.f32.gmra.mrb[0].mxu0 %v44
  %v368 = vpop.f32.mrb[0].mxu0
  %v369 = vadd.f32 %v239, %v368
  %v370 = vpop.f32.mrb[0].mxu0
  %371 = vmatprep.mubr.f32.mxu0 %v49
  %372 = vmatmul.mubr.f32.gmra.mrb[0].mxu0 %v48
  %v373 = vpop.f32.mrb[0].mxu0
  %v374 = vadd.f32 %v244, %v373
  %v375 = vpop.f32.mrb[0].mxu0
  %376 = vmatprep.mubr.f32.mxu0 %v53
  %377 = vmatmul.mubr.f32.gmra.mrb[0].mxu0 %v52
  %v378 = vpop.f32.mrb[0].mxu0
  %v379 = vadd.f32 %v249, %v378
  %v380 = vpop.f32.mrb[0].mxu0
  %381 = vmatprep.mubr.f32.mxu0 %v57
  %382 = vmatmul.mubr.f32.gmra.mrb[0].mxu0 %v56
  %v383 = vpop.f32.mrb[0].mxu0
  %v384 = vadd.f32 %v254, %v383
  %v385 = vpop.f32.mrb[0].mxu0
  %386 = vmatprep.mubr.f32.mxu0 %v61
  %387 = vmatmul.mubr.f32.gmra.mrb[0].mxu0 %v60
  %v388 = vpop.f32.mrb[0].mxu0
  %v389 = vadd.f32 %v259, %v388
  %v390 = vpop.f32.mrb[0].mxu0
  %391 = vmatprep.mubr.f32.mxu0 %v65
  %392 = vmatmul.mubr.f32.gmra.mrb[0].mxu0 %v64
  %v393 = vpop.f32.mrb[0].mxu0
  %v394 = vadd.f32 %v264, %v393
  %v395 = vpop.f32.mrb[0].mxu0
  %396 = vdwg.mxu0
  %v397 = vmax.f32 %v334, 0.0
  %v398 = vmax.f32 %v339, 0.0
  %v399 = vmax.f32 %v344, 0.0
  %v400 = vmax.f32 %v349, 0.0
  %v401 = vmax.f32 %v354, 0.0
  %v402 = vmax.f32 %v359, 0.0
  %v403 = vmax.f32 %v364, 0.0
  %v404 = vmax.f32 %v369, 0.0
  %v405 = vmax.f32 %v374, 0.0
  %v406 = vmax.f32 %v379, 0.0
  %v407 = vmax.f32 %v384, 0.0
  %v408 = vmax.f32 %v389, 0.0
  %v409 = vmax.f32 %v394, 0.0
  %410 = vst [vmem:[%s3] sm:$0xff] %v397
  %411 = vst [vmem:[%s3 + $0x8] sm:$0xff] %v398
  %412 = vst [vmem:[%s3 + $0x10] sm:$0xff] %v399
  %413 = vst [vmem:[%s3 + $0x18] sm:$0xff] %v400
  %414 = vst [vmem:[%s3 + $0x20] sm:$0xff] %v401
  %415 = vst [vmem:[%s3 + $0x28] sm:$0xff] %v402
  %416 = vst [vmem:[%s3 + $0x30] sm:$0xff] %v403
  %417 = vst [vmem:[%s3 + $0x38] sm:$0xff] %v404
  %418 = vst [vmem:[%s3 + $0x40] sm:$0xff] %v405
  %419 = vst [vmem:[%s3 + $0x48] sm:$0xff] %v406
  %420 = vst [vmem:[%s3 + $0x50] sm:$0xff] %v407
  %421 = vst [vmem:[%s3 + $0x58] sm:$0xff] %v408
  %422 = vst [vmem:[%s3 + $0x60] sm:$0x3] %v409
  // Predicated region
  $region14: #{actor_critic_forward.4} parent=0 // pred_check
    _
  $region15: #{actor_critic_forward.4} parent=0 // pred_check_branch
    %424 = sbr.rel (0) target = $region17
  $region16: #{actor_critic_forward.4} parent=0 // pred_region
    _
  $region17: #{actor_critic_forward.4} parent=0 // pred_fallthru
    _
  // Predicated region
  $region18: #{actor_critic_forward.4} parent=0 // pred_check
    _
  $region19: #{actor_critic_forward.4} parent=0 // pred_check_branch
    %426 = sbr.rel (0) target = $region21
  $region20: #{actor_critic_forward.4} parent=0 // pred_region
    _
  $region21: #{actor_critic_forward.4} parent=0 // pred_fallthru
    _

// kernel: actor_critic_forward.5
$region0: #{actor_critic_forward.5}
  #allocation0 [shape = 'u32[]', space=smem, size = 0x4, offset = 0x4, fixed_abs, tag = 'smem constant byte address 0x4 - core index']
  #allocation1 [shape = 'u32[144,128]{1,0:T(1,128)}', space=vmem, size = 0x12000, scoped, tag = 'internal scratch']
  %s0 = inlined_call_operand.vmem [shape: f32[8,896], index: 0, kind: input, shape index: {}]
  %s1 = inlined_call_operand.vmem [shape: f32[896,128], index: 1, kind: input, shape index: {}]
  %s2 = inlined_call_operand.vmem [shape: f32[1,128], index: 2, kind: input, shape index: {}]
  %s3 = inlined_call_operand.vmem [shape: f32[4,128,64], index: 3, kind: input, shape index: {}]
  %s4 = inlined_call_operand.vmem [shape: f32[1,64], index: 4, kind: input, shape index: {}]
  %s5 = inlined_call_operand.vmem [shape: f32[64,32], index: 5, kind: input, shape index: {}]
  %s6 = inlined_call_operand.vmem [shape: f32[1,32], index: 6, kind: input, shape index: {}]
  %s7 = inlined_call_operand.vmem [shape: f32[32,128], index: 7, kind: input, shape index: {}]
  %s8 = inlined_call_operand.vmem [shape: f32[1,128], index: 8, kind: input, shape index: {}]
  %s9 = inlined_call_operand.vmem [shape: f32[2,128], index: 9, kind: output, shape index: {}]
  %s10 = sld [smem:[#allocation0]]
  $region46: #{actor_critic_forward.5} parent=0
    _
  %s12 = ssub.s32 1, %s10
  %s13 = scalar_select 0, %s12, %s10
  // Predicated region
  $region2: #{actor_critic_forward.5} parent=0 // pred_check
    _
  $region3: #{actor_critic_forward.5} parent=0 // pred_check_branch
    %15 = sbr.rel (0) target = $region5
  $region4: #{actor_critic_forward.5} parent=0 // pred_region
    _
  $region5: #{actor_critic_forward.5} parent=0 // pred_fallthru
    _
  // Predicated region
  $region6: #{actor_critic_forward.5} parent=0 // pred_check
    _
  $region7: #{actor_critic_forward.5} parent=0 // pred_check_branch
    %17 = sbr.rel (0) target = $region9
  $region8: #{actor_critic_forward.5} parent=0 // pred_region
    _
  $region9: #{actor_critic_forward.5} parent=0 // pred_fallthru
    _
  // Predicated region
  $region10: #{actor_critic_forward.5} parent=0 // pred_check
    _
  $region11: #{actor_critic_forward.5} parent=0 // pred_check_branch
    %19 = sbr.rel (0) target = $region13
  $region12: #{actor_critic_forward.5} parent=0 // pred_region
    _
  $region13: #{actor_critic_forward.5} parent=0 // pred_fallthru
    _
  // Predicated region
  $region14: #{actor_critic_forward.5} parent=0 // pred_check
    _
  $region15: #{actor_critic_forward.5} parent=0 // pred_check_branch
    %21 = sbr.rel (0) target = $region17
  $region16: #{actor_critic_forward.5} parent=0 // pred_region
    _
  $region17: #{actor_critic_forward.5} parent=0 // pred_fallthru
    _
  // Predicated region
  $region18: #{actor_critic_forward.5} parent=0 // pred_check
    _
  $region19: #{actor_critic_forward.5} parent=0 // pred_check_branch
    %23 = sbr.rel (0) target = $region21
  $region20: #{actor_critic_forward.5} parent=0 // pred_region
    _
  $region21: #{actor_critic_forward.5} parent=0 // pred_fallthru
    _
  // Predicated region
  $region22: #{actor_critic_forward.5} parent=0 // pred_check
    _
  $region23: #{actor_critic_forward.5} parent=0 // pred_check_branch
    %25 = sbr.rel (0) target = $region25
  $region24: #{actor_critic_forward.5} parent=0 // pred_region
    _
  $region25: #{actor_critic_forward.5} parent=0 // pred_fallthru
    _
  // Predicated region
  $region26: #{actor_critic_forward.5} parent=0 // pred_check
    _
  $region27: #{actor_critic_forward.5} parent=0 // pred_check_branch
    %27 = sbr.rel (0) target = $region29
  $region28: #{actor_critic_forward.5} parent=0 // pred_region
    _
  $region29: #{actor_critic_forward.5} parent=0 // pred_fallthru
    _
  // Predicated region
  $region30: #{actor_critic_forward.5} parent=0 // pred_check
    _
  $region31: #{actor_critic_forward.5} parent=0 // pred_check_branch
    %29 = sbr.rel (0) target = $region33
  $region32: #{actor_critic_forward.5} parent=0 // pred_region
    _
  $region33: #{actor_critic_forward.5} parent=0 // pred_fallthru
    _
  // Predicated region
  $region34: #{actor_critic_forward.5} parent=0 // pred_check
    _
  $region35: #{actor_critic_forward.5} parent=0 // pred_check_branch
    %31 = sbr.rel (0) target = $region37
  $region36: #{actor_critic_forward.5} parent=0 // pred_region
    _
  $region37: #{actor_critic_forward.5} parent=0 // pred_fallthru
    _
  %v32 = vld [vmem:[%s0] sm:$0xff]
  %v33 = vld [vmem:[%s0 + $0x8] sm:$0xff]
  %v34 = vld [vmem:[%s0 + $0x10] sm:$0xff]
  %v35 = vld [vmem:[%s0 + $0x18] sm:$0xff]
  %v36 = vld [vmem:[%s0 + $0x20] sm:$0xff]
  %v37 = vld [vmem:[%s0 + $0x28] sm:$0xff]
  %v38 = vld [vmem:[%s0 + $0x30] sm:$0xff]
  %v39 = vld [vmem:[%s1] sm:$0xff]
  %v40 = vld [vmem:[%s1 + $0x8] sm:$0xff]
  %v41 = vld [vmem:[%s1 + $0x10] sm:$0xff]
  %v42 = vld [vmem:[%s1 + $0x18] sm:$0xff]
  %v43 = vld [vmem:[%s1 + $0x20] sm:$0xff]
  %v44 = vld [vmem:[%s1 + $0x28] sm:$0xff]
  %v45 = vld [vmem:[%s1 + $0x30] sm:$0xff]
  %v46 = vld [vmem:[%s1 + $0x38] sm:$0xff]
  %v47 = vld [vmem:[%s1 + $0x40] sm:$0xff]
  %v48 = vld [vmem:[%s1 + $0x48] sm:$0xff]
  %v49 = vld [vmem:[%s1 + $0x50] sm:$0xff]
  %v50 = vld [vmem:[%s1 + $0x58] sm:$0xff]
  %v51 = vld [vmem:[%s1 + $0x60] sm:$0xff]
  %v52 = vld [vmem:[%s1 + $0x68] sm:$0xff]
  %v53 = vld [vmem:[%s1 + $0x70] sm:$0xff]
  %v54 = vld [vmem:[%s1 + $0x78] sm:$0xff]
  %v55 = vld [vmem:[%s1 + $0x80] sm:$0xff]
  %v56 = vld [vmem:[%s1 + $0x88] sm:$0xff]
  %v57 = vld [vmem:[%s1 + $0x90] sm:$0xff]
  %v58 = vld [vmem:[%s1 + $0x98] sm:$0xff]
  %v59 = vld [vmem:[%s1 + $0xa0] sm:$0xff]
  %v60 = vld [vmem:[%s1 + $0xa8] sm:$0xff]
  %v61 = vld [vmem:[%s1 + $0xb0] sm:$0xff]
  %v62 = vld [vmem:[%s1 + $0xb8] sm:$0xff]
  %v63 = vld [vmem:[%s1 + $0xc0] sm:$0xff]
  %v64 = vld [vmem:[%s1 + $0xc8] sm:$0xff]
  %v65 = vld [vmem:[%s1 + $0xd0] sm:$0xff]
  %v66 = vld [vmem:[%s1 + $0xd8] sm:$0xff]
  %v67 = vld [vmem:[%s1 + $0xe0] sm:$0xff]
  %v68 = vld [vmem:[%s1 + $0xe8] sm:$0xff]
  %v69 = vld [vmem:[%s1 + $0xf0] sm:$0xff]
  %v70 = vld [vmem:[%s1 + $0xf8] sm:$0xff]
  %v71 = vld [vmem:[%s1 + $0x100] sm:$0xff]
  %v72 = vld [vmem:[%s1 + $0x108] sm:$0xff]
  %v73 = vld [vmem:[%s1 + $0x110] sm:$0xff]
  %v74 = vld [vmem:[%s1 + $0x118] sm:$0xff]
  %v75 = vld [vmem:[%s1 + $0x120] sm:$0xff]
  %v76 = vld [vmem:[%s1 + $0x128] sm:$0xff]
  %v77 = vld [vmem:[%s1 + $0x130] sm:$0xff]
  %v78 = vld [vmem:[%s1 + $0x138] sm:$0xff]
  %v79 = vld [vmem:[%s1 + $0x140] sm:$0xff]
  %v80 = vld [vmem:[%s1 + $0x148] sm:$0xff]
  %v81 = vld [vmem:[%s1 + $0x150] sm:$0xff]
  %v82 = vld [vmem:[%s1 + $0x158] sm:$0xff]
  %v83 = vld [vmem:[%s1 + $0x160] sm:$0xff]
  %v84 = vld [vmem:[%s1 + $0x168] sm:$0xff]
  %v85 = vld [vmem:[%s1 + $0x170] sm:$0xff]
  %v86 = vld [vmem:[%s1 + $0x178] sm:$0xff]
  %v87 = vld [vmem:[%s1 + $0x180] sm:$0xff]
  %v88 = vld [vmem:[%s1 + $0x188] sm:$0xff]
  %v89 = vld [vmem:[%s1 + $0x190] sm:$0xff]
  %v90 = vld [vmem:[%s1 + $0x198] sm:$0xff]
  %v91 = vld [vmem:[%s1 + $0x1a0] sm:$0xff]
  %v92 = vld [vmem:[%s1 + $0x1a8] sm:$0xff]
  %v93 = vld [vmem:[%s1 + $0x1b0] sm:$0xff]
  %v94 = vld [vmem:[%s1 + $0x1b8] sm:$0xff]
  %v95 = vld [vmem:[%s1 + $0x1c0] sm:$0xff]
  %v96 = vld [vmem:[%s1 + $0x1c8] sm:$0xff]
  %v97 = vld [vmem:[%s1 + $0x1d0] sm:$0xff]
  %v98 = vld [vmem:[%s1 + $0x1d8] sm:$0xff]
  %v99 = vld [vmem:[%s1 + $0x1e0] sm:$0xff]
  %v100 = vld [vmem:[%s1 + $0x1e8] sm:$0xff]
  %v101 = vld [vmem:[%s1 + $0x1f0] sm:$0xff]
  %v102 = vld [vmem:[%s1 + $0x1f8] sm:$0xff]
  %v103 = vld [vmem:[%s1 + $0x200] sm:$0xff]
  %v104 = vld [vmem:[%s1 + $0x208] sm:$0xff]
  %v105 = vld [vmem:[%s1 + $0x210] sm:$0xff]
  %v106 = vld [vmem:[%s1 + $0x218] sm:$0xff]
  %v107 = vld [vmem:[%s1 + $0x220] sm:$0xff]
  %v108 = vld [vmem:[%s1 + $0x228] sm:$0xff]
  %v109 = vld [vmem:[%s1 + $0x230] sm:$0xff]
  %v110 = vld [vmem:[%s1 + $0x238] sm:$0xff]
  %v111 = vld [vmem:[%s1 + $0x240] sm:$0xff]
  %v112 = vld [vmem:[%s1 + $0x248] sm:$0xff]
  %v113 = vld [vmem:[%s1 + $0x250] sm:$0xff]
  %v114 = vld [vmem:[%s1 + $0x258] sm:$0xff]
  %v115 = vld [vmem:[%s1 + $0x260] sm:$0xff]
  %v116 = vld [vmem:[%s1 + $0x268] sm:$0xff]
  %v117 = vld [vmem:[%s1 + $0x270] sm:$0xff]
  %v118 = vld [vmem:[%s1 + $0x278] sm:$0xff]
  %v119 = vld [vmem:[%s1 + $0x280] sm:$0xff]
  %v120 = vld [vmem:[%s1 + $0x288] sm:$0xff]
  %v121 = vld [vmem:[%s1 + $0x290] sm:$0xff]
  %v122 = vld [vmem:[%s1 + $0x298] sm:$0xff]
  %v123 = vld [vmem:[%s1 + $0x2a0] sm:$0xff]
  %v124 = vld [vmem:[%s1 + $0x2a8] sm:$0xff]
  %v125 = vld [vmem:[%s1 + $0x2b0] sm:$0xff]
  %v126 = vld [vmem:[%s1 + $0x2b8] sm:$0xff]
  %v127 = vld [vmem:[%s1 + $0x2c0] sm:$0xff]
  %v128 = vld [vmem:[%s1 + $0x2c8] sm:$0xff]
  %v129 = vld [vmem:[%s1 + $0x2d0] sm:$0xff]
  %v130 = vld [vmem:[%s1 + $0x2d8] sm:$0xff]
  %v131 = vld [vmem:[%s1 + $0x2e0] sm:$0xff]
  %v132 = vld [vmem:[%s1 + $0x2e8] sm:$0xff]
  %v133 = vld [vmem:[%s1 + $0x2f0] sm:$0xff]
  %v134 = vld [vmem:[%s1 + $0x2f8] sm:$0xff]
  %v135 = vld [vmem:[%s1 + $0x300] sm:$0xff]
  %v136 = vld [vmem:[%s1 + $0x308] sm:$0xff]
  %v137 = vld [vmem:[%s1 + $0x310] sm:$0xff]
  %v138 = vld [vmem:[%s1 + $0x318] sm:$0xff]
  %v139 = vld [vmem:[%s1 + $0x320] sm:$0xff]
  %v140 = vld [vmem:[%s1 + $0x328] sm:$0xff]
  %v141 = vld [vmem:[%s1 + $0x330] sm:$0xff]
  %v142 = vld [vmem:[%s1 + $0x338] sm:$0xff]
  %v143 = vld [vmem:[%s1 + $0x340] sm:$0xff]
  %v144 = vld [vmem:[%s1 + $0x348] sm:$0xff]
  %v145 = vld [vmem:[%s1 + $0x350] sm:$0xff]
  %v146 = vld [vmem:[%s1 + $0x358] sm:$0xff]
  %v147 = vld [vmem:[%s1 + $0x360] sm:$0xff]
  %v148 = vld [vmem:[%s1 + $0x368] sm:$0xff]
  %v149 = vld [vmem:[%s1 + $0x370] sm:$0xff]
  %v150 = vld [vmem:[%s1 + $0x378] sm:$0xff]
  %v151 = vld [vmem:[%s2] sm:$0x1]
  %v153 = vlaneseq
  %v154 = vshrl.u32 %v153, 7
  %v155 = vsub.s32 0, %v154
  %v156 = vrot.slane %v151, %v155
  %158 = vmatprep.subr.mxu0 0.0
  %159 = vmatpush1.msra.mxu0 %v39
  %160 = vmatprep.subr.mxu0 0.0
  %161 = vmatpush1.msra.mxu0 %v40
  %162 = vmatprep.subr.mxu0 0.0
  %163 = vmatpush1.msra.mxu0 %v41
  %164 = vmatprep.subr.mxu0 0.0
  %165 = vmatpush1.msra.mxu0 %v42
  %166 = vmatprep.subr.mxu0 0.0
  %167 = vmatpush1.msra.mxu0 %v43
  %168 = vmatprep.subr.mxu0 0.0
  %169 = vmatpush1.msra.mxu0 %v44
  %170 = vmatprep.subr.mxu0 0.0
  %171 = vmatpush1.msra.mxu0 %v45
  %172 = vmatprep.subr.mxu0 0.0
  %173 = vmatpush1.msra.mxu0 %v46
  %174 = vmatprep.subr.mxu0 0.0
  %175 = vmatpush1.msra.mxu0 %v47
  %176 = vmatprep.subr.mxu0 0.0
  %177 = vmatpush1.msra.mxu0 %v48
  %178 = vmatprep.subr.mxu0 0.0
  %179 = vmatpush1.msra.mxu0 %v49
  %180 = vmatprep.subr.mxu0 0.0
  %181 = vmatpush1.msra.mxu0 %v50
  %182 = vmatprep.subr.mxu0 0.0
  %183 = vmatpush1.msra.mxu0 %v51
  %184 = vmatprep.subr.mxu0 0.0
  %185 = vmatpush1.msra.mxu0 %v52
  %186 = vmatprep.subr.mxu0 0.0
  %187 = vmatpush1.msra.mxu0 %v53
  %188 = vmatprep.subr.mxu0 0.0
  %189 = vmatpush1.msra.mxu0 %v54
  %190 = vmatprep.subr.mxu0 0.0
  %191 = vmatpush1.msra.mxu0 %v55
  %192 = vmatprep.subr.mxu0 0.0
  %193 = vmatpush1.msra.mxu0 %v56
  %194 = vmatprep.subr.mxu0 0.0
  %195 = vmatpush1.msra.mxu0 %v57
  %196 = vmatprep.subr.mxu0 0.0
  %197 = vmatpush1.msra.mxu0 %v58
  %198 = vmatprep.subr.mxu0 0.0
  %199 = vmatpush1.msra.mxu0 %v59
  %200 = vmatprep.subr.mxu0 0.0
  %201 = vmatpush1.msra.mxu0 %v60
  %202 = vmatprep.subr.mxu0 0.0
  %203 = vmatpush1.msra.mxu0 %v61
  %204 = vmatprep.subr.mxu0 0.0
  %205 = vmatpush1.msra.mxu0 %v62
  %206 = vmatprep.subr.mxu0 0.0
  %207 = vmatpush1.msra.mxu0 %v63
  %208 = vmatprep.subr.mxu0 0.0
  %209 = vmatpush1.msra.mxu0 %v64
  %210 = vmatprep.subr.mxu0 0.0
  %211 = vmatpush1.msra.mxu0 %v65
  %212 = vmatprep.subr.mxu0 0.0
  %213 = vmatpush1.msra.mxu0 %v66
  %214 = vmatprep.subr.mxu0 0.0
  %215 = vmatpush1.msra.mxu0 %v67
  %216 = vmatprep.subr.mxu0 0.0
  %217 = vmatpush1.msra.mxu0 %v68
  %218 = vmatprep.subr.mxu0 0.0
  %219 = vmatpush1.msra.mxu0 %v69
  %220 = vmatprep.subr.mxu0 0.0
  %221 = vmatpush1.msra.mxu0 %v70
  %222 = vmatprep.mubr.f32.mxu0 %v33
  %223 = vmatmul.mubr.f32.gmra.mrb[0].mxu0 %v32
  %v224 = vpop.f32.mrb[0].mxu0
  %v225 = vadd.f32 %v156, %v224
  %v226 = vpop.f32.mrb[0].mxu0
  %227 = vdwg.mxu0
  %228 = vmatprep.subr.mxu0 0.0
  %229 = vmatpush1.msra.mxu0 %v71
  %230 = vmatprep.subr.mxu0 0.0
  %231 = vmatpush1.msra.mxu0 %v72
  %232 = vmatprep.subr.mxu0 0.0
  %233 = vmatpush1.msra.mxu0 %v73
  %234 = vmatprep.subr.mxu0 0.0
  %235 = vmatpush1.msra.mxu0 %v74
  %236 = vmatprep.subr.mxu0 0.0
  %237 = vmatpush1.msra.mxu0 %v75
  %238 = vmatprep.subr.mxu0 0.0
  %239 = vmatpush1.msra.mxu0 %v76
  %240 = vmatprep.subr.mxu0 0.0
  %241 = vmatpush1.msra.mxu0 %v77
  %242 = vmatprep.subr.mxu0 0.0
  %243 = vmatpush1.msra.mxu0 %v78
  %244 = vmatprep.subr.mxu0 0.0
  %245 = vmatpush1.msra.mxu0 %v79
  %246 = vmatprep.subr.mxu0 0.0
  %247 = vmatpush1.msra.mxu0 %v80
  %248 = vmatprep.subr.mxu0 0.0
  %249 = vmatpush1.msra.mxu0 %v81
  %250 = vmatprep.subr.mxu0 0.0
  %251 = vmatpush1.msra.mxu0 %v82
  %252 = vmatprep.subr.mxu0 0.0
  %253 = vmatpush1.msra.mxu0 %v83
  %254 = vmatprep.subr.mxu0 0.0
  %255 = vmatpush1.msra.mxu0 %v84
  %256 = vmatprep.subr.mxu0 0.0
  %257 = vmatpush1.msra.mxu0 %v85
  %258 = vmatprep.subr.mxu0 0.0
  %259 = vmatpush1.msra.mxu0 %v86
  %260 = vmatprep.subr.mxu0 0.0
  %261 = vmatpush1.msra.mxu0 %v87
  %262 = vmatprep.subr.mxu0 0.0
  %263 = vmatpush1.msra.mxu0 %v88
  %264 = vmatprep.subr.mxu0 0.0
  %265 = vmatpush1.msra.mxu0 %v89
  %266 = vmatprep.subr.mxu0 0.0
  %267 = vmatpush1.msra.mxu0 %v90
  %268 = vmatprep.subr.mxu0 0.0
  %269 = vmatpush1.msra.mxu0 %v91
  %270 = vmatprep.subr.mxu0 0.0
  %271 = vmatpush1.msra.mxu0 %v92
  %272 = vmatprep.subr.mxu0 0.0
  %273 = vmatpush1.msra.mxu0 %v93
  %274 = vmatprep.subr.mxu0 0.0
  %275 = vmatpush1.msra.mxu0 %v94
  %276 = vmatprep.subr.mxu0 0.0
  %277 = vmatpush1.msra.mxu0 %v95
  %278 = vmatprep.subr.mxu0 0.0
  %279 = vmatpush1.msra.mxu0 %v96
  %280 = vmatprep.subr.mxu0 0.0
  %281 = vmatpush1.msra.mxu0 %v97
  %282 = vmatprep.subr.mxu0 0.0
  %283 = vmatpush1.msra.mxu0 %v98
  %284 = vmatprep.subr.mxu0 0.0
  %285 = vmatpush1.msra.mxu0 %v99
  %286 = vmatprep.subr.mxu0 0.0
  %287 = vmatpush1.msra.mxu0 %v100
  %288 = vmatprep.subr.mxu0 0.0
  %289 = vmatpush1.msra.mxu0 %v101
  %290 = vmatprep.subr.mxu0 0.0
  %291 = vmatpush1.msra.mxu0 %v102
  %292 = vmatprep.mubr.f32.mxu0 %v35
  %293 = vmatmul.mubr.f32.gmra.mrb[0].mxu0 %v34
  %v294 = vpop.f32.mrb[0].mxu0
  %v295 = vadd.f32 %v225, %v294
  %v296 = vpop.f32.mrb[0].mxu0
  %297 = vdwg.mxu0
  %298 = vmatprep.subr.mxu0 0.0
  %299 = vmatpush1.msra.mxu0 %v103
  %300 = vmatprep.subr.mxu0 0.0
  %301 = vmatpush1.msra.mxu0 %v104
  %302 = vmatprep.subr.mxu0 0.0
  %303 = vmatpush1.msra.mxu0 %v105
  %304 = vmatprep.subr.mxu0 0.0
  %305 = vmatpush1.msra.mxu0 %v106
  %306 = vmatprep.subr.mxu0 0.0
  %307 = vmatpush1.msra.mxu0 %v107
  %308 = vmatprep.subr.mxu0 0.0
  %309 = vmatpush1.msra.mxu0 %v108
  %310 = vmatprep.subr.mxu0 0.0
  %311 = vmatpush1.msra.mxu0 %v109
  %312 = vmatprep.subr.mxu0 0.0
  %313 = vmatpush1.msra.mxu0 %v110
  %314 = vmatprep.subr.mxu0 0.0
  %315 = vmatpush1.msra.mxu0 %v111
  %316 = vmatprep.subr.mxu0 0.0
  %317 = vmatpush1.msra.mxu0 %v112
  %318 = vmatprep.subr.mxu0 0.0
  %319 = vmatpush1.msra.mxu0 %v113
  %320 = vmatprep.subr.mxu0 0.0
  %321 = vmatpush1.msra.mxu0 %v114
  %322 = vmatprep.subr.mxu0 0.0
  %323 = vmatpush1.msra.mxu0 %v115
  %324 = vmatprep.subr.mxu0 0.0
  %325 = vmatpush1.msra.mxu0 %v116
  %326 = vmatprep.subr.mxu0 0.0
  %327 = vmatpush1.msra.mxu0 %v117
  %328 = vmatprep.subr.mxu0 0.0
  %329 = vmatpush1.msra.mxu0 %v118
  %330 = vmatprep.subr.mxu0 0.0
  %331 = vmatpush1.msra.mxu0 %v119
  %332 = vmatprep.subr.mxu0 0.0
  %333 = vmatpush1.msra.mxu0 %v120
  %334 = vmatprep.subr.mxu0 0.0
  %335 = vmatpush1.msra.mxu0 %v121
  %336 = vmatprep.subr.mxu0 0.0
  %337 = vmatpush1.msra.mxu0 %v122
  %338 = vmatprep.subr.mxu0 0.0
  %339 = vmatpush1.msra.mxu0 %v123
  %340 = vmatprep.subr.mxu0 0.0
  %341 = vmatpush1.msra.mxu0 %v124
  %342 = vmatprep.subr.mxu0 0.0
  %343 = vmatpush1.msra.mxu0 %v125
  %344 = vmatprep.subr.mxu0 0.0
  %345 = vmatpush1.msra.mxu0 %v126
  %346 = vmatprep.subr.mxu0 0.0
  %347 = vmatpush1.msra.mxu0 %v127
  %348 = vmatprep.subr.mxu0 0.0
  %349 = vmatpush1.msra.mxu0 %v128
  %350 = vmatprep.subr.mxu0 0.0
  %351 = vmatpush1.msra.mxu0 %v129
  %352 = vmatprep.subr.mxu0 0.0
  %353 = vmatpush1.msra.mxu0 %v130
  %354 = vmatprep.subr.mxu0 0.0
  %355 = vmatpush1.msra.mxu0 %v131
  %356 = vmatprep.subr.mxu0 0.0
  %357 = vmatpush1.msra.mxu0 %v132
  %358 = vmatprep.subr.mxu0 0.0
  %359 = vmatpush1.msra.mxu0 %v133
  %360 = vmatprep.subr.mxu0 0.0
  %361 = vmatpush1.msra.mxu0 %v134
  %362 = vmatprep.mubr.f32.mxu0 %v37
  %363 = vmatmul.mubr.f32.gmra.mrb[0].mxu0 %v36
  %v364 = vpop.f32.mrb[0].mxu0
  %v365 = vadd.f32 %v295, %v364
  %v366 = vpop.f32.mrb[0].mxu0
  %367 = vdwg.mxu0
  %368 = vmatprep.subr.mxu0 0.0
  %369 = vmatpush1.msra.mxu0 %v135
  %370 = vmatprep.subr.mxu0 0.0
  %371 = vmatpush1.msra.mxu0 %v136
  %372 = vmatprep.subr.mxu0 0.0
  %373 = vmatpush1.msra.mxu0 %v137
  %374 = vmatprep.subr.mxu0 0.0
  %375 = vmatpush1.msra.mxu0 %v138
  %376 = vmatprep.subr.mxu0 0.0
  %377 = vmatpush1.msra.mxu0 %v139
  %378 = vmatprep.subr.mxu0 0.0
  %379 = vmatpush1.msra.mxu0 %v140
  %380 = vmatprep.subr.mxu0 0.0
  %381 = vmatpush1.msra.mxu0 %v141
  %382 = vmatprep.subr.mxu0 0.0
  %383 = vmatpush1.msra.mxu0 %v142
  %384 = vmatprep.subr.mxu0 0.0
  %385 = vmatpush1.msra.mxu0 %v143
  %386 = vmatprep.subr.mxu0 0.0
  %387 = vmatpush1.msra.mxu0 %v144
  %388 = vmatprep.subr.mxu0 0.0
  %389 = vmatpush1.msra.mxu0 %v145
  %390 = vmatprep.subr.mxu0 0.0
  %391 = vmatpush1.msra.mxu0 %v146
  %392 = vmatprep.subr.mxu0 0.0
  %393 = vmatpush1.msra.mxu0 %v147
  %394 = vmatprep.subr.mxu0 0.0
  %395 = vmatpush1.msra.mxu0 %v148
  %396 = vmatprep.subr.mxu0 0.0
  %397 = vmatpush1.msra.mxu0 %v149
  %398 = vmatprep.subr.mxu0 0.0
  %399 = vmatpush1.msra.mxu0 %v150
  %400 = vmatprep.subr.mxu0 0.0
  %401 = vmatpush1.msra.mxu0 0.0
  %402 = vmatprep.subr.mxu0 0.0
  %403 = vmatpush1.msra.mxu0 0.0
  %404 = vmatprep.subr.mxu0 0.0
  %405 = vmatpush1.msra.mxu0 0.0
  %406 = vmatprep.subr.mxu0 0.0
  %407 = vmatpush1.msra.mxu0 0.0
  %408 = vmatprep.subr.mxu0 0.0
  %409 = vmatpush1.msra.mxu0 0.0
  %410 = vmatprep.subr.mxu0 0.0
  %411 = vmatpush1.msra.mxu0 0.0
  %412 = vmatprep.subr.mxu0 0.0
  %413 = vmatpush1.msra.mxu0 0.0
  %414 = vmatprep.subr.mxu0 0.0
  %415 = vmatpush1.msra.mxu0 0.0
  %416 = vmatprep.subr.mxu0 0.0
  %417 = vmatpush1.msra.mxu0 0.0
  %418 = vmatprep.subr.mxu0 0.0
  %419 = vmatpush1.msra.mxu0 0.0
  %420 = vmatprep.subr.mxu0 0.0
  %421 = vmatpush1.msra.mxu0 0.0
  %422 = vmatprep.subr.mxu0 0.0
  %423 = vmatpush1.msra.mxu0 0.0
  %424 = vmatprep.subr.mxu0 0.0
  %425 = vmatpush1.msra.mxu0 0.0
  %426 = vmatprep.subr.mxu0 0.0
  %427 = vmatpush1.msra.mxu0 0.0
  %428 = vmatprep.subr.mxu0 0.0
  %429 = vmatpush1.msra.mxu0 0.0
  %430 = vmatprep.subr.mxu0 0.0
  %431 = vmatpush1.msra.mxu0 0.0
  %432 = vmatprep.mubr.f32.mxu0 0.0
  %433 = vmatmul.mubr.f32.gmra.mrb[0].mxu0 %v38
  %v434 = vpop.f32.mrb[0].mxu0
  %v435 = vadd.f32 %v365, %v434
  %v436 = vpop.f32.mrb[0].mxu0
  %437 = vdwg.mxu0
  %v438 = vmax.f32 %v435, 0.0
  %v439 = vlaneseq
  %v440 = vshrl.u32 %v439, 7
  %v441 = vlaneseq
  %v442 = vand.u32 %v441, 127
  %v443 = vmul.u32 %v440, 4
  %vm444 = vcmp.eq.s32.totalorder %v442, %v443
  %v445 = vsel %vm444, 1, 0
  %v446 = vcvt.s32.f32 %v445
  %vm447 = vcmask 64512
  %v449 = vsel %vm447, %v446, 0
  %451 = vmatprep.subr.mxu0 0.0
  %452 = vmatpush1.msra.mxu0 %v438
  %453 = vmatprep.subr.mxu0 0.0
  %454 = vmatpush1.msra.mxu0 0.0
  %455 = vmatprep.subr.mxu0 0.0
  %456 = vmatpush1.msra.mxu0 0.0
  %457 = vmatprep.subr.mxu0 0.0
  %458 = vmatpush1.msra.mxu0 0.0
  %459 = vmatprep.subr.mxu0 0.0
  %460 = vmatpush1.msra.mxu0 0.0
  %461 = vmatprep.subr.mxu0 0.0
  %462 = vmatpush1.msra.mxu0 0.0
  %463 = vmatprep.subr.mxu0 0.0
  %464 = vmatpush1.msra.mxu0 0.0
  %465 = vmatprep.subr.mxu0 0.0
  %466 = vmatpush1.msra.mxu0 0.0
  %467 = vmatprep.subr.mxu0 0.0
  %468 = vmatpush1.msra.mxu0 0.0
  %469 = vmatprep.subr.mxu0 0.0
  %470 = vmatpush1.msra.mxu0 0.0
  %471 = vmatprep.subr.mxu0 0.0
  %472 = vmatpush1.msra.mxu0 0.0
  %473 = vmatprep.subr.mxu0 0.0
  %474 = vmatpush1.msra.mxu0 0.0
  %475 = vmatprep.subr.mxu0 0.0
  %476 = vmatpush1.msra.mxu0 0.0
  %477 = vmatprep.subr.mxu0 0.0
  %478 = vmatpush1.msra.mxu0 0.0
  %479 = vmatprep.subr.mxu0 0.0
  %480 = vmatpush1.msra.mxu0 0.0
  %481 = vmatprep.subr.mxu0 0.0
  %482 = vmatpush1.msra.mxu0 0.0
  %483 = vmatprep.subr.mxu0 0.0
  %484 = vmatpush1.msra.mxu0 0.0
  %485 = vmatprep.subr.mxu0 0.0
  %486 = vmatpush1.msra.mxu0 0.0
  %487 = vmatprep.subr.mxu0 0.0
  %488 = vmatpush1.msra.mxu0 0.0
  %489 = vmatprep.subr.mxu0 0.0
  %490 = vmatpush1.msra.mxu0 0.0
  %491 = vmatprep.subr.mxu0 0.0
  %492 = vmatpush1.msra.mxu0 0.0
  %493 = vmatprep.subr.mxu0 0.0
  %494 = vmatpush1.msra.mxu0 0.0
  %495 = vmatprep.subr.mxu0 0.0
  %496 = vmatpush1.msra.mxu0 0.0
  %497 = vmatprep.subr.mxu0 0.0
  %498 = vmatpush1.msra.mxu0 0.0
  %499 = vmatprep.subr.mxu0 0.0
  %500 = vmatpush1.msra.mxu0 0.0
  %501 = vmatprep.subr.mxu0 0.0
  %502 = vmatpush1.msra.mxu0 0.0
  %503 = vmatprep.subr.mxu0 0.0
  %504 = vmatpush1.msra.mxu0 0.0
  %505 = vmatprep.subr.mxu0 0.0
  %506 = vmatpush1.msra.mxu0 0.0
  %507 = vmatprep.subr.mxu0 0.0
  %508 = vmatpush1.msra.mxu0 0.0
  %509 = vmatprep.subr.mxu0 0.0
  %510 = vmatpush1.msra.mxu0 0.0
  %511 = vmatprep.subr.mxu0 0.0
  %512 = vmatpush1.msra.mxu0 0.0
  %513 = vmatprep.subr.mxu0 0.0
  %514 = vmatpush1.msra.mxu0 0.0
  %515 = vmatprep.mubr.f32.mxu0 0.0
  %516 = vmatmul.mubr.f32.gmra.mrb[0].mxu0 %v449
  %v517 = vpop.f32.mrb[0].mxu0
  %v518 = vadd.f32 0.0, %v517
  %v519 = vpop.f32.mrb[0].mxu0
  %520 = vdwg.mxu0
  %v521 = vld [vmem:[%s3] sm:$0xff]
  %v522 = vld [vmem:[%s3 + $0x8] sm:$0xff]
  %v523 = vld [vmem:[%s3 + $0x10] sm:$0xff]
  %v524 = vld [vmem:[%s3 + $0x18] sm:$0xff]
  %v525 = vld [vmem:[%s3 + $0x20] sm:$0xff]
  %v526 = vld [vmem:[%s3 + $0x28] sm:$0xff]
  %v527 = vld [vmem:[%s3 + $0x30] sm:$0xff]
  %v528 = vld [vmem:[%s3 + $0x38] sm:$0xff]
  %v529 = vld [vmem:[%s3 + $0x40] sm:$0xff]
  %v530 = vld [vmem:[%s3 + $0x48] sm:$0xff]
  %v531 = vld [vmem:[%s3 + $0x50] sm:$0xff]
  %v532 = vld [vmem:[%s3 + $0x58] sm:$0xff]
  %v533 = vld [vmem:[%s3 + $0x60] sm:$0xff]
  %v534 = vld [vmem:[%s3 + $0x68] sm:$0xff]
  %v535 = vld [vmem:[%s3 + $0x70] sm:$0xff]
  %v536 = vld [vmem:[%s3 + $0x78] sm:$0xff]
  %v537 = vadd.s32 %v443, 1
  %vm538 = vcmp.eq.s32.totalorder %v442, %v537
  %v539 = vsel %vm538, 1, 0
  %v540 = vcvt.s32.f32 %v539
  %v542 = vsel %vm447, %v540, 0
  %544 = vmatprep.subr.mxu0 0.0
  %545 = vmatpush1.msra.mxu0 %v438
  %546 = vmatprep.subr.mxu0 0.0
  %547 = vmatpush1.msra.mxu0 0.0
  %548 = vmatprep.subr.mxu0 0.0
  %549 = vmatpush1.msra.mxu0 0.0
  %550 = vmatprep.subr.mxu0 0.0
  %551 = vmatpush1.msra.mxu0 0.0
  %552 = vmatprep.subr.mxu0 0.0
  %553 = vmatpush1.msra.mxu0 0.0
  %554 = vmatprep.subr.mxu0 0.0
  %555 = vmatpush1.msra.mxu0 0.0
  %556 = vmatprep.subr.mxu0 0.0
  %557 = vmatpush1.msra.mxu0 0.0
  %558 = vmatprep.subr.mxu0 0.0
  %559 = vmatpush1.msra.mxu0 0.0
  %560 = vmatprep.subr.mxu0 0.0
  %561 = vmatpush1.msra.mxu0 0.0
  %562 = vmatprep.subr.mxu0 0.0
  %563 = vmatpush1.msra.mxu0 0.0
  %564 = vmatprep.subr.mxu0 0.0
  %565 = vmatpush1.msra.mxu0 0.0
  %566 = vmatprep.subr.mxu0 0.0
  %567 = vmatpush1.msra.mxu0 0.0
  %568 = vmatprep.subr.mxu0 0.0
  %569 = vmatpush1.msra.mxu0 0.0
  %570 = vmatprep.subr.mxu0 0.0
  %571 = vmatpush1.msra.mxu0 0.0
  %572 = vmatprep.subr.mxu0 0.0
  %573 = vmatpush1.msra.mxu0 0.0
  %574 = vmatprep.subr.mxu0 0.0
  %575 = vmatpush1.msra.mxu0 0.0
  %576 = vmatprep.subr.mxu0 0.0
  %577 = vmatpush1.msra.mxu0 0.0
  %578 = vmatprep.subr.mxu0 0.0
  %579 = vmatpush1.msra.mxu0 0.0
  %580 = vmatprep.subr.mxu0 0.0
  %581 = vmatpush1.msra.mxu0 0.0
  %582 = vmatprep.subr.mxu0 0.0
  %583 = vmatpush1.msra.mxu0 0.0
  %584 = vmatprep.subr.mxu0 0.0
  %585 = vmatpush1.msra.mxu0 0.0
  %586 = vmatprep.subr.mxu0 0.0
  %587 = vmatpush1.msra.mxu0 0.0
  %588 = vmatprep.subr.mxu0 0.0
  %589 = vmatpush1.msra.mxu0 0.0
  %590 = vmatprep.subr.mxu0 0.0
  %591 = vmatpush1.msra.mxu0 0.0
  %592 = vmatprep.subr.mxu0 0.0
  %593 = vmatpush1.msra.mxu0 0.0
  %594 = vmatprep.subr.mxu0 0.0
  %595 = vmatpush1.msra.mxu0 0.0
  %596 = vmatprep.subr.mxu0 0.0
  %597 = vmatpush1.msra.mxu0 0.0
  %598 = vmatprep.subr.mxu0 0.0
  %599 = vmatpush1.msra.mxu0 0.0
  %600 = vmatprep.subr.mxu0 0.0
  %601 = vmatpush1.msra.mxu0 0.0
  %602 = vmatprep.subr.mxu0 0.0
  %603 = vmatpush1.msra.mxu0 0.0
  %604 = vmatprep.subr.mxu0 0.0
  %605 = vmatpush1.msra.mxu0 0.0
  %606 = vmatprep.subr.mxu0 0.0
  %607 = vmatpush1.msra.mxu0 0.0
  %608 = vmatprep.mubr.f32.mxu0 0.0
  %609 = vmatmul.mubr.f32.gmra.mrb[0].mxu0 %v542
  %v610 = vpop.f32.mrb[0].mxu0
  %v611 = vadd.f32 0.0, %v610
  %v612 = vpop.f32.mrb[0].mxu0
  %613 = vdwg.mxu0
  %s614 = scalar_lea.vmem %s3, 128
  %v615 = vld [vmem:[%s614] sm:$0xff]
  %v616 = vld [vmem:[%s614 + $0x8] sm:$0xff]
  %v617 = vld [vmem:[%s614 + $0x10] sm:$0xff]
  %v618 = vld [vmem:[%s614 + $0x18] sm:$0xff]
  %v619 = vld [vmem:[%s614 + $0x20] sm:$0xff]
  %v620 = vld [vmem:[%s614 + $0x28] sm:$0xff]
  %v621 = vld [vmem:[%s614 + $0x30] sm:$0xff]
  %v622 = vld [vmem:[%s614 + $0x38] sm:$0xff]
  %v623 = vld [vmem:[%s614 + $0x40] sm:$0xff]
  %v624 = vld [vmem:[%s614 + $0x48] sm:$0xff]
  %v625 = vld [vmem:[%s614 + $0x50] sm:$0xff]
  %v626 = vld [vmem:[%s614 + $0x58] sm:$0xff]
  %v627 = vld [vmem:[%s614 + $0x60] sm:$0xff]
  %v628 = vld [vmem:[%s614 + $0x68] sm:$0xff]
  %v629 = vld [vmem:[%s614 + $0x70] sm:$0xff]
  %v630 = vld [vmem:[%s614 + $0x78] sm:$0xff]
  %631 = vmatprep.subr.mxu0 0.0
  %632 = vmatpush1.msra.mxu0 %v615
  %633 = vmatprep.subr.mxu0 0.0
  %634 = vmatpush1.msra.mxu0 %v616
  %635 = vmatprep.subr.mxu0 0.0
  %636 = vmatpush1.msra.mxu0 %v617
  %637 = vmatprep.subr.mxu0 0.0
  %638 = vmatpush1.msra.mxu0 %v618
  %639 = vmatprep.subr.mxu0 0.0
  %640 = vmatpush1.msra.mxu0 %v619
  %641 = vmatprep.subr.mxu0 0.0
  %642 = vmatpush1.msra.mxu0 %v620
  %643 = vmatprep.subr.mxu0 0.0
  %644 = vmatpush1.msra.mxu0 %v621
  %645 = vmatprep.subr.mxu0 0.0
  %646 = vmatpush1.msra.mxu0 %v622
  %647 = vmatprep.subr.mxu0 0.0
  %648 = vmatpush1.msra.mxu0 %v623
  %649 = vmatprep.subr.mxu0 0.0
  %650 = vmatpush1.msra.mxu0 %v624
  %651 = vmatprep.subr.mxu0 0.0
  %652 = vmatpush1.msra.mxu0 %v625
  %653 = vmatprep.subr.mxu0 0.0
  %654 = vmatpush1.msra.mxu0 %v626
  %655 = vmatprep.subr.mxu0 0.0
  %656 = vmatpush1.msra.mxu0 %v627
  %657 = vmatprep.subr.mxu0 0.0
  %658 = vmatpush1.msra.mxu0 %v628
  %659 = vmatprep.subr.mxu0 0.0
  %660 = vmatpush1.msra.mxu0 %v629
  %661 = vmatprep.subr.mxu0 0.0
  %662 = vmatpush1.msra.mxu0 %v630
  %663 = vmatprep.subr.mxu0 0.0
  %664 = vmatpush1.msra.mxu0 0.0
  %665 = vmatprep.subr.mxu0 0.0
  %666 = vmatpush1.msra.mxu0 0.0
  %667 = vmatprep.subr.mxu0 0.0
  %668 = vmatpush1.msra.mxu0 0.0
  %669 = vmatprep.subr.mxu0 0.0
  %670 = vmatpush1.msra.mxu0 0.0
  %671 = vmatprep.subr.mxu0 0.0
  %672 = vmatpush1.msra.mxu0 0.0
  %673 = vmatprep.subr.mxu0 0.0
  %674 = vmatpush1.msra.mxu0 0.0
  %675 = vmatprep.subr.mxu0 0.0
  %676 = vmatpush1.msra.mxu0 0.0
  %677 = vmatprep.subr.mxu0 0.0
  %678 = vmatpush1.msra.mxu0 0.0
  %679 = vmatprep.subr.mxu0 0.0
  %680 = vmatpush1.msra.mxu0 0.0
  %681 = vmatprep.subr.mxu0 0.0
  %682 = vmatpush1.msra.mxu0 0.0
  %683 = vmatprep.subr.mxu0 0.0
  %684 = vmatpush1.msra.mxu0 0.0
  %685 = vmatprep.subr.mxu0 0.0
  %686 = vmatpush1.msra.mxu0 0.0
  %687 = vmatprep.subr.mxu0 0.0
  %688 = vmatpush1.msra.mxu0 0.0
  %689 = vmatprep.subr.mxu0 0.0
  %690 = vmatpush1.msra.mxu0 0.0
  %691 = vmatprep.subr.mxu0 0.0
  %692 = vmatpush1.msra.mxu0 0.0
  %693 = vmatprep.subr.mxu0 0.0
  %694 = vmatpush1.msra.mxu0 0.0
  %695 = vmatprep.mubr.f32.mxu0 0.0
  %696 = vmatmul.mubr.f32.gmra.mrb[0].mxu0 %v611
  %v697 = vpop.f32.mrb[0].mxu0
  %v698 = vadd.f32 0.0, %v697
  %v699 = vpop.f32.mrb[0].mxu0
  %700 = vdwg.mxu0
  %701 = vmatprep.subr.mxu0 0.0
  %702 = vmatpush1.msra.mxu0 %v521
  %703 = vmatprep.subr.mxu0 0.0
  %704 = vmatpush1.msra.mxu0 %v522
  %705 = vmatprep.subr.mxu0 0.0
  %706 = vmatpush1.msra.mxu0 %v523
  %707 = vmatprep.subr.mxu0 0.0
  %708 = vmatpush1.msra.mxu0 %v524
  %709 = vmatprep.subr.mxu0 0.0
  %710 = vmatpush1.msra.mxu0 %v525
  %711 = vmatprep.subr.mxu0 0.0
  %712 = vmatpush1.msra.mxu0 %v526
  %713 = vmatprep.subr.mxu0 0.0
  %714 = vmatpush1.msra.mxu0 %v527
  %715 = vmatprep.subr.mxu0 0.0
  %716 = vmatpush1.msra.mxu0 %v528
  %717 = vmatprep.subr.mxu0 0.0
  %718 = vmatpush1.msra.mxu0 %v529
  %719 = vmatprep.subr.mxu0 0.0
  %720 = vmatpush1.msra.mxu0 %v530
  %721 = vmatprep.subr.mxu0 0.0
  %722 = vmatpush1.msra.mxu0 %v531
  %723 = vmatprep.subr.mxu0 0.0
  %724 = vmatpush1.msra.mxu0 %v532
  %725 = vmatprep.subr.mxu0 0.0
  %726 = vmatpush1.msra.mxu0 %v533
  %727 = vmatprep.subr.mxu0 0.0
  %728 = vmatpush1.msra.mxu0 %v534
  %729 = vmatprep.subr.mxu0 0.0
  %730 = vmatpush1.msra.mxu0 %v535
  %731 = vmatprep.subr.mxu0 0.0
  %732 = vmatpush1.msra.mxu0 %v536
  %733 = vmatprep.subr.mxu0 0.0
  %734 = vmatpush1.msra.mxu0 0.0
  %735 = vmatprep.subr.mxu0 0.0
  %736 = vmatpush1.msra.mxu0 0.0
  %737 = vmatprep.subr.mxu0 0.0
  %738 = vmatpush1.msra.mxu0 0.0
  %739 = vmatprep.subr.mxu0 0.0
  %740 = vmatpush1.msra.mxu0 0.0
  %741 = vmatprep.subr.mxu0 0.0
  %742 = vmatpush1.msra.mxu0 0.0
  %743 = vmatprep.subr.mxu0 0.0
  %744 = vmatpush1.msra.mxu0 0.0
  %745 = vmatprep.subr.mxu0 0.0
  %746 = vmatpush1.msra.mxu0 0.0
  %747 = vmatprep.subr.mxu0 0.0
  %748 = vmatpush1.msra.mxu0 0.0
  %749 = vmatprep.subr.mxu0 0.0
  %750 = vmatpush1.msra.mxu0 0.0
  %751 = vmatprep.subr.mxu0 0.0
  %752 = vmatpush1.msra.mxu0 0.0
  %753 = vmatprep.subr.mxu0 0.0
  %754 = vmatpush1.msra.mxu0 0.0
  %755 = vmatprep.subr.mxu0 0.0
  %756 = vmatpush1.msra.mxu0 0.0
  %757 = vmatprep.subr.mxu0 0.0
  %758 = vmatpush1.msra.mxu0 0.0
  %759 = vmatprep.subr.mxu0 0.0
  %760 = vmatpush1.msra.mxu0 0.0
  %761 = vmatprep.subr.mxu0 0.0
  %762 = vmatpush1.msra.mxu0 0.0
  %763 = vmatprep.subr.mxu0 0.0
  %764 = vmatpush1.msra.mxu0 0.0
  %765 = vmatprep.mubr.f32.mxu0 0.0
  %766 = vmatmul.mubr.f32.gmra.mrb[0].mxu0 %v518
  %v767 = vpop.f32.mrb[0].mxu0
  %v768 = vadd.f32 %v698, %v767
  %v769 = vpop.f32.mrb[0].mxu0
  %770 = vdwg.mxu0
  %v771 = vadd.s32 %v443, 2
  %vm772 = vcmp.eq.s32.totalorder %v442, %v771
  %v773 = vsel %vm772, 1, 0
  %v774 = vcvt.s32.f32 %v773
  %v776 = vsel %vm447, %v774, 0
  %778 = vmatprep.subr.mxu0 0.0
  %779 = vmatpush1.msra.mxu0 %v438
  %780 = vmatprep.subr.mxu0 0.0
  %781 = vmatpush1.msra.mxu0 0.0
  %782 = vmatprep.subr.mxu0 0.0
  %783 = vmatpush1.msra.mxu0 0.0
  %784 = vmatprep.subr.mxu0 0.0
  %785 = vmatpush1.msra.mxu0 0.0
  %786 = vmatprep.subr.mxu0 0.0
  %787 = vmatpush1.msra.mxu0 0.0
  %788 = vmatprep.subr.mxu0 0.0
  %789 = vmatpush1.msra.mxu0 0.0
  %790 = vmatprep.subr.mxu0 0.0
  %791 = vmatpush1.msra.mxu0 0.0
  %792 = vmatprep.subr.mxu0 0.0
  %793 = vmatpush1.msra.mxu0 0.0
  %794 = vmatprep.subr.mxu0 0.0
  %795 = vmatpush1.msra.mxu0 0.0
  %796 = vmatprep.subr.mxu0 0.0
  %797 = vmatpush1.msra.mxu0 0.0
  %798 = vmatprep.subr.mxu0 0.0
  %799 = vmatpush1.msra.mxu0 0.0
  %800 = vmatprep.subr.mxu0 0.0
  %801 = vmatpush1.msra.mxu0 0.0
  %802 = vmatprep.subr.mxu0 0.0
  %803 = vmatpush1.msra.mxu0 0.0
  %804 = vmatprep.subr.mxu0 0.0
  %805 = vmatpush1.msra.mxu0 0.0
  %806 = vmatprep.subr.mxu0 0.0
  %807 = vmatpush1.msra.mxu0 0.0
  %808 = vmatprep.subr.mxu0 0.0
  %809 = vmatpush1.msra.mxu0 0.0
  %810 = vmatprep.subr.mxu0 0.0
  %811 = vmatpush1.msra.mxu0 0.0
  %812 = vmatprep.subr.mxu0 0.0
  %813 = vmatpush1.msra.mxu0 0.0
  %814 = vmatprep.subr.mxu0 0.0
  %815 = vmatpush1.msra.mxu0 0.0
  %816 = vmatprep.subr.mxu0 0.0
  %817 = vmatpush1.msra.mxu0 0.0
  %818 = vmatprep.subr.mxu0 0.0
  %819 = vmatpush1.msra.mxu0 0.0
  %820 = vmatprep.subr.mxu0 0.0
  %821 = vmatpush1.msra.mxu0 0.0
  %822 = vmatprep.subr.mxu0 0.0
  %823 = vmatpush1.msra.mxu0 0.0
  %824 = vmatprep.subr.mxu0 0.0
  %825 = vmatpush1.msra.mxu0 0.0
  %826 = vmatprep.subr.mxu0 0.0
  %827 = vmatpush1.msra.mxu0 0.0
  %828 = vmatprep.subr.mxu0 0.0
  %829 = vmatpush1.msra.mxu0 0.0
  %830 = vmatprep.subr.mxu0 0.0
  %831 = vmatpush1.msra.mxu0 0.0
  %832 = vmatprep.subr.mxu0 0.0
  %833 = vmatpush1.msra.mxu0 0.0
  %834 = vmatprep.subr.mxu0 0.0
  %835 = vmatpush1.msra.mxu0 0.0
  %836 = vmatprep.subr.mxu0 0.0
  %837 = vmatpush1.msra.mxu0 0.0
  %838 = vmatprep.subr.mxu0 0.0
  %839 = vmatpush1.msra.mxu0 0.0
  %840 = vmatprep.subr.mxu0 0.0
  %841 = vmatpush1.msra.mxu0 0.0
  %842 = vmatprep.mubr.f32.mxu0 0.0
  %843 = vmatmul.mubr.f32.gmra.mrb[0].mxu0 %v776
  %v844 = vpop.f32.mrb[0].mxu0
  %v845 = vadd.f32 0.0, %v844
  %v846 = vpop.f32.mrb[0].mxu0
  %847 = vdwg.mxu0
  %s848 = scalar_lea.vmem %s3, 256
  %v849 = vld [vmem:[%s848] sm:$0xff]
  %v850 = vld [vmem:[%s848 + $0x8] sm:$0xff]
  %v851 = vld [vmem:[%s848 + $0x10] sm:$0xff]
  %v852 = vld [vmem:[%s848 + $0x18] sm:$0xff]
  %v853 = vld [vmem:[%s848 + $0x20] sm:$0xff]
  %v854 = vld [vmem:[%s848 + $0x28] sm:$0xff]
  %v855 = vld [vmem:[%s848 + $0x30] sm:$0xff]
  %v856 = vld [vmem:[%s848 + $0x38] sm:$0xff]
  %v857 = vld [vmem:[%s848 + $0x40] sm:$0xff]
  %v858 = vld [vmem:[%s848 + $0x48] sm:$0xff]
  %v859 = vld [vmem:[%s848 + $0x50] sm:$0xff]
  %v860 = vld [vmem:[%s848 + $0x58] sm:$0xff]
  %v861 = vld [vmem:[%s848 + $0x60] sm:$0xff]
  %v862 = vld [vmem:[%s848 + $0x68] sm:$0xff]
  %v863 = vld [vmem:[%s848 + $0x70] sm:$0xff]
  %v864 = vld [vmem:[%s848 + $0x78] sm:$0xff]
  %865 = vmatprep.subr.mxu0 0.0
  %866 = vmatpush1.msra.mxu0 %v849
  %867 = vmatprep.subr.mxu0 0.0
  %868 = vmatpush1.msra.mxu0 %v850
  %869 = vmatprep.subr.mxu0 0.0
  %870 = vmatpush1.msra.mxu0 %v851
  %871 = vmatprep.subr.mxu0 0.0
  %872 = vmatpush1.msra.mxu0 %v852
  %873 = vmatprep.subr.mxu0 0.0
  %874 = vmatpush1.msra.mxu0 %v853
  %875 = vmatprep.subr.mxu0 0.0
  %876 = vmatpush1.msra.mxu0 %v854
  %877 = vmatprep.subr.mxu0 0.0
  %878 = vmatpush1.msra.mxu0 %v855
  %879 = vmatprep.subr.mxu0 0.0
  %880 = vmatpush1.msra.mxu0 %v856
  %881 = vmatprep.subr.mxu0 0.0
  %882 = vmatpush1.msra.mxu0 %v857
  %883 = vmatprep.subr.mxu0 0.0
  %884 = vmatpush1.msra.mxu0 %v858
  %885 = vmatprep.subr.mxu0 0.0
  %886 = vmatpush1.msra.mxu0 %v859
  %887 = vmatprep.subr.mxu0 0.0
  %888 = vmatpush1.msra.mxu0 %v860
  %889 = vmatprep.subr.mxu0 0.0
  %890 = vmatpush1.msra.mxu0 %v861
  %891 = vmatprep.subr.mxu0 0.0
  %892 = vmatpush1.msra.mxu0 %v862
  %893 = vmatprep.subr.mxu0 0.0
  %894 = vmatpush1.msra.mxu0 %v863
  %895 = vmatprep.subr.mxu0 0.0
  %896 = vmatpush1.msra.mxu0 %v864
  %897 = vmatprep.subr.mxu0 0.0
  %898 = vmatpush1.msra.mxu0 0.0
  %899 = vmatprep.subr.mxu0 0.0
  %900 = vmatpush1.msra.mxu0 0.0
  %901 = vmatprep.subr.mxu0 0.0
  %902 = vmatpush1.msra.mxu0 0.0
  %903 = vmatprep.subr.mxu0 0.0
  %904 = vmatpush1.msra.mxu0 0.0
  %905 = vmatprep.subr.mxu0 0.0
  %906 = vmatpush1.msra.mxu0 0.0
  %907 = vmatprep.subr.mxu0 0.0
  %908 = vmatpush1.msra.mxu0 0.0
  %909 = vmatprep.subr.mxu0 0.0
  %910 = vmatpush1.msra.mxu0 0.0
  %911 = vmatprep.subr.mxu0 0.0
  %912 = vmatpush1.msra.mxu0 0.0
  %913 = vmatprep.subr.mxu0 0.0
  %914 = vmatpush1.msra.mxu0 0.0
  %915 = vmatprep.subr.mxu0 0.0
  %916 = vmatpush1.msra.mxu0 0.0
  %917 = vmatprep.subr.mxu0 0.0
  %918 = vmatpush1.msra.mxu0 0.0
  %919 = vmatprep.subr.mxu0 0.0
  %920 = vmatpush1.msra.mxu0 0.0
  %921 = vmatprep.subr.mxu0 0.0
  %922 = vmatpush1.msra.mxu0 0.0
  %923 = vmatprep.subr.mxu0 0.0
  %924 = vmatpush1.msra.mxu0 0.0
  %925 = vmatprep.subr.mxu0 0.0
  %926 = vmatpush1.msra.mxu0 0.0
  %927 = vmatprep.subr.mxu0 0.0
  %928 = vmatpush1.msra.mxu0 0.0
  %929 = vmatprep.mubr.f32.mxu0 0.0
  %930 = vmatmul.mubr.f32.gmra.mrb[0].mxu0 %v845
  %v931 = vpop.f32.mrb[0].mxu0
  %v932 = vadd.f32 0.0, %v931
  %v933 = vpop.f32.mrb[0].mxu0
  %934 = vdwg.mxu0
  %v935 = vadd.f32 %v768, %v932
  %v936 = vadd.s32 %v443, 3
  %vm937 = vcmp.eq.s32.totalorder %v442, %v936
  %v938 = vsel %vm937, 1, 0
  %v939 = vcvt.s32.f32 %v938
  %v941 = vsel %vm447, %v939, 0
  %943 = vmatprep.subr.mxu0 0.0
  %944 = vmatpush1.msra.mxu0 %v438
  %945 = vmatprep.subr.mxu0 0.0
  %946 = vmatpush1.msra.mxu0 0.0
  %947 = vmatprep.subr.mxu0 0.0
  %948 = vmatpush1.msra.mxu0 0.0
  %949 = vmatprep.subr.mxu0 0.0
  %950 = vmatpush1.msra.mxu0 0.0
  %951 = vmatprep.subr.mxu0 0.0
  %952 = vmatpush1.msra.mxu0 0.0
  %953 = vmatprep.subr.mxu0 0.0
  %954 = vmatpush1.msra.mxu0 0.0
  %955 = vmatprep.subr.mxu0 0.0
  %956 = vmatpush1.msra.mxu0 0.0
  %957 = vmatprep.subr.mxu0 0.0
  %958 = vmatpush1.msra.mxu0 0.0
  %959 = vmatprep.subr.mxu0 0.0
  %960 = vmatpush1.msra.mxu0 0.0
  %961 = vmatprep.subr.mxu0 0.0
  %962 = vmatpush1.msra.mxu0 0.0
  %963 = vmatprep.subr.mxu0 0.0
  %964 = vmatpush1.msra.mxu0 0.0
  %965 = vmatprep.subr.mxu0 0.0
  %966 = vmatpush1.msra.mxu0 0.0
  %967 = vmatprep.subr.mxu0 0.0
  %968 = vmatpush1.msra.mxu0 0.0
  %969 = vmatprep.subr.mxu0 0.0
  %970 = vmatpush1.msra.mxu0 0.0
  %971 = vmatprep.subr.mxu0 0.0
  %972 = vmatpush1.msra.mxu0 0.0
  %973 = vmatprep.subr.mxu0 0.0
  %974 = vmatpush1.msra.mxu0 0.0
  %975 = vmatprep.subr.mxu0 0.0
  %976 = vmatpush1.msra.mxu0 0.0
  %977 = vmatprep.subr.mxu0 0.0
  %978 = vmatpush1.msra.mxu0 0.0
  %979 = vmatprep.subr.mxu0 0.0
  %980 = vmatpush1.msra.mxu0 0.0
  %981 = vmatprep.subr.mxu0 0.0
  %982 = vmatpush1.msra.mxu0 0.0
  %983 = vmatprep.subr.mxu0 0.0
  %984 = vmatpush1.msra.mxu0 0.0
  %985 = vmatprep.subr.mxu0 0.0
  %986 = vmatpush1.msra.mxu0 0.0
  %987 = vmatprep.subr.mxu0 0.0
  %988 = vmatpush1.msra.mxu0 0.0
  %989 = vmatprep.subr.mxu0 0.0
  %990 = vmatpush1.msra.mxu0 0.0
  %991 = vmatprep.subr.mxu0 0.0
  %992 = vmatpush1.msra.mxu0 0.0
  %993 = vmatprep.subr.mxu0 0.0
  %994 = vmatpush1.msra.mxu0 0.0
  %995 = vmatprep.subr.mxu0 0.0
  %996 = vmatpush1.msra.mxu0 0.0
  %997 = vmatprep.subr.mxu0 0.0
  %998 = vmatpush1.msra.mxu0 0.0
  %999 = vmatprep.subr.mxu0 0.0
  %1000 = vmatpush1.msra.mxu0 0.0
  %1001 = vmatprep.subr.mxu0 0.0
  %1002 = vmatpush1.msra.mxu0 0.0
  %1003 = vmatprep.subr.mxu0 0.0
  %1004 = vmatpush1.msra.mxu0 0.0
  %1005 = vmatprep.subr.mxu0 0.0
  %1006 = vmatpush1.msra.mxu0 0.0
  %1007 = vmatprep.mubr.f32.mxu0 0.0
  %1008 = vmatmul.mubr.f32.gmra.mrb[0].mxu0 %v941
  %v1009 = vpop.f32.mrb[0].mxu0
  %v1010 = vadd.f32 0.0, %v1009
  %v1011 = vpop.f32.mrb[0].mxu0
  %1012 = vdwg.mxu0
  %s1013 = scalar_lea.vmem %s3, 384
  %v1014 = vld [vmem:[%s1013] sm:$0xff]
  %v1015 = vld [vmem:[%s1013 + $0x8] sm:$0xff]
  %v1016 = vld [vmem:[%s1013 + $0x10] sm:$0xff]
  %v1017 = vld [vmem:[%s1013 + $0x18] sm:$0xff]
  %v1018 = vld [vmem:[%s1013 + $0x20] sm:$0xff]
  %v1019 = vld [vmem:[%s1013 + $0x28] sm:$0xff]
  %v1020 = vld [vmem:[%s1013 + $0x30] sm:$0xff]
  %v1021 = vld [vmem:[%s1013 + $0x38] sm:$0xff]
  %v1022 = vld [vmem:[%s1013 + $0x40] sm:$0xff]
  %v1023 = vld [vmem:[%s1013 + $0x48] sm:$0xff]
  %v1024 = vld [vmem:[%s1013 + $0x50] sm:$0xff]
  %v1025 = vld [vmem:[%s1013 + $0x58] sm:$0xff]
  %v1026 = vld [vmem:[%s1013 + $0x60] sm:$0xff]
  %v1027 = vld [vmem:[%s1013 + $0x68] sm:$0xff]
  %v1028 = vld [vmem:[%s1013 + $0x70] sm:$0xff]
  %v1029 = vld [vmem:[%s1013 + $0x78] sm:$0xff]
  %1030 = vmatprep.subr.mxu0 0.0
  %1031 = vmatpush1.msra.mxu0 %v1014
  %1032 = vmatprep.subr.mxu0 0.0
  %1033 = vmatpush1.msra.mxu0 %v1015
  %1034 = vmatprep.subr.mxu0 0.0
  %1035 = vmatpush1.msra.mxu0 %v1016
  %1036 = vmatprep.subr.mxu0 0.0
  %1037 = vmatpush1.msra.mxu0 %v1017
  %1038 = vmatprep.subr.mxu0 0.0
  %1039 = vmatpush1.msra.mxu0 %v1018
  %1040 = vmatprep.subr.mxu0 0.0
  %1041 = vmatpush1.msra.mxu0 %v1019
  %1042 = vmatprep.subr.mxu0 0.0
  %1043 = vmatpush1.msra.mxu0 %v1020
  %1044 = vmatprep.subr.mxu0 0.0
  %1045 = vmatpush1.msra.mxu0 %v1021
  %1046 = vmatprep.subr.mxu0 0.0
  %1047 = vmatpush1.msra.mxu0 %v1022
  %1048 = vmatprep.subr.mxu0 0.0
  %1049 = vmatpush1.msra.mxu0 %v1023
  %1050 = vmatprep.subr.mxu0 0.0
  %1051 = vmatpush1.msra.mxu0 %v1024
  %1052 = vmatprep.subr.mxu0 0.0
  %1053 = vmatpush1.msra.mxu0 %v1025
  %1054 = vmatprep.subr.mxu0 0.0
  %1055 = vmatpush1.msra.mxu0 %v1026
  %1056 = vmatprep.subr.mxu0 0.0
  %1057 = vmatpush1.msra.mxu0 %v1027
  %1058 = vmatprep.subr.mxu0 0.0
  %1059 = vmatpush1.msra.mxu0 %v1028
  %1060 = vmatprep.subr.mxu0 0.0
  %1061 = vmatpush1.msra.mxu0 %v1029
  %1062 = vmatprep.subr.mxu0 0.0
  %1063 = vmatpush1.msra.mxu0 0.0
  %1064 = vmatprep.subr.mxu0 0.0
  %1065 = vmatpush1.msra.mxu0 0.0
  %1066 = vmatprep.subr.mxu0 0.0
  %1067 = vmatpush1.msra.mxu0 0.0
  %1068 = vmatprep.subr.mxu0 0.0
  %1069 = vmatpush1.msra.mxu0 0.0
  %1070 = vmatprep.subr.mxu0 0.0
  %1071 = vmatpush1.msra.mxu0 0.0
  %1072 = vmatprep.subr.mxu0 0.0
  %1073 = vmatpush1.msra.mxu0 0.0
  %1074 = vmatprep.subr.mxu0 0.0
  %1075 = vmatpush1.msra.mxu0 0.0
  %1076 = vmatprep.subr.mxu0 0.0
  %1077 = vmatpush1.msra.mxu0 0.0
  %1078 = vmatprep.subr.mxu0 0.0
  %1079 = vmatpush1.msra.mxu0 0.0
  %1080 = vmatprep.subr.mxu0 0.0
  %1081 = vmatpush1.msra.mxu0 0.0
  %1082 = vmatprep.subr.mxu0 0.0
  %1083 = vmatpush1.msra.mxu0 0.0
  %1084 = vmatprep.subr.mxu0 0.0
  %1085 = vmatpush1.msra.mxu0 0.0
  %1086 = vmatprep.subr.mxu0 0.0
  %1087 = vmatpush1.msra.mxu0 0.0
  %1088 = vmatprep.subr.mxu0 0.0
  %1089 = vmatpush1.msra.mxu0 0.0
  %1090 = vmatprep.subr.mxu0 0.0
  %1091 = vmatpush1.msra.mxu0 0.0
  %1092 = vmatprep.subr.mxu0 0.0
  %1093 = vmatpush1.msra.mxu0 0.0
  %1094 = vmatprep.mubr.f32.mxu0 0.0
  %1095 = vmatmul.mubr.f32.gmra.mrb[0].mxu0 %v1010
  %v1096 = vpop.f32.mrb[0].mxu0
  %v1097 = vadd.f32 0.0, %v1096
  %v1098 = vpop.f32.mrb[0].mxu0
  %1099 = vdwg.mxu0
  %v1100 = vadd.f32 %v935, %v1097
  %v1101 = vld [vmem:[%s4] sm:$0x1]
  %v1103 = vlaneseq
  %v1104 = vshrl.u32 %v1103, 7
  %v1105 = vsub.s32 0, %v1104
  %v1106 = vrot.slane %v1101, %v1105
  %v1108 = vadd.f32 %v1100, %v1106
  %vm1109 = vcmp.ge.f32.partialorder %v1108, 0.0
  %v1110 = vmul.f32 %v1108, 0.01
  %v1111 = vsel %vm1109, %v1108, %v1110
  %v1112 = vld [vmem:[%s5] sm:$0xff]
  %v1113 = vld [vmem:[%s5 + $0x8] sm:$0xff]
  %v1114 = vld [vmem:[%s5 + $0x10] sm:$0xff]
  %v1115 = vld [vmem:[%s5 + $0x18] sm:$0xff]
  %v1116 = vld [vmem:[%s5 + $0x20] sm:$0xff]
  %v1117 = vld [vmem:[%s5 + $0x28] sm:$0xff]
  %v1118 = vld [vmem:[%s5 + $0x30] sm:$0xff]
  %v1119 = vld [vmem:[%s5 + $0x38] sm:$0xff]
  %v1120 = vld [vmem:[%s6] sm:$0x1]
  %v1122 = vlaneseq
  %v1123 = vshrl.u32 %v1122, 7
  %v1124 = vsub.s32 0, %v1123
  %v1125 = vrot.slane %v1120, %v1124
  %vm1127 = vcmask 523264
  %v1129 = vsel %vm1127, %v1111, 0
  %1131 = vmatprep.subr.mxu0 0.0
  %1132 = vmatpush1.msra.mxu0 %v1112
  %1133 = vmatprep.subr.mxu0 0.0
  %1134 = vmatpush1.msra.mxu0 %v1113
  %1135 = vmatprep.subr.mxu0 0.0
  %1136 = vmatpush1.msra.mxu0 %v1114
  %1137 = vmatprep.subr.mxu0 0.0
  %1138 = vmatpush1.msra.mxu0 %v1115
  %1139 = vmatprep.subr.mxu0 0.0
  %1140 = vmatpush1.msra.mxu0 %v1116
  %1141 = vmatprep.subr.mxu0 0.0
  %1142 = vmatpush1.msra.mxu0 %v1117
  %1143 = vmatprep.subr.mxu0 0.0
  %1144 = vmatpush1.msra.mxu0 %v1118
  %1145 = vmatprep.subr.mxu0 0.0
  %1146 = vmatpush1.msra.mxu0 %v1119
  %1147 = vmatprep.subr.mxu0 0.0
  %1148 = vmatpush1.msra.mxu0 0.0
  %1149 = vmatprep.subr.mxu0 0.0
  %1150 = vmatpush1.msra.mxu0 0.0
  %1151 = vmatprep.subr.mxu0 0.0
  %1152 = vmatpush1.msra.mxu0 0.0
  %1153 = vmatprep.subr.mxu0 0.0
  %1154 = vmatpush1.msra.mxu0 0.0
  %1155 = vmatprep.subr.mxu0 0.0
  %1156 = vmatpush1.msra.mxu0 0.0
  %1157 = vmatprep.subr.mxu0 0.0
  %1158 = vmatpush1.msra.mxu0 0.0
  %1159 = vmatprep.subr.mxu0 0.0
  %1160 = vmatpush1.msra.mxu0 0.0
  %1161 = vmatprep.subr.mxu0 0.0
  %1162 = vmatpush1.msra.mxu0 0.0
  %1163 = vmatprep.subr.mxu0 0.0
  %1164 = vmatpush1.msra.mxu0 0.0
  %1165 = vmatprep.subr.mxu0 0.0
  %1166 = vmatpush1.msra.mxu0 0.0
  %1167 = vmatprep.subr.mxu0 0.0
  %1168 = vmatpush1.msra.mxu0 0.0
  %1169 = vmatprep.subr.mxu0 0.0
  %1170 = vmatpush1.msra.mxu0 0.0
  %1171 = vmatprep.subr.mxu0 0.0
  %1172 = vmatpush1.msra.mxu0 0.0
  %1173 = vmatprep.subr.mxu0 0.0
  %1174 = vmatpush1.msra.mxu0 0.0
  %1175 = vmatprep.subr.mxu0 0.0
  %1176 = vmatpush1.msra.mxu0 0.0
  %1177 = vmatprep.subr.mxu0 0.0
  %1178 = vmatpush1.msra.mxu0 0.0
  %1179 = vmatprep.subr.mxu0 0.0
  %1180 = vmatpush1.msra.mxu0 0.0
  %1181 = vmatprep.subr.mxu0 0.0
  %1182 = vmatpush1.msra.mxu0 0.0
  %1183 = vmatprep.subr.mxu0 0.0
  %1184 = vmatpush1.msra.mxu0 0.0
  %1185 = vmatprep.subr.mxu0 0.0
  %1186 = vmatpush1.msra.mxu0 0.0
  %1187 = vmatprep.subr.mxu0 0.0
  %1188 = vmatpush1.msra.mxu0 0.0
  %1189 = vmatprep.subr.mxu0 0.0
  %1190 = vmatpush1.msra.mxu0 0.0
  %1191 = vmatprep.subr.mxu0 0.0
  %1192 = vmatpush1.msra.mxu0 0.0
  %1193 = vmatprep.subr.mxu0 0.0
  %1194 = vmatpush1.msra.mxu0 0.0
  %1195 = vmatprep.mubr.f32.mxu0 0.0
  %1196 = vmatmul.mubr.f32.gmra.mrb[0].mxu0 %v1129
  %v1197 = vpop.f32.mrb[0].mxu0
  %v1198 = vadd.f32 %v1125, %v1197
  %v1199 = vpop.f32.mrb[0].mxu0
  %1200 = vdwg.mxu0
  %vm1201 = vcmp.ge.f32.partialorder %v1198, 0.0
  %v1202 = vmul.f32 %v1198, 0.01
  %v1203 = vsel %vm1201, %v1198, %v1202
  %v1204 = vld [vmem:[%s7] sm:$0xff]
  %v1205 = vld [vmem:[%s7 + $0x8] sm:$0xff]
  %v1206 = vld [vmem:[%s7 + $0x10] sm:$0xff]
  %v1207 = vld [vmem:[%s7 + $0x18] sm:$0xff]
  %v1208 = vld [vmem:[%s8] sm:$0x1]
  %v1210 = vlaneseq
  %v1211 = vshrl.u32 %v1210, 7
  %v1212 = vsub.s32 0, %v1211
  %v1213 = vrot.slane %v1208, %v1212
  %vm1215 = vcmask 261120
  %v1217 = vsel %vm1215, %v1203, 0
  %1219 = vmatprep.subr.mxu0 0.0
  %1220 = vmatpush1.msra.mxu0 %v1204
  %1221 = vmatprep.subr.mxu0 0.0
  %1222 = vmatpush1.msra.mxu0 %v1205
  %1223 = vmatprep.subr.mxu0 0.0
  %1224 = vmatpush1.msra.mxu0 %v1206
  %1225 = vmatprep.subr.mxu0 0.0
  %1226 = vmatpush1.msra.mxu0 %v1207
  %1227 = vmatprep.subr.mxu0 0.0
  %1228 = vmatpush1.msra.mxu0 0.0
  %1229 = vmatprep.subr.mxu0 0.0
  %1230 = vmatpush1.msra.mxu0 0.0
  %1231 = vmatprep.subr.mxu0 0.0
  %1232 = vmatpush1.msra.mxu0 0.0
  %1233 = vmatprep.subr.mxu0 0.0
  %1234 = vmatpush1.msra.mxu0 0.0
  %1235 = vmatprep.subr.mxu0 0.0
  %1236 = vmatpush1.msra.mxu0 0.0
  %1237 = vmatprep.subr.mxu0 0.0
  %1238 = vmatpush1.msra.mxu0 0.0
  %1239 = vmatprep.subr.mxu0 0.0
  %1240 = vmatpush1.msra.mxu0 0.0
  %1241 = vmatprep.subr.mxu0 0.0
  %1242 = vmatpush1.msra.mxu0 0.0
  %1243 = vmatprep.subr.mxu0 0.0
  %1244 = vmatpush1.msra.mxu0 0.0
  %1245 = vmatprep.subr.mxu0 0.0
  %1246 = vmatpush1.msra.mxu0 0.0
  %1247 = vmatprep.subr.mxu0 0.0
  %1248 = vmatpush1.msra.mxu0 0.0
  %1249 = vmatprep.subr.mxu0 0.0
  %1250 = vmatpush1.msra.mxu0 0.0
  %1251 = vmatprep.subr.mxu0 0.0
  %1252 = vmatpush1.msra.mxu0 0.0
  %1253 = vmatprep.subr.mxu0 0.0
  %1254 = vmatpush1.msra.mxu0 0.0
  %1255 = vmatprep.subr.mxu0 0.0
  %1256 = vmatpush1.msra.mxu0 0.0
  %1257 = vmatprep.subr.mxu0 0.0
  %1258 = vmatpush1.msra.mxu0 0.0
  %1259 = vmatprep.subr.mxu0 0.0
  %1260 = vmatpush1.msra.mxu0 0.0
  %1261 = vmatprep.subr.mxu0 0.0
  %1262 = vmatpush1.msra.mxu0 0.0
  %1263 = vmatprep.subr.mxu0 0.0
  %1264 = vmatpush1.msra.mxu0 0.0
  %1265 = vmatprep.subr.mxu0 0.0
  %1266 = vmatpush1.msra.mxu0 0.0
  %1267 = vmatprep.subr.mxu0 0.0
  %1268 = vmatpush1.msra.mxu0 0.0
  %1269 = vmatprep.subr.mxu0 0.0
  %1270 = vmatpush1.msra.mxu0 0.0
  %1271 = vmatprep.subr.mxu0 0.0
  %1272 = vmatpush1.msra.mxu0 0.0
  %1273 = vmatprep.subr.mxu0 0.0
  %1274 = vmatpush1.msra.mxu0 0.0
  %1275 = vmatprep.subr.mxu0 0.0
  %1276 = vmatpush1.msra.mxu0 0.0
  %1277 = vmatprep.subr.mxu0 0.0
  %1278 = vmatpush1.msra.mxu0 0.0
  %1279 = vmatprep.subr.mxu0 0.0
  %1280 = vmatpush1.msra.mxu0 0.0
  %1281 = vmatprep.subr.mxu0 0.0
  %1282 = vmatpush1.msra.mxu0 0.0
  %1283 = vmatprep.mubr.f32.mxu0 0.0
  %1284 = vmatmul.mubr.f32.gmra.mrb[0].mxu0 %v1217
  %v1285 = vpop.f32.mrb[0].mxu0
  %v1286 = vadd.f32 %v1213, %v1285
  %v1287 = vpop.f32.mrb[0].mxu0
  %1288 = vdwg.mxu0
  %vm1289 = vcmp.lt.s32.totalorder %v442, 4
  %v1290 = vtanh.pop %v1286
  %v1291 = vsel %vm1289, %v1290, %v1286
  %1292 = vst [vmem:[%s9] sm:$0x3] %v1291
  // Predicated region
  $region38: #{actor_critic_forward.5} parent=0 // pred_check
    _
  $region39: #{actor_critic_forward.5} parent=0 // pred_check_branch
    %1294 = sbr.rel (0) target = $region41
  $region40: #{actor_critic_forward.5} parent=0 // pred_region
    _
  $region41: #{actor_critic_forward.5} parent=0 // pred_fallthru
    _
  // Predicated region
  $region42: #{actor_critic_forward.5} parent=0 // pred_check
    _
  $region43: #{actor_critic_forward.5} parent=0 // pred_check_branch
    %1296 = sbr.rel (0) target = $region45
  $region44: #{actor_critic_forward.5} parent=0 // pred_region
    _
  $region45: #{actor_critic_forward.5} parent=0 // pred_fallthru
    _

</llo_original>
